<compile_context>
chip_gen: v6e
topology: v6e:2x2x1
jax: 0.10.0
libtpu: 0.0.40
codegen_flags: <defaults>
</compile_context>

<pallas_src>
import functools

import numpy as np
import jax
import jax.numpy as jnp
from jax.experimental import pallas as pl
from jax.experimental.pallas import tpu as pltpu

# OGB categorical feature cardinalities (get_atom_feature_dims / get_bond_feature_dims)
ATOM_FEATURE_DIMS = [119, 4, 12, 12, 10, 6, 6, 2, 2]
BOND_FEATURE_DIMS = [5, 6, 2]
BN_EPS = 1e-5
LANE = 128


def _round_up(x, m):
    return ((x + m - 1) // m) * m


# ------------------------------ fused kernel ------------------------------ #
def _gnn_fused_kernel(eps_ref, h0_ref, gs_ref, gd_ref, ee_ref,
                      w1_ref, b1_ref, g1_ref, be1_ref,
                      w2_ref, b2_ref, go_ref, bo_ref,
                      out_ref, h_scr, agg_scr, *, num_layer, num_nodes):
    """Grid = (layer, edge_tile). h_scr carries node features across layers."""
    l = pl.program_id(0)
    et = pl.program_id(1)
    n_et = pl.num_programs(1)

    # Load the atom-encoded features once, keep h resident in VMEM after that.
    @pl.when(jnp.logical_and(l == 0, et == 0))
    def _():
        h_scr[...] = h0_ref[...]

    # New layer: reset the message accumulator.
    @pl.when(et == 0)
    def _():
        agg_scr[...] = jnp.zeros_like(agg_scr)

    h = h_scr[...]                                              # [N, Dp] f32

    # ---- gather + message + scatter-add for this edge tile (MXU) ----
    gs = gs_ref[...].astype(jnp.float32)                        # [TE, N] exact 0/1
    gd = gd_ref[...].astype(jnp.float32)                        # [TE, N]
    xj = jnp.dot(gs, h, preferred_element_type=jnp.float32)     # h[src] gather
    msg = jnp.maximum(xj + ee_ref[...], 0.0)                    # relu(x_j + e_emb)
    # scatter-add over destinations: contract the edge axis of one_hot(dst)
    agg_scr[...] += jax.lax.dot_general(
        gd, msg, (((0,), (0,)), ((), ())),
        preferred_element_type=jnp.float32)                     # [N, Dp]

    # ---- MLP + BatchNorms once per layer (after the last edge tile) ----
    @pl.when(et == n_et - 1)
    def _():
        eps = eps_ref[l]
        inv_n = 1.0 / float(num_nodes)

        z = (1.0 + eps) * h + agg_scr[...]                      # [N, Dp]

        # Linear(D, 2D) -> BatchNorm1d(2D, batch stats) -> ReLU
        t = jnp.dot(z, w1_ref[...], preferred_element_type=jnp.float32) + b1_ref[...]
        c = t[0:1, :]                                           # shift for stability
        tc = t - c
        s1 = jnp.sum(tc, axis=0, keepdims=True)                 # single stats pass
        s2 = jnp.sum(tc * tc, axis=0, keepdims=True)
        m1 = s1 * inv_n
        v1 = s2 * inv_n - m1 * m1
        t = (tc - m1) * jax.lax.rsqrt(v1 + BN_EPS) * g1_ref[...] + be1_ref[...]
        t = jnp.maximum(t, 0.0)

        # Linear(2D, D) -> outer BatchNorm1d(D) of GNNComplete
        o = jnp.dot(t, w2_ref[...], preferred_element_type=jnp.float32) + b2_ref[...]
        co = o[0:1, :]
        oc = o - co
        s1o = jnp.sum(oc, axis=0, keepdims=True)
        s2o = jnp.sum(oc * oc, axis=0, keepdims=True)
        m2 = s1o * inv_n
        v2 = s2o * inv_n - m2 * m2
        o = (oc - m2) * jax.lax.rsqrt(v2 + BN_EPS) * go_ref[...] + bo_ref[...]

        # ReLU on all layers except the last one (dropout p=0.0 is identity)
        @pl.when(l < num_layer - 1)
        def _():
            o_r = jnp.maximum(o, 0.0)
            h_scr[...] = o_r
            out_ref[...] = o_r

        @pl.when(l == num_layer - 1)
        def _():
            h_scr[...] = o
            out_ref[...] = o


# ------------------------------- parameters ------------------------------- #
def _xavier_uniform(key, shape):
    fan_in, fan_out = shape[0], shape[1]
    bound = np.sqrt(6.0 / (fan_in + fan_out))
    return jax.random.uniform(key, shape, jnp.float32, -bound, bound)


def init_params(key, emb_dim, num_layer):
    keys = iter(jax.random.split(key, 8 * num_layer + 32))
    params = {
        "atom_emb": [_xavier_uniform(next(keys), (d, emb_dim))
                     for d in ATOM_FEATURE_DIMS],
        "layers": [],
    }
    for _ in range(num_layer):
        lp = {
            "bond_emb": [_xavier_uniform(next(keys), (d, emb_dim))
                         for d in BOND_FEATURE_DIMS],
            "w1": _xavier_uniform(next(keys), (emb_dim, 2 * emb_dim)),
            "b1": jax.random.uniform(next(keys), (1, 2 * emb_dim),
                                     jnp.float32, -0.05, 0.05),
            "gamma1": jnp.ones((1, 2 * emb_dim), jnp.float32),
            "beta1": jnp.zeros((1, 2 * emb_dim), jnp.float32),
            "w2": _xavier_uniform(next(keys), (2 * emb_dim, emb_dim)),
            "b2": jax.random.uniform(next(keys), (1, emb_dim),
                                     jnp.float32, -0.05, 0.05),
            "gamma_out": jnp.ones((1, emb_dim), jnp.float32),
            "beta_out": jnp.zeros((1, emb_dim), jnp.float32),
            "eps": 0.0,   # GINConv eps initialized to 0
        }
        params["layers"].append(lp)
    return params


# ------------------------------ encoders (JAX) ----------------------------- #
def _atom_encode(params, x):
    h = jnp.zeros((x.shape[0], params["atom_emb"][0].shape[1]), jnp.float32)
    for i, tbl in enumerate(params["atom_emb"]):
        h = h + tbl[x[:, i]]
    return h


def _bond_encode(lp, edge_attr):
    ee = jnp.zeros((edge_attr.shape[0], lp["bond_emb"][0].shape[1]), jnp.float32)
    for i, tbl in enumerate(lp["bond_emb"]):
        ee = ee + tbl[edge_attr[:, i]]
    return ee


# ------------------------------ model forward ------------------------------ #
def gnn_complete_pallas(params, x, edge_index, edge_attr, *, num_layer,
                        JK="last", edge_tile=512):
    N = int(x.shape[0])
    E = int(edge_attr.shape[0])
    D = int(params["atom_emb"][0].shape[1])
    L = int(num_layer)
    Dp = _round_up(D, LANE)          # lane-padded emb_dim
    Hp = 2 * Dp                      # lane-padded hidden dim

    # Edge tiling (sublane-aligned), pad E so tiles divide evenly.
    TE = min(int(edge_tile), _round_up(E, 8))
    E_pad = _round_up(E, TE)
    n_et = E_pad // TE
    pad_e = E_pad - E

    src, dst = edge_index[0], edge_index[1]
    if pad_e:
        neg = -jnp.ones((pad_e,), src.dtype)   # -1 -> all-zero one-hot row
        src_p = jnp.concatenate([src, neg])
        dst_p = jnp.concatenate([dst, neg])
    else:
        src_p, dst_p = src, dst
    # bf16 connectivity (exact for 0/1), no transposed [N, E] matrix materialized.
    gs = jax.nn.one_hot(src_p, N, dtype=jnp.bfloat16)           # [E_pad, N]
    gd = jax.nn.one_hot(dst_p, N, dtype=jnp.bfloat16)           # [E_pad, N]

    # Atom / bond encodings (plain JAX gathers), feature-padded to Dp.
    h0 = _atom_encode(params, x)                                # [N, D]
    h0_p = jnp.pad(h0, ((0, 0), (0, Dp - D)))                   # [N, Dp]

    ee_l, w1_l, b1_l, g1_l, be1_l = [], [], [], [], []
    w2_l, b2_l, go_l, bo_l = [], [], [], []
    for lp in params["layers"]:
        e_emb = _bond_encode(lp, edge_attr)                     # [E, D]
        ee_l.append(jnp.pad(e_emb, ((0, pad_e), (0, Dp - D))))
        w1_l.append(jnp.pad(lp["w1"], ((0, Dp - D), (0, Hp - 2 * D))))
        b1_l.append(jnp.pad(lp["b1"], ((0, 0), (0, Hp - 2 * D))))
        g1_l.append(jnp.pad(lp["gamma1"], ((0, 0), (0, Hp - 2 * D))))   # zero-pad gamma
        be1_l.append(jnp.pad(lp["beta1"], ((0, 0), (0, Hp - 2 * D))))
        w2_l.append(jnp.pad(lp["w2"], ((0, Hp - 2 * D), (0, Dp - D))))
        b2_l.append(jnp.pad(lp["b2"], ((0, 0), (0, Dp - D))))
        go_l.append(jnp.pad(lp["gamma_out"], ((0, 0), (0, Dp - D))))
        bo_l.append(jnp.pad(lp["beta_out"], ((0, 0), (0, Dp - D))))
    ee = jnp.stack(ee_l)                                        # [L, E_pad, Dp]
    w1 = jnp.stack(w1_l); b1 = jnp.stack(b1_l)
    g1 = jnp.stack(g1_l); be1 = jnp.stack(be1_l)
    w2 = jnp.stack(w2_l); b2 = jnp.stack(b2_l)
    go = jnp.stack(go_l); bo = jnp.stack(bo_l)
    eps = jnp.asarray([lp["eps"] for lp in params["layers"]], jnp.float32)  # [L]

    # Advisory cost estimate + explicit VMEM budget.
    flops = L * (4 * E_pad * N * Dp + 8 * N * Dp * Dp)
    bytes_accessed = (L * (2 * E_pad * N * 2) + ee.size * 4
                      + (w1.size + w2.size) * 4
                      + (b1.size + g1.size + be1.size + b2.size + go.size + bo.size) * 4
                      + h0_p.size * 4 + L * N * Dp * 4)
    cost = pl.CostEstimate(flops=int(flops), transcendentals=int(L * 3 * Dp),
                           bytes_accessed=int(bytes_accessed))
    wbytes = (Dp * Hp + Hp * Dp + 3 * Hp + 3 * Dp) * 4
    tile_bytes = 2 * (2 * TE * N * 2 + TE * Dp * 4)     # double-buffered Gs, Gd, ee
    vmem_est = tile_bytes + 2 * wbytes + 2 * N * Dp * 4 + 4 * N * Dp * 4
    vmem_limit = int(min(max(2 * vmem_est, 16 * 2 ** 20), 56 * 2 ** 20))

    kernel = functools.partial(_gnn_fused_kernel, num_layer=L, num_nodes=N)
    h_stack = pl.pallas_call(
        kernel,
        out_shape=jax.ShapeDtypeStruct((L, N, Dp), jnp.float32),
        grid=(L, n_et),
        in_specs=[
            pl.BlockSpec(memory_space=pltpu.MemorySpace.SMEM),            # eps [L]
            pl.BlockSpec((N, Dp), lambda l, e: (0, 0)),                   # h0
            pl.BlockSpec((TE, N), lambda l, e: (e, 0)),                   # one_hot(src)
            pl.BlockSpec((TE, N), lambda l, e: (e, 0)),                   # one_hot(dst)
            pl.BlockSpec((None, TE, Dp), lambda l, e: (l, e, 0)),         # edge emb
            pl.BlockSpec((None, Dp, Hp), lambda l, e: (l, 0, 0)),         # w1
            pl.BlockSpec((None, 1, Hp), lambda l, e: (l, 0, 0)),          # b1
            pl.BlockSpec((None, 1, Hp), lambda l, e: (l, 0, 0)),          # gamma1
            pl.BlockSpec((None, 1, Hp), lambda l, e: (l, 0, 0)),          # beta1
            pl.BlockSpec((None, Hp, Dp), lambda l, e: (l, 0, 0)),         # w2
            pl.BlockSpec((None, 1, Dp), lambda l, e: (l, 0, 0)),          # b2
            pl.BlockSpec((None, 1, Dp), lambda l, e: (l, 0, 0)),          # gamma_out
            pl.BlockSpec((None, 1, Dp), lambda l, e: (l, 0, 0)),          # beta_out
        ],
        out_specs=pl.BlockSpec((None, N, Dp), lambda l, e: (l, 0, 0)),
        scratch_shapes=[pltpu.VMEM((N, Dp), jnp.float32),                 # h (resident)
                        pltpu.VMEM((N, Dp), jnp.float32)],                # agg accumulator
        compiler_params=pltpu.CompilerParams(
            dimension_semantics=("arbitrary", "arbitrary"),
            vmem_limit_bytes=vmem_limit),
        cost_estimate=cost,
    )(eps, h0_p, gs, gd, ee, w1, b1, g1, be1, w2, b2, go, bo)

    layer_outs = h_stack[:, :, :D]                              # strip lane padding
    if JK == "last":
        return layer_outs[-1]
    h_list = [h0] + [layer_outs[i] for i in range(L)]
    if JK == "concat":
        return jnp.concatenate(h_list, axis=1)
    elif JK == "max":
        return jnp.max(jnp.stack(h_list, axis=0), axis=0)
    elif JK == "sum":
        return jnp.sum(jnp.stack(h_list, axis=0), axis=0)
    raise ValueError("not implemented.")


# ------------------------- pure-JAX reference path ------------------------- #
def _ref_gin_layer(h, ee, src, dst, lp, *, eps, apply_relu):
    msg = jnp.maximum(h[src] + ee, 0.0)
    agg = jax.ops.segment_sum(msg, dst, num_segments=h.shape[0])
    z = (1.0 + eps) * h + agg
    t = z @ lp["w1"] + lp["b1"]
    m1 = jnp.mean(t, axis=0, keepdims=True)
    v1 = jnp.mean((t - m1) ** 2, axis=0, keepdims=True)
    t = jnp.maximum((t - m1) / jnp.sqrt(v1 + BN_EPS) * lp["gamma1"] + lp["beta1"], 0.0)
    o = t @ lp["w2"] + lp["b2"]
    m2 = jnp.mean(o, axis=0, keepdims=True)
    v2 = jnp.mean((o - m2) ** 2, axis=0, keepdims=True)
    o = (o - m2) / jnp.sqrt(v2 + BN_EPS) * lp["gamma_out"] + lp["beta_out"]
    return jnp.maximum(o, 0.0) if apply_relu else o


def reference_forward(params, x, edge_index, edge_attr, *, num_layer):
    src, dst = edge_index[0], edge_index[1]
    h = _atom_encode(params, x)
    for layer in range(num_layer):
        lp = params["layers"][layer]
        ee = _bond_encode(lp, edge_attr)
        h = _ref_gin_layer(h, ee, src, dst, lp, eps=lp["eps"],
                           apply_relu=(layer != num_layer - 1))
    return h


# ----------------------------------- main ---------------------------------- #
if __name__ == "__main__":
    jax.config.update("jax_default_matmul_precision", "highest")

    N, E, D, L = 8, 16, 32, 3   # nodes, edges, emb_dim, num_layer
    key = jax.random.PRNGKey(0)
    kx, ke, ksrc, kdst, kp = jax.random.split(key, 5)

    x = jnp.stack(
        [jax.random.randint(jax.random.fold_in(kx, i), (N,), 0, d)
         for i, d in enumerate(ATOM_FEATURE_DIMS)], axis=1).astype(jnp.int32)
    edge_attr = jnp.stack(
        [jax.random.randint(jax.random.fold_in(ke, i), (E,), 0, d)
         for i, d in enumerate(BOND_FEATURE_DIMS)], axis=1).astype(jnp.int32)
    src = jax.random.randint(ksrc, (E,), 0, N, dtype=jnp.int32)
    dst = jax.random.randint(kdst, (E,), 0, N, dtype=jnp.int32)
    edge_index = jnp.stack([src, dst], axis=0)

    params = init_params(kp, D, L)

    out = gnn_complete_pallas(params, x, edge_index, edge_attr, num_layer=L)
    out = jax.block_until_ready(out)

    ref = reference_forward(params, x, edge_index, edge_attr, num_layer=L)
    np.testing.assert_allclose(np.asarray(out), np.asarray(ref),
                               rtol=1e-3, atol=1e-3)
    print("KERNEL_OK")
</pallas_src>

<mosaic_0001>
module attributes {stable_mosaic.version = 11 : i64} {
  func.func @_gnn_fused_kernel(%arg0: i32, %arg1: i32, %arg2: memref<3xf32, #tpu.memory_space<smem>>, %arg3: memref<8x128xf32, #tpu.memory_space<vmem>>, %arg4: memref<16x8xbf16, #tpu.memory_space<vmem>>, %arg5: memref<16x8xbf16, #tpu.memory_space<vmem>>, %arg6: memref<1x16x128xf32, #tpu.memory_space<vmem>>, %arg7: memref<1x128x256xf32, #tpu.memory_space<vmem>>, %arg8: memref<1x1x256xf32, #tpu.memory_space<vmem>>, %arg9: memref<1x1x256xf32, #tpu.memory_space<vmem>>, %arg10: memref<1x1x256xf32, #tpu.memory_space<vmem>>, %arg11: memref<1x256x128xf32, #tpu.memory_space<vmem>>, %arg12: memref<1x1x128xf32, #tpu.memory_space<vmem>>, %arg13: memref<1x1x128xf32, #tpu.memory_space<vmem>>, %arg14: memref<1x1x128xf32, #tpu.memory_space<vmem>>, %arg15: memref<1x8x128xf32, #tpu.memory_space<vmem>>, %arg16: memref<8x128xf32, #tpu.memory_space<vmem>>, %arg17: memref<8x128xf32, #tpu.memory_space<vmem>>) attributes {dimension_semantics = [#tpu.dimension_semantics<arbitrary>, #tpu.dimension_semantics<arbitrary>], iteration_bounds = array<i64: 3, 1>, scalar_prefetch = 0 : i64, scratch_operands = 2 : i64, tpu.core_type = #tpu.core_type<tc>, window_params = [{transform_indices = @transform_0, window_bounds = array<i64: 3>}, {pipeline_mode = #tpu.pipeline_mode<synchronous>, transform_indices = @transform_1, window_bounds = array<i64: 8, 128>}, {transform_indices = @transform_2, window_bounds = array<i64: 16, 8>}, {transform_indices = @transform_3, window_bounds = array<i64: 16, 8>}, {transform_indices = @transform_4, window_bounds = array<i64: 1, 16, 128>}, {transform_indices = @transform_5, window_bounds = array<i64: 1, 128, 256>}, {transform_indices = @transform_6, window_bounds = array<i64: 1, 1, 256>}, {transform_indices = @transform_7, window_bounds = array<i64: 1, 1, 256>}, {transform_indices = @transform_8, window_bounds = array<i64: 1, 1, 256>}, {transform_indices = @transform_9, window_bounds = array<i64: 1, 256, 128>}, {transform_indices = @transform_10, window_bounds = array<i64: 1, 1, 128>}, {transform_indices = @transform_11, window_bounds = array<i64: 1, 1, 128>}, {transform_indices = @transform_12, window_bounds = array<i64: 1, 1, 128>}, {transform_indices = @transform_13, window_bounds = array<i64: 1, 8, 128>}]} {
    %c0_i32 = arith.constant 0 : i32
    %0 = arith.cmpi eq, %arg0, %c0_i32 : i32
    %c0_i32_0 = arith.constant 0 : i32
    %1 = arith.cmpi eq, %arg1, %c0_i32_0 : i32
    %2 = arith.andi %0, %1 : i1
    %3 = arith.extui %2 : i1 to i32
    %c0_i32_1 = arith.constant 0 : i32
    %4 = arith.cmpi ne, %3, %c0_i32_1 : i32
    scf.if %4 {
      %c0_20 = arith.constant 0 : index
      %c0_21 = arith.constant 0 : index
      %26 = vector.load %arg3[%c0_20, %c0_21] : memref<8x128xf32, #tpu.memory_space<vmem>>, vector<8x128xf32>
      %c0_22 = arith.constant 0 : index
      %c0_23 = arith.constant 0 : index
      %27 = vector.load %arg16[%c0_22, %c0_23] : memref<8x128xf32, #tpu.memory_space<vmem>>, vector<8x128xf32>
      tpu.vector_store %arg16[%c0_22, %c0_23], %26 {strides = array<i32>} : memref<8x128xf32, #tpu.memory_space<vmem>>, vector<8x128xf32>,
    } else {
    }
    %c0_i32_2 = arith.constant 0 : i32
    %5 = arith.cmpi eq, %arg1, %c0_i32_2 : i32
    %6 = arith.extui %5 : i1 to i32
    %c0_i32_3 = arith.constant 0 : i32
    %7 = arith.cmpi ne, %6, %c0_i32_3 : i32
    scf.if %7 {
      %cst_20 = arith.constant 0.000000e+00 : f32
      %26 = vector.broadcast %cst_20 : f32 to vector<8x128xf32>
      %c0_21 = arith.constant 0 : index
      %c0_22 = arith.constant 0 : index
      %27 = vector.load %arg17[%c0_21, %c0_22] : memref<8x128xf32, #tpu.memory_space<vmem>>, vector<8x128xf32>
      tpu.vector_store %arg17[%c0_21, %c0_22], %26 {strides = array<i32>} : memref<8x128xf32, #tpu.memory_space<vmem>>, vector<8x128xf32>,
    } else {
    }
    %c0 = arith.constant 0 : index
    %c0_4 = arith.constant 0 : index
    %8 = vector.load %arg16[%c0, %c0_4] : memref<8x128xf32, #tpu.memory_space<vmem>>, vector<8x128xf32>
    %c0_5 = arith.constant 0 : index
    %c0_6 = arith.constant 0 : index
    %9 = vector.load %arg4[%c0_5, %c0_6] : memref<16x8xbf16, #tpu.memory_space<vmem>>, vector<16x8xbf16>
    %10 = arith.extf %9 : vector<16x8xbf16> to vector<16x8xf32>
    %c0_7 = arith.constant 0 : index
    %c0_8 = arith.constant 0 : index
    %11 = vector.load %arg5[%c0_7, %c0_8] : memref<16x8xbf16, #tpu.memory_space<vmem>>, vector<16x8xbf16>
    %12 = arith.extf %11 : vector<16x8xbf16> to vector<16x8xf32>
    %cst = arith.constant dense<0.000000e+00> : vector<16x128xf32>
    %13 = tpu.matmul %10, %8, %cst {dimension_numbers = #tpu.dot_dimension_numbers<[1], [0], [0], [1], [0, 0, 1, 1], [], []>, precision = #tpu.contract_precision<fp32>} : vector<16x8xf32>, vector<8x128xf32>, vector<16x128xf32> -> vector<16x128xf32>
    %c0_9 = arith.constant 0 : index
    %c0_10 = arith.constant 0 : index
    %c0_11 = arith.constant 0 : index
    %14 = vector.load %arg6[%c0_9, %c0_10, %c0_11] : memref<1x16x128xf32, #tpu.memory_space<vmem>>, vector<1x16x128xf32>
    %15 = vector.shape_cast %14 : vector<1x16x128xf32> to vector<16x128xf32>
    %16 = arith.addf %13, %15 : vector<16x128xf32>
    %cst_12 = arith.constant 0.000000e+00 : f32
    %17 = vector.broadcast %cst_12 : f32 to vector<16x128xf32>
    %18 = arith.maximumf %16, %17 : vector<16x128xf32>
    %c0_13 = arith.constant 0 : index
    %c0_14 = arith.constant 0 : index
    %19 = vector.load %arg17[%c0_13, %c0_14] : memref<8x128xf32, #tpu.memory_space<vmem>>, vector<8x128xf32>
    %cst_15 = arith.constant dense<0.000000e+00> : vector<8x128xf32>
    %20 = tpu.matmul %12, %18, %cst_15 {dimension_numbers = #tpu.dot_dimension_numbers<[0], [0], [1], [1], [0, 1, 1, 1], [], []>, precision = #tpu.contract_precision<fp32>} : vector<16x8xf32>, vector<16x128xf32>, vector<8x128xf32> -> vector<8x128xf32>
    %21 = arith.addf %19, %20 : vector<8x128xf32>
    %c0_16 = arith.constant 0 : index
    %c0_17 = arith.constant 0 : index
    %22 = vector.load %arg17[%c0_16, %c0_17] : memref<8x128xf32, #tpu.memory_space<vmem>>, vector<8x128xf32>
    tpu.vector_store %arg17[%c0_16, %c0_17], %21 {strides = array<i32>} : memref<8x128xf32, #tpu.memory_space<vmem>>, vector<8x128xf32>,
    %c0_i32_18 = arith.constant 0 : i32
    %23 = arith.cmpi eq, %arg1, %c0_i32_18 : i32
    %24 = arith.extui %23 : i1 to i32
    %c0_i32_19 = arith.constant 0 : i32
    %25 = arith.cmpi ne, %24, %c0_i32_19 : i32
    scf.if %25 {
      %26 = arith.index_cast %arg0 : i32 to index
      %27 = memref.load %arg2[%26] : memref<3xf32, #tpu.memory_space<smem>>
      %cst_20 = arith.constant 1.000000e+00 : f32
      %28 = arith.addf %cst_20, %27 : f32
      %29 = vector.broadcast %28 : f32 to vector<8x128xf32>
      %30 = arith.mulf %29, %8 : vector<8x128xf32>
      %c0_21 = arith.constant 0 : index
      %c0_22 = arith.constant 0 : index
      %31 = vector.load %arg17[%c0_21, %c0_22] : memref<8x128xf32, #tpu.memory_space<vmem>>, vector<8x128xf32>
      %32 = arith.addf %30, %31 : vector<8x128xf32>
      %c0_23 = arith.constant 0 : index
      %c0_24 = arith.constant 0 : index
      %c0_25 = arith.constant 0 : index
      %33 = vector.load %arg7[%c0_23, %c0_24, %c0_25] : memref<1x128x256xf32, #tpu.memory_space<vmem>>, vector<1x128x256xf32>
      %34 = vector.shape_cast %33 : vector<1x128x256xf32> to vector<128x256xf32>
      %cst_26 = arith.constant dense<0.000000e+00> : vector<8x256xf32>
      %35 = tpu.matmul %32, %34, %cst_26 {dimension_numbers = #tpu.dot_dimension_numbers<[1], [0], [0], [1], [0, 0, 1, 1], [], []>, precision = #tpu.contract_precision<fp32>} : vector<8x128xf32>, vector<128x256xf32>, vector<8x256xf32> -> vector<8x256xf32>
      %c0_27 = arith.constant 0 : index
      %c0_28 = arith.constant 0 : index
      %c0_29 = arith.constant 0 : index
      %36 = vector.load %arg8[%c0_27, %c0_28, %c0_29] : memref<1x1x256xf32, #tpu.memory_space<vmem>>, vector<1x1x256xf32>
      %37 = vector.shape_cast %36 : vector<1x1x256xf32> to vector<1x256xf32>
      %38 = vector.broadcast %37 : vector<1x256xf32> to vector<8x256xf32>
      %39 = arith.addf %35, %38 : vector<8x256xf32>
      %40 = vector.extract_strided_slice %39 {offsets = [0, 0], sizes = [1, 256], strides = [1, 1]} : vector<8x256xf32> to vector<1x256xf32>
      %41 = vector.broadcast %40 : vector<1x256xf32> to vector<8x256xf32>
      %42 = arith.subf %39, %41 : vector<8x256xf32>
      %cst_30 = arith.constant dense<0.000000e+00> : vector<256xf32>
      %43 = vector.multi_reduction <add>, %42, %cst_30 [0] : vector<8x256xf32> to vector<256xf32>
      %44 = vector.shape_cast %43 : vector<256xf32> to vector<1x256xf32>
      %45 = arith.mulf %42, %42 : vector<8x256xf32>
      %cst_31 = arith.constant dense<0.000000e+00> : vector<256xf32>
      %46 = vector.multi_reduction <add>, %45, %cst_31 [0] : vector<8x256xf32> to vector<256xf32>
      %47 = vector.shape_cast %46 : vector<256xf32> to vector<1x256xf32>
      %cst_32 = arith.constant 1.250000e-01 : f32
      %48 = vector.broadcast %cst_32 : f32 to vector<1x256xf32>
      %49 = arith.mulf %44, %48 : vector<1x256xf32>
      %cst_33 = arith.constant 1.250000e-01 : f32
      %50 = vector.broadcast %cst_33 : f32 to vector<1x256xf32>
      %51 = arith.mulf %47, %50 : vector<1x256xf32>
      %52 = arith.mulf %49, %49 : vector<1x256xf32>
      %53 = arith.subf %51, %52 : vector<1x256xf32>
      %54 = vector.broadcast %49 : vector<1x256xf32> to vector<8x256xf32>
      %55 = arith.subf %42, %54 : vector<8x256xf32>
      %cst_34 = arith.constant 9.99999974E-6 : f32
      %56 = vector.broadcast %cst_34 : f32 to vector<1x256xf32>
      %57 = arith.addf %53, %56 : vector<1x256xf32>
      %58 = math.rsqrt %57 : vector<1x256xf32>
      %59 = vector.broadcast %58 : vector<1x256xf32> to vector<8x256xf32>
      %60 = arith.mulf %55, %59 : vector<8x256xf32>
      %c0_35 = arith.constant 0 : index
      %c0_36 = arith.constant 0 : index
      %c0_37 = arith.constant 0 : index
      %61 = vector.load %arg9[%c0_35, %c0_36, %c0_37] : memref<1x1x256xf32, #tpu.memory_space<vmem>>, vector<1x1x256xf32>
      %62 = vector.shape_cast %61 : vector<1x1x256xf32> to vector<1x256xf32>
      %63 = vector.broadcast %62 : vector<1x256xf32> to vector<8x256xf32>
      %64 = arith.mulf %60, %63 : vector<8x256xf32>
      %c0_38 = arith.constant 0 : index
      %c0_39 = arith.constant 0 : index
      %c0_40 = arith.constant 0 : index
      %65 = vector.load %arg10[%c0_38, %c0_39, %c0_40] : memref<1x1x256xf32, #tpu.memory_space<vmem>>, vector<1x1x256xf32>
      %66 = vector.shape_cast %65 : vector<1x1x256xf32> to vector<1x256xf32>
      %67 = vector.broadcast %66 : vector<1x256xf32> to vector<8x256xf32>
      %68 = arith.addf %64, %67 : vector<8x256xf32>
      %cst_41 = arith.constant 0.000000e+00 : f32
      %69 = vector.broadcast %cst_41 : f32 to vector<8x256xf32>
      %70 = arith.maximumf %68, %69 : vector<8x256xf32>
      %c0_42 = arith.constant 0 : index
      %c0_43 = arith.constant 0 : index
      %c0_44 = arith.constant 0 : index
      %71 = vector.load %arg11[%c0_42, %c0_43, %c0_44] : memref<1x256x128xf32, #tpu.memory_space<vmem>>, vector<1x256x128xf32>
      %72 = vector.shape_cast %71 : vector<1x256x128xf32> to vector<256x128xf32>
      %cst_45 = arith.constant dense<0.000000e+00> : vector<8x128xf32>
      %73 = tpu.matmul %70, %72, %cst_45 {dimension_numbers = #tpu.dot_dimension_numbers<[1], [0], [0], [1], [0, 0, 1, 1], [], []>, precision = #tpu.contract_precision<fp32>} : vector<8x256xf32>, vector<256x128xf32>, vector<8x128xf32> -> vector<8x128xf32>
      %c0_46 = arith.constant 0 : index
      %c0_47 = arith.constant 0 : index
      %c0_48 = arith.constant 0 : index
      %74 = vector.load %arg12[%c0_46, %c0_47, %c0_48] : memref<1x1x128xf32, #tpu.memory_space<vmem>>, vector<1x1x128xf32>
      %75 = vector.shape_cast %74 : vector<1x1x128xf32> to vector<1x128xf32>
      %76 = vector.broadcast %75 : vector<1x128xf32> to vector<8x128xf32>
      %77 = arith.addf %73, %76 : vector<8x128xf32>
      %78 = vector.extract_strided_slice %77 {offsets = [0, 0], sizes = [1, 128], strides = [1, 1]} : vector<8x128xf32> to vector<1x128xf32>
      %79 = vector.broadcast %78 : vector<1x128xf32> to vector<8x128xf32>
      %80 = arith.subf %77, %79 : vector<8x128xf32>
      %cst_49 = arith.constant dense<0.000000e+00> : vector<128xf32>
      %81 = vector.multi_reduction <add>, %80, %cst_49 [0] : vector<8x128xf32> to vector<128xf32>
      %82 = vector.shape_cast %81 : vector<128xf32> to vector<1x128xf32>
      %83 = arith.mulf %80, %80 : vector<8x128xf32>
      %cst_50 = arith.constant dense<0.000000e+00> : vector<128xf32>
      %84 = vector.multi_reduction <add>, %83, %cst_50 [0] : vector<8x128xf32> to vector<128xf32>
      %85 = vector.shape_cast %84 : vector<128xf32> to vector<1x128xf32>
      %cst_51 = arith.constant 1.250000e-01 : f32
      %86 = vector.broadcast %cst_51 : f32 to vector<1x128xf32>
      %87 = arith.mulf %82, %86 : vector<1x128xf32>
      %cst_52 = arith.constant 1.250000e-01 : f32
      %88 = vector.broadcast %cst_52 : f32 to vector<1x128xf32>
      %89 = arith.mulf %85, %88 : vector<1x128xf32>
      %90 = arith.mulf %87, %87 : vector<1x128xf32>
      %91 = arith.subf %89, %90 : vector<1x128xf32>
      %92 = vector.broadcast %87 : vector<1x128xf32> to vector<8x128xf32>
      %93 = arith.subf %80, %92 : vector<8x128xf32>
      %cst_53 = arith.constant 9.99999974E-6 : f32
      %94 = vector.broadcast %cst_53 : f32 to vector<1x128xf32>
      %95 = arith.addf %91, %94 : vector<1x128xf32>
      %96 = math.rsqrt %95 : vector<1x128xf32>
      %97 = vector.broadcast %96 : vector<1x128xf32> to vector<8x128xf32>
      %98 = arith.mulf %93, %97 : vector<8x128xf32>
      %c0_54 = arith.constant 0 : index
      %c0_55 = arith.constant 0 : index
      %c0_56 = arith.constant 0 : index
      %99 = vector.load %arg13[%c0_54, %c0_55, %c0_56] : memref<1x1x128xf32, #tpu.memory_space<vmem>>, vector<1x1x128xf32>
      %100 = vector.shape_cast %99 : vector<1x1x128xf32> to vector<1x128xf32>
      %101 = vector.broadcast %100 : vector<1x128xf32> to vector<8x128xf32>
      %102 = arith.mulf %98, %101 : vector<8x128xf32>
      %c0_57 = arith.constant 0 : index
      %c0_58 = arith.constant 0 : index
      %c0_59 = arith.constant 0 : index
      %103 = vector.load %arg14[%c0_57, %c0_58, %c0_59] : memref<1x1x128xf32, #tpu.memory_space<vmem>>, vector<1x1x128xf32>
      %104 = vector.shape_cast %103 : vector<1x1x128xf32> to vector<1x128xf32>
      %105 = vector.broadcast %104 : vector<1x128xf32> to vector<8x128xf32>
      %106 = arith.addf %102, %105 : vector<8x128xf32>
      %c2_i32 = arith.constant 2 : i32
      %107 = arith.cmpi slt, %arg0, %c2_i32 : i32
      %108 = arith.extui %107 : i1 to i32
      %c0_i32_60 = arith.constant 0 : i32
      %109 = arith.cmpi ne, %108, %c0_i32_60 : i32
      scf.if %109 {
        %cst_63 = arith.constant 0.000000e+00 : f32
        %113 = vector.broadcast %cst_63 : f32 to vector<8x128xf32>
        %114 = arith.maximumf %106, %113 : vector<8x128xf32>
        %c0_64 = arith.constant 0 : index
        %c0_65 = arith.constant 0 : index
        %115 = vector.load %arg16[%c0_64, %c0_65] : memref<8x128xf32, #tpu.memory_space<vmem>>, vector<8x128xf32>
        tpu.vector_store %arg16[%c0_64, %c0_65], %114 {strides = array<i32>} : memref<8x128xf32, #tpu.memory_space<vmem>>, vector<8x128xf32>,
        %c0_66 = arith.constant 0 : index
        %c0_67 = arith.constant 0 : index
        %c0_68 = arith.constant 0 : index
        %116 = vector.load %arg15[%c0_66, %c0_67, %c0_68] : memref<1x8x128xf32, #tpu.memory_space<vmem>>, vector<1x8x128xf32>
        %117 = vector.shape_cast %116 : vector<1x8x128xf32> to vector<8x128xf32>
        %118 = vector.shape_cast %114 : vector<8x128xf32> to vector<1x8x128xf32>
        tpu.vector_store %arg15[%c0_66, %c0_67, %c0_68], %118 {strides = array<i32>} : memref<1x8x128xf32, #tpu.memory_space<vmem>>, vector<1x8x128xf32>,
      } else {
      }
      %c2_i32_61 = arith.constant 2 : i32
      %110 = arith.cmpi eq, %arg0, %c2_i32_61 : i32
      %111 = arith.extui %110 : i1 to i32
      %c0_i32_62 = arith.constant 0 : i32
      %112 = arith.cmpi ne, %111, %c0_i32_62 : i32
      scf.if %112 {
        %c0_63 = arith.constant 0 : index
        %c0_64 = arith.constant 0 : index
        %113 = vector.load %arg16[%c0_63, %c0_64] : memref<8x128xf32, #tpu.memory_space<vmem>>, vector<8x128xf32>
        tpu.vector_store %arg16[%c0_63, %c0_64], %106 {strides = array<i32>} : memref<8x128xf32, #tpu.memory_space<vmem>>, vector<8x128xf32>,
        %c0_65 = arith.constant 0 : index
        %c0_66 = arith.constant 0 : index
        %c0_67 = arith.constant 0 : index
        %114 = vector.load %arg15[%c0_65, %c0_66, %c0_67] : memref<1x8x128xf32, #tpu.memory_space<vmem>>, vector<1x8x128xf32>
        %115 = vector.shape_cast %114 : vector<1x8x128xf32> to vector<8x128xf32>
        %116 = vector.shape_cast %106 : vector<8x128xf32> to vector<1x8x128xf32>
        tpu.vector_store %arg15[%c0_65, %c0_66, %c0_67], %116 {strides = array<i32>} : memref<1x8x128xf32, #tpu.memory_space<vmem>>, vector<1x8x128xf32>,
      } else {
      }
    } else {
    }
    return
  }
  func.func @transform_0(%arg0: i32, %arg1: i32) -> i32 {
    %c0_i32 = arith.constant 0 : i32
    %c0_i32_0 = arith.constant 0 : i32
    return %c0_i32 : i32
  }
  func.func @transform_1(%arg0: i32, %arg1: i32) -> (i32, i32) {
    %c0_i32 = arith.constant 0 : i32
    %c0_i32_0 = arith.constant 0 : i32
    %c0_i32_1 = arith.constant 0 : i32
    return %c0_i32, %c0_i32_0 : i32, i32
  }
  func.func @transform_2(%arg0: i32, %arg1: i32) -> (i32, i32) {
    %c0_i32 = arith.constant 0 : i32
    %c0_i32_0 = arith.constant 0 : i32
    return %arg1, %c0_i32 : i32, i32
  }
  func.func @transform_3(%arg0: i32, %arg1: i32) -> (i32, i32) {
    %c0_i32 = arith.constant 0 : i32
    %c0_i32_0 = arith.constant 0 : i32
    return %arg1, %c0_i32 : i32, i32
  }
  func.func @transform_4(%arg0: i32, %arg1: i32) -> (i32, i32, i32) {
    %c0_i32 = arith.constant 0 : i32
    %c0_i32_0 = arith.constant 0 : i32
    return %arg0, %arg1, %c0_i32 : i32, i32, i32
  }
  func.func @transform_5(%arg0: i32, %arg1: i32) -> (i32, i32, i32) {
    %c0_i32 = arith.constant 0 : i32
    %c0_i32_0 = arith.constant 0 : i32
    %c0_i32_1 = arith.constant 0 : i32
    return %arg0, %c0_i32, %c0_i32_0 : i32, i32, i32
  }
  func.func @transform_6(%arg0: i32, %arg1: i32) -> (i32, i32, i32) {
    %c0_i32 = arith.constant 0 : i32
    %c0_i32_0 = arith.constant 0 : i32
    %c0_i32_1 = arith.constant 0 : i32
    return %arg0, %c0_i32, %c0_i32_0 : i32, i32, i32
  }
  func.func @transform_7(%arg0: i32, %arg1: i32) -> (i32, i32, i32) {
    %c0_i32 = arith.constant 0 : i32
    %c0_i32_0 = arith.constant 0 : i32
    %c0_i32_1 = arith.constant 0 : i32
    return %arg0, %c0_i32, %c0_i32_0 : i32, i32, i32
  }
  func.func @transform_8(%arg0: i32, %arg1: i32) -> (i32, i32, i32) {
    %c0_i32 = arith.constant 0 : i32
    %c0_i32_0 = arith.constant 0 : i32
    %c0_i32_1 = arith.constant 0 : i32
    return %arg0, %c0_i32, %c0_i32_0 : i32, i32, i32
  }
  func.func @transform_9(%arg0: i32, %arg1: i32) -> (i32, i32, i32) {
    %c0_i32 = arith.constant 0 : i32
    %c0_i32_0 = arith.constant 0 : i32
    %c0_i32_1 = arith.constant 0 : i32
    return %arg0, %c0_i32, %c0_i32_0 : i32, i32, i32
  }
  func.func @transform_10(%arg0: i32, %arg1: i32) -> (i32, i32, i32) {
    %c0_i32 = arith.constant 0 : i32
    %c0_i32_0 = arith.constant 0 : i32
    %c0_i32_1 = arith.constant 0 : i32
    return %arg0, %c0_i32, %c0_i32_0 : i32, i32, i32
  }
  func.func @transform_11(%arg0: i32, %arg1: i32) -> (i32, i32, i32) {
    %c0_i32 = arith.constant 0 : i32
    %c0_i32_0 = arith.constant 0 : i32
    %c0_i32_1 = arith.constant 0 : i32
    return %arg0, %c0_i32, %c0_i32_0 : i32, i32, i32
  }
  func.func @transform_12(%arg0: i32, %arg1: i32) -> (i32, i32, i32) {
    %c0_i32 = arith.constant 0 : i32
    %c0_i32_0 = arith.constant 0 : i32
    %c0_i32_1 = arith.constant 0 : i32
    return %arg0, %c0_i32, %c0_i32_0 : i32, i32, i32
  }
  func.func @transform_13(%arg0: i32, %arg1: i32) -> (i32, i32, i32) {
    %c0_i32 = arith.constant 0 : i32
    %c0_i32_0 = arith.constant 0 : i32
    %c0_i32_1 = arith.constant 0 : i32
    return %arg0, %c0_i32, %c0_i32_0 : i32, i32, i32
  }
}

</mosaic_0001>

<llo_original>
// kernel: tpu_custom_call.1
$region0: #{tpu_custom_call.1}
  #allocation0 [shape = 'u32[]', space=smem, size = 0x4, offset = 0x4, fixed_abs, tag = 'smem constant byte address 0x4 - core index']
  #allocation1 [shape = 'u32[144,128]{1,0:T(1,128)}', space=vmem, size = 0x12000, scoped, tag = 'internal scratch']
  #allocation2 [shape = 'f32[8,128]{1,0:T(8,128)}', space=vmem, size = 0x1000, scoped, tag = 'scratch operand']
  #allocation3 [shape = 'f32[8,128]{1,0:T(8,128)}', space=vmem, size = 0x1000, scoped, tag = 'scratch operand']
  %s0 = inlined_call_operand.hbm [shape: f32[3], index: 0, kind: input, shape index: {}]
  %s1 = inlined_call_operand.vmem [shape: f32[8,128], index: 1, kind: input, shape index: {}]
  %s2 = inlined_call_operand.vmem [shape: bf16[16,8], index: 2, kind: input, shape index: {}]
  %s3 = inlined_call_operand.vmem [shape: bf16[16,8], index: 3, kind: input, shape index: {}]
  %s4 = inlined_call_operand.hbm [shape: f32[3,16,128], index: 4, kind: input, shape index: {}]
  %s5 = inlined_call_operand.hbm [shape: f32[3,128,256], index: 5, kind: input, shape index: {}]
  %s6 = inlined_call_operand.vmem [shape: f32[3,1,256], index: 6, kind: input, shape index: {}]
  %s7 = inlined_call_operand.vmem [shape: f32[3,1,256], index: 7, kind: input, shape index: {}]
  %s8 = inlined_call_operand.vmem [shape: f32[3,1,256], index: 8, kind: input, shape index: {}]
  %s9 = inlined_call_operand.hbm [shape: f32[3,256,128], index: 9, kind: input, shape index: {}]
  %s10 = inlined_call_operand.vmem [shape: f32[3,1,128], index: 10, kind: input, shape index: {}]
  %s11 = inlined_call_operand.vmem [shape: f32[3,1,128], index: 11, kind: input, shape index: {}]
  %s12 = inlined_call_operand.vmem [shape: f32[3,1,128], index: 12, kind: input, shape index: {}]
  %s13 = inlined_call_operand.hbm [shape: f32[3,8,128], index: 13, kind: output, shape index: {}]
  %s14 = sld [smem:[#allocation0]]
  $region121: #{tpu_custom_call.1} parent=0
    _
  %s16 = ssub.s32 1, %s14
  %s17 = scalar_select 0, %s16, %s14
  $region1: #{tpu_custom_call.1} parent=0
    #allocation4 [shape = 'u8[512]{0}', space=smem, size = 0x200, scoped, tag = 'input window, operand 0, single buffered']
    #allocation5 [shape = 's32[2]{0}', space=sflag, size = 0x8, scoped, tag = 'scoped memory for tpu_custom_call.1']
    #allocation6 [shape = 's32[2]{0}', space=sflag, size = 0x8, scoped, tag = 'scoped memory for tpu_custom_call.1']
    #allocation7 [shape = 's32[2]{0}', space=sflag, size = 0x8, scoped, tag = 'scoped memory for tpu_custom_call.1']
    #allocation8 [shape = 'u8[16384]{0}', space=vmem, size = 0x4000, scoped, tag = 'input window, operand 4']
    #allocation9 [shape = 'u8[262144]{0}', space=vmem, size = 0x40000, scoped, tag = 'input window, operand 5']
    #allocation10 [shape = 's32[2]{0}', space=sflag, size = 0x8, scoped, tag = 'scoped memory for tpu_custom_call.1']
    #allocation11 [shape = 'u8[262144]{0}', space=vmem, size = 0x40000, scoped, tag = 'input window, operand 9']
    #allocation12 [shape = 'u8[8192]{0}', space=vmem, size = 0x2000, scoped, tag = 'output window, operand 0']
    %18 = vsyncpa [#allocation7], 0
    %19 = vsyncpa [#allocation5], 0
    %s20 = scalar_lea.sflag [#allocation5], 1
    %21 = vsyncpa %s20, 0
    %22 = vsyncpa [#allocation10], 0
    %s23 = scalar_lea.sflag [#allocation10], 1
    %24 = vsyncpa %s23, 0
    %25 = vsyncpa [#allocation6], 0
    %s26 = scalar_lea.sflag [#allocation6], 1
    %27 = vsyncpa %s26, 0
    loop: start=0, step=1, limit=5
    $region2: #{tpu_custom_call.1} parent=1 // loop_pre_header
      _
    $region3: #{tpu_custom_call.1} parent=1 // loop_header
      %s29 = sphi 0, %s33
      %p30 = scmp.ge.s32.totalorder %s29, 5
      %s36 = sphi 0, %s48
      %s37 = sphi 0, %s44
      %s38 = sphi 0, %s36
      %s39 = sphi 0, %s37
      %s40 = sphi 0, %s38
      %s41 = sphi 0, %s39
      %s49 = sphi 0, %s49
      %s51 = sphi 0, %s49
      %s52 = sphi 0, %s51
      %s66 = sphi 0, %s52
      %s70 = sphi 0, %s70
      %s72 = sphi 0, %s70
      %s73 = sphi 0, %s72
      %s87 = sphi 0, %s73
      %s93 = sphi 0, %s95
      %s96 = sphi 0, %s93
      %s97 = sphi 0, %s96
      %s113 = sphi 0, %s97
      %s119 = sphi 0, %s121
      %s122 = sphi 0, %s119
      %s123 = sphi 0, %s122
      %s139 = sphi 0, %s123
      %s147 = sphi 0, %s149
      %s150 = sphi 0, %s147
      %s151 = sphi 0, %s150
      %s167 = sphi 0, %s151
      %s173 = sphi 0, %s175
      %s176 = sphi 0, %s173
      %s177 = sphi 0, %s176
      %s193 = sphi 0, %s177
      %s199 = sphi 0, %s201
      %s202 = sphi 0, %s199
      %s203 = sphi 0, %s202
      %s219 = sphi 0, %s203
      %s225 = sphi 0, %s227
      %s228 = sphi 0, %s225
      %s229 = sphi 0, %s228
      %s245 = sphi 0, %s229
      %s251 = sphi 0, %s253
      %s254 = sphi 0, %s251
      %s255 = sphi 0, %s254
      %s271 = sphi 0, %s255
      %s277 = sphi 0, %s279
      %s280 = sphi 0, %s277
      %s281 = sphi 0, %s280
      %s297 = sphi 0, %s281
      %s303 = sphi 0, %s305
      %s306 = sphi 0, %s303
      %s307 = sphi 0, %s306
      %s323 = sphi 0, %s307
      %s329 = sphi 0, %s331
      %s332 = sphi 0, %s329
      %s333 = sphi 0, %s332
      %s349 = sphi 0, %s333
      %s355 = sphi 0, %s357
      %s358 = sphi 0, %s355
      %s359 = sphi 0, %s358
      %s375 = sphi 0, %s359
      %s381 = sphi 0, %s383
      %s384 = sphi 0, %s381
      %s385 = sphi 0, %s384
      %s401 = sphi 0, %s385
    $region4: #{tpu_custom_call.1} parent=1 // loop_header_branch
      %32 = sbr.rel (%p30) target = $region8
    $region5: #{tpu_custom_call.1} parent=1 // loop_body
      %s34 = ssub.s32 %s29, 1
      %s35 = ssub.s32 %s29, 2
      %s42 = sadd.s32 1, %s37
      %p43 = scmp.ge.s32.totalorder %s42, 1
      %s44 = scalar_select %p43, 0, %s42
      %s45 = sadd.s32 1, %s36
      %s46 = scalar_select %p43, %s45, %s36
      %p47 = scmp.ge.s32.totalorder %s46, 3
      %s48 = scalar_select %p47, 0, %s46
      %s50 = sadd.s32 %s49, 1
      %p53 = scmp.eq.s32.totalorder %s29, 2
      %p54 = scmp.ne.s32.totalorder %s49, %s51
      %p55 = scmp.eq.s32.totalorder %s29, 0
      %p56 = por %p54, %p55
      %p57 = scmp.ne.s32.totalorder %s49, %s51
      %p58 = scmp.eq.s32.totalorder %s34, 2
      %p59 = por %p57, %p58
      %p60 = scmp.ne.s32.totalorder %s51, %s52
      %p61 = scmp.eq.s32.totalorder %s34, 0
      %p62 = por %p60, %p61
      %p63 = scmp.ne.s32.totalorder %s51, %s52
      %p64 = scmp.eq.s32.totalorder %s35, 2
      %p65 = por %p63, %p64
      %p67 = scmp.ne.s32.totalorder %s52, %s66
      %p68 = scmp.eq.s32.totalorder %s35, 0
      %p69 = por %p67, %p68
      %s71 = sadd.s32 %s70, 1
      %p74 = scmp.eq.s32.totalorder %s29, 2
      %p75 = scmp.ne.s32.totalorder %s70, %s72
      %p76 = scmp.eq.s32.totalorder %s29, 0
      %p77 = por %p75, %p76
      %p78 = scmp.ne.s32.totalorder %s70, %s72
      %p79 = scmp.eq.s32.totalorder %s34, 2
      %p80 = por %p78, %p79
      %p81 = scmp.ne.s32.totalorder %s72, %s73
      %p82 = scmp.eq.s32.totalorder %s34, 0
      %p83 = por %p81, %p82
      %p84 = scmp.ne.s32.totalorder %s72, %s73
      %p85 = scmp.eq.s32.totalorder %s35, 2
      %p86 = por %p84, %p85
      %p88 = scmp.ne.s32.totalorder %s73, %s87
      %p89 = scmp.eq.s32.totalorder %s35, 0
      %p90 = por %p88, %p89
      %s91 = ssub.s32 %s37, %s44
      %p92 = scmp.eq.s32.totalorder %s91, 0
      %s94 = sadd.s32 %s93, 1
      %s95 = scalar_select %p92, %s93, %s94
      %p98 = pneg %p92
      %p99 = scmp.eq.s32.totalorder %s29, 2
      %p100 = por %p98, %p99
      %p101 = scmp.ne.s32.totalorder %s93, %s96
      %p102 = scmp.eq.s32.totalorder %s29, 0
      %p103 = por %p101, %p102
      %p104 = scmp.ne.s32.totalorder %s93, %s96
      %p105 = scmp.eq.s32.totalorder %s34, 2
      %p106 = por %p104, %p105
      %p107 = scmp.ne.s32.totalorder %s96, %s97
      %p108 = scmp.eq.s32.totalorder %s34, 0
      %p109 = por %p107, %p108
      %p110 = scmp.ne.s32.totalorder %s96, %s97
      %p111 = scmp.eq.s32.totalorder %s35, 2
      %p112 = por %p110, %p111
      %p114 = scmp.ne.s32.totalorder %s97, %s113
      %p115 = scmp.eq.s32.totalorder %s35, 0
      %p116 = por %p114, %p115
      %s117 = ssub.s32 %s37, %s44
      %p118 = scmp.eq.s32.totalorder %s117, 0
      %s120 = sadd.s32 %s119, 1
      %s121 = scalar_select %p118, %s119, %s120
      %p124 = pneg %p118
      %p125 = scmp.eq.s32.totalorder %s29, 2
      %p126 = por %p124, %p125
      %p127 = scmp.ne.s32.totalorder %s119, %s122
      %p128 = scmp.eq.s32.totalorder %s29, 0
      %p129 = por %p127, %p128
      %p130 = scmp.ne.s32.totalorder %s119, %s122
      %p131 = scmp.eq.s32.totalorder %s34, 2
      %p132 = por %p130, %p131
      %p133 = scmp.ne.s32.totalorder %s122, %s123
      %p134 = scmp.eq.s32.totalorder %s34, 0
      %p135 = por %p133, %p134
      %p136 = scmp.ne.s32.totalorder %s122, %s123
      %p137 = scmp.eq.s32.totalorder %s35, 2
      %p138 = por %p136, %p137
      %p140 = scmp.ne.s32.totalorder %s123, %s139
      %p141 = scmp.eq.s32.totalorder %s35, 0
      %p142 = por %p140, %p141
      %s143 = ssub.s32 %s36, %s48
      %s144 = ssub.s32 %s37, %s44
      %s145 = sor.u32 %s143, %s144
      %p146 = scmp.eq.s32.totalorder %s145, 0
      %s148 = sadd.s32 %s147, 1
      %s149 = scalar_select %p146, %s147, %s148
      %p152 = pneg %p146
      %p153 = scmp.eq.s32.totalorder %s29, 2
      %p154 = por %p152, %p153
      %p155 = scmp.ne.s32.totalorder %s147, %s150
      %p156 = scmp.eq.s32.totalorder %s29, 0
      %p157 = por %p155, %p156
      %p158 = scmp.ne.s32.totalorder %s147, %s150
      %p159 = scmp.eq.s32.totalorder %s34, 2
      %p160 = por %p158, %p159
      %p161 = scmp.ne.s32.totalorder %s150, %s151
      %p162 = scmp.eq.s32.totalorder %s34, 0
      %p163 = por %p161, %p162
      %p164 = scmp.ne.s32.totalorder %s150, %s151
      %p165 = scmp.eq.s32.totalorder %s35, 2
      %p166 = por %p164, %p165
      %p168 = scmp.ne.s32.totalorder %s151, %s167
      %p169 = scmp.eq.s32.totalorder %s35, 0
      %p170 = por %p168, %p169
      %s171 = ssub.s32 %s36, %s48
      %p172 = scmp.eq.s32.totalorder %s171, 0
      %s174 = sadd.s32 %s173, 1
      %s175 = scalar_select %p172, %s173, %s174
      %p178 = pneg %p172
      %p179 = scmp.eq.s32.totalorder %s29, 2
      %p180 = por %p178, %p179
      %p181 = scmp.ne.s32.totalorder %s173, %s176
      %p182 = scmp.eq.s32.totalorder %s29, 0
      %p183 = por %p181, %p182
      %p184 = scmp.ne.s32.totalorder %s173, %s176
      %p185 = scmp.eq.s32.totalorder %s34, 2
      %p186 = por %p184, %p185
      %p187 = scmp.ne.s32.totalorder %s176, %s177
      %p188 = scmp.eq.s32.totalorder %s34, 0
      %p189 = por %p187, %p188
      %p190 = scmp.ne.s32.totalorder %s176, %s177
      %p191 = scmp.eq.s32.totalorder %s35, 2
      %p192 = por %p190, %p191
      %p194 = scmp.ne.s32.totalorder %s177, %s193
      %p195 = scmp.eq.s32.totalorder %s35, 0
      %p196 = por %p194, %p195
      %s197 = ssub.s32 %s36, %s48
      %p198 = scmp.eq.s32.totalorder %s197, 0
      %s200 = sadd.s32 %s199, 1
      %s201 = scalar_select %p198, %s199, %s200
      %p204 = pneg %p198
      %p205 = scmp.eq.s32.totalorder %s29, 2
      %p206 = por %p204, %p205
      %p207 = scmp.ne.s32.totalorder %s199, %s202
      %p208 = scmp.eq.s32.totalorder %s29, 0
      %p209 = por %p207, %p208
      %p210 = scmp.ne.s32.totalorder %s199, %s202
      %p211 = scmp.eq.s32.totalorder %s34, 2
      %p212 = por %p210, %p211
      %p213 = scmp.ne.s32.totalorder %s202, %s203
      %p214 = scmp.eq.s32.totalorder %s34, 0
      %p215 = por %p213, %p214
      %p216 = scmp.ne.s32.totalorder %s202, %s203
      %p217 = scmp.eq.s32.totalorder %s35, 2
      %p218 = por %p216, %p217
      %p220 = scmp.ne.s32.totalorder %s203, %s219
      %p221 = scmp.eq.s32.totalorder %s35, 0
      %p222 = por %p220, %p221
      %s223 = ssub.s32 %s36, %s48
      %p224 = scmp.eq.s32.totalorder %s223, 0
      %s226 = sadd.s32 %s225, 1
      %s227 = scalar_select %p224, %s225, %s226
      %p230 = pneg %p224
      %p231 = scmp.eq.s32.totalorder %s29, 2
      %p232 = por %p230, %p231
      %p233 = scmp.ne.s32.totalorder %s225, %s228
      %p234 = scmp.eq.s32.totalorder %s29, 0
      %p235 = por %p233, %p234
      %p236 = scmp.ne.s32.totalorder %s225, %s228
      %p237 = scmp.eq.s32.totalorder %s34, 2
      %p238 = por %p236, %p237
      %p239 = scmp.ne.s32.totalorder %s228, %s229
      %p240 = scmp.eq.s32.totalorder %s34, 0
      %p241 = por %p239, %p240
      %p242 = scmp.ne.s32.totalorder %s228, %s229
      %p243 = scmp.eq.s32.totalorder %s35, 2
      %p244 = por %p242, %p243
      %p246 = scmp.ne.s32.totalorder %s229, %s245
      %p247 = scmp.eq.s32.totalorder %s35, 0
      %p248 = por %p246, %p247
      %s249 = ssub.s32 %s36, %s48
      %p250 = scmp.eq.s32.totalorder %s249, 0
      %s252 = sadd.s32 %s251, 1
      %s253 = scalar_select %p250, %s251, %s252
      %p256 = pneg %p250
      %p257 = scmp.eq.s32.totalorder %s29, 2
      %p258 = por %p256, %p257
      %p259 = scmp.ne.s32.totalorder %s251, %s254
      %p260 = scmp.eq.s32.totalorder %s29, 0
      %p261 = por %p259, %p260
      %p262 = scmp.ne.s32.totalorder %s251, %s254
      %p263 = scmp.eq.s32.totalorder %s34, 2
      %p264 = por %p262, %p263
      %p265 = scmp.ne.s32.totalorder %s254, %s255
      %p266 = scmp.eq.s32.totalorder %s34, 0
      %p267 = por %p265, %p266
      %p268 = scmp.ne.s32.totalorder %s254, %s255
      %p269 = scmp.eq.s32.totalorder %s35, 2
      %p270 = por %p268, %p269
      %p272 = scmp.ne.s32.totalorder %s255, %s271
      %p273 = scmp.eq.s32.totalorder %s35, 0
      %p274 = por %p272, %p273
      %s275 = ssub.s32 %s36, %s48
      %p276 = scmp.eq.s32.totalorder %s275, 0
      %s278 = sadd.s32 %s277, 1
      %s279 = scalar_select %p276, %s277, %s278
      %p282 = pneg %p276
      %p283 = scmp.eq.s32.totalorder %s29, 2
      %p284 = por %p282, %p283
      %p285 = scmp.ne.s32.totalorder %s277, %s280
      %p286 = scmp.eq.s32.totalorder %s29, 0
      %p287 = por %p285, %p286
      %p288 = scmp.ne.s32.totalorder %s277, %s280
      %p289 = scmp.eq.s32.totalorder %s34, 2
      %p290 = por %p288, %p289
      %p291 = scmp.ne.s32.totalorder %s280, %s281
      %p292 = scmp.eq.s32.totalorder %s34, 0
      %p293 = por %p291, %p292
      %p294 = scmp.ne.s32.totalorder %s280, %s281
      %p295 = scmp.eq.s32.totalorder %s35, 2
      %p296 = por %p294, %p295
      %p298 = scmp.ne.s32.totalorder %s281, %s297
      %p299 = scmp.eq.s32.totalorder %s35, 0
      %p300 = por %p298, %p299
      %s301 = ssub.s32 %s36, %s48
      %p302 = scmp.eq.s32.totalorder %s301, 0
      %s304 = sadd.s32 %s303, 1
      %s305 = scalar_select %p302, %s303, %s304
      %p308 = pneg %p302
      %p309 = scmp.eq.s32.totalorder %s29, 2
      %p310 = por %p308, %p309
      %p311 = scmp.ne.s32.totalorder %s303, %s306
      %p312 = scmp.eq.s32.totalorder %s29, 0
      %p313 = por %p311, %p312
      %p314 = scmp.ne.s32.totalorder %s303, %s306
      %p315 = scmp.eq.s32.totalorder %s34, 2
      %p316 = por %p314, %p315
      %p317 = scmp.ne.s32.totalorder %s306, %s307
      %p318 = scmp.eq.s32.totalorder %s34, 0
      %p319 = por %p317, %p318
      %p320 = scmp.ne.s32.totalorder %s306, %s307
      %p321 = scmp.eq.s32.totalorder %s35, 2
      %p322 = por %p320, %p321
      %p324 = scmp.ne.s32.totalorder %s307, %s323
      %p325 = scmp.eq.s32.totalorder %s35, 0
      %p326 = por %p324, %p325
      %s327 = ssub.s32 %s36, %s48
      %p328 = scmp.eq.s32.totalorder %s327, 0
      %s330 = sadd.s32 %s329, 1
      %s331 = scalar_select %p328, %s329, %s330
      %p334 = pneg %p328
      %p335 = scmp.eq.s32.totalorder %s29, 2
      %p336 = por %p334, %p335
      %p337 = scmp.ne.s32.totalorder %s329, %s332
      %p338 = scmp.eq.s32.totalorder %s29, 0
      %p339 = por %p337, %p338
      %p340 = scmp.ne.s32.totalorder %s329, %s332
      %p341 = scmp.eq.s32.totalorder %s34, 2
      %p342 = por %p340, %p341
      %p343 = scmp.ne.s32.totalorder %s332, %s333
      %p344 = scmp.eq.s32.totalorder %s34, 0
      %p345 = por %p343, %p344
      %p346 = scmp.ne.s32.totalorder %s332, %s333
      %p347 = scmp.eq.s32.totalorder %s35, 2
      %p348 = por %p346, %p347
      %p350 = scmp.ne.s32.totalorder %s333, %s349
      %p351 = scmp.eq.s32.totalorder %s35, 0
      %p352 = por %p350, %p351
      %s353 = ssub.s32 %s36, %s48
      %p354 = scmp.eq.s32.totalorder %s353, 0
      %s356 = sadd.s32 %s355, 1
      %s357 = scalar_select %p354, %s355, %s356
      %p360 = pneg %p354
      %p361 = scmp.eq.s32.totalorder %s29, 2
      %p362 = por %p360, %p361
      %p363 = scmp.ne.s32.totalorder %s355, %s358
      %p364 = scmp.eq.s32.totalorder %s29, 0
      %p365 = por %p363, %p364
      %p366 = scmp.ne.s32.totalorder %s355, %s358
      %p367 = scmp.eq.s32.totalorder %s34, 2
      %p368 = por %p366, %p367
      %p369 = scmp.ne.s32.totalorder %s358, %s359
      %p370 = scmp.eq.s32.totalorder %s34, 0
      %p371 = por %p369, %p370
      %p372 = scmp.ne.s32.totalorder %s358, %s359
      %p373 = scmp.eq.s32.totalorder %s35, 2
      %p374 = por %p372, %p373
      %p376 = scmp.ne.s32.totalorder %s359, %s375
      %p377 = scmp.eq.s32.totalorder %s35, 0
      %p378 = por %p376, %p377
      %s379 = ssub.s32 %s36, %s48
      %p380 = scmp.eq.s32.totalorder %s379, 0
      %s382 = sadd.s32 %s381, 1
      %s383 = scalar_select %p380, %s381, %s382
      %p386 = pneg %p380
      %p387 = scmp.eq.s32.totalorder %s29, 2
      %p388 = por %p386, %p387
      %p389 = scmp.ne.s32.totalorder %s381, %s384
      %p390 = scmp.eq.s32.totalorder %s29, 0
      %p391 = por %p389, %p390
      %p392 = scmp.ne.s32.totalorder %s381, %s384
      %p393 = scmp.eq.s32.totalorder %s34, 2
      %p394 = por %p392, %p393
      %p395 = scmp.ne.s32.totalorder %s384, %s385
      %p396 = scmp.eq.s32.totalorder %s34, 0
      %p397 = por %p395, %p396
      %p398 = scmp.ne.s32.totalorder %s384, %s385
      %p399 = scmp.eq.s32.totalorder %s35, 2
      %p400 = por %p398, %p399
      %p402 = scmp.ne.s32.totalorder %s385, %s401
      %p403 = scmp.eq.s32.totalorder %s35, 0
      %p404 = por %p402, %p403
      %p405 = scmp.le.s32.totalorder 1, %s29
      %p406 = scmp.lt.s32.totalorder %s29, 4
      %p407 = pnand %p405, %p406
      %p408 = pneg %p407
      // Predicated region
      $region9: #{tpu_custom_call.1} parent=5 // pred_check
        _
      $region10: #{tpu_custom_call.1} parent=5 // pred_check_branch
        %410 = sbr.rel (%p407) target = $region12
      $region11: #{tpu_custom_call.1} parent=5 // pred_region
        %s411 = ssub.s32 %s29, 1
        // Predicated region
        $region13: #{tpu_custom_call.1} parent=11 // pred_check
          %p412 = pneg %p62
        $region14: #{tpu_custom_call.1} parent=11 // pred_check_branch
          %414 = sbr.rel (%p412) target = $region16
        $region15: #{tpu_custom_call.1} parent=11 // pred_region
          %s416 = ssub.s32 16, 16
          %417 = vsyncadd [#allocation7], %s416
          %420 = dma.hbm_to_smem %s0, 16, [#allocation4], [#allocation7]
        $region16: #{tpu_custom_call.1} parent=11 // pred_fallthru
          _
        // Predicated region
        $region17: #{tpu_custom_call.1} parent=11 // pred_check
          %p421 = pneg %p83
        $region18: #{tpu_custom_call.1} parent=11 // pred_check_branch
          %423 = sbr.rel (%p421) target = $region20
        $region19: #{tpu_custom_call.1} parent=11 // pred_region
          _
        $region20: #{tpu_custom_call.1} parent=11 // pred_fallthru
          _
        // Predicated region
        $region21: #{tpu_custom_call.1} parent=11 // pred_check
          %p424 = pneg %p109
        $region22: #{tpu_custom_call.1} parent=11 // pred_check_branch
          %426 = sbr.rel (%p424) target = $region24
        $region23: #{tpu_custom_call.1} parent=11 // pred_region
          %s427 = smul.u32 2, %s39
          %p428 = scmp.lt.s32.totalorder %s427, 1
          %s429 = scalar_select %p428, %s427, 1
          %s430 = smul.addr %s429, 4
          %s431 = scalar_lea.vmem %s2, %s430
          %s432 = smul.u32 2, %s39
        $region24: #{tpu_custom_call.1} parent=11 // pred_fallthru
          _
        // Predicated region
        $region25: #{tpu_custom_call.1} parent=11 // pred_check
          %p433 = pneg %p135
        $region26: #{tpu_custom_call.1} parent=11 // pred_check_branch
          %435 = sbr.rel (%p433) target = $region28
        $region27: #{tpu_custom_call.1} parent=11 // pred_region
          %s436 = smul.u32 2, %s39
          %p437 = scmp.lt.s32.totalorder %s436, 1
          %s438 = scalar_select %p437, %s436, 1
          %s439 = smul.addr %s438, 4
          %s440 = scalar_lea.vmem %s3, %s439
          %s441 = smul.u32 2, %s39
        $region28: #{tpu_custom_call.1} parent=11 // pred_fallthru
          _
      $region12: #{tpu_custom_call.1} parent=5 // pred_fallthru
        _
      %p442 = scmp.lt.s32.totalorder %s29, 3
      // Predicated region
      $region29: #{tpu_custom_call.1} parent=5 // pred_check
        %p443 = pneg %p442
      $region30: #{tpu_custom_call.1} parent=5 // pred_check_branch
        %445 = sbr.rel (%p443) target = $region32
      $region31: #{tpu_custom_call.1} parent=5 // pred_region
        // Predicated region
        $region33: #{tpu_custom_call.1} parent=31 // pred_check
          %p446 = pneg %p157
        $region34: #{tpu_custom_call.1} parent=31 // pred_check_branch
          %448 = sbr.rel (%p446) target = $region36
        $region35: #{tpu_custom_call.1} parent=31 // pred_region
          %s449 = sand.u32 %s147, 1
          %s450 = scalar_lea.sflag [#allocation5], %s449
          %s451 = sand.u32 %s147, 1
          %s452 = smul.addr %s451, 16
          %s453 = scalar_lea.vmem [#allocation8], %s452
          %s454 = smul.u32 2, %s37
          %s456 = ssub.s32 256, 256
          %457 = vsyncadd %s450, %s456
          %s458 = smul.addr %s36, 2
          %s459 = sadd.s32 %s454, %s458
          %s460 = smul.addr %s459, 128
          %s461 = scalar_lea.hbm %s4, %s460
          %s462 = sshll.u32 %s453, 4
          %s463 = int_to_ptr.vmem [resolvable:$true] %s462
          %468 = dma.hbm_to_vmem [thread:$0]  %s461, 256, %s463, %s450, 128, 128, 8
        $region36: #{tpu_custom_call.1} parent=31 // pred_fallthru
          _
        // Predicated region
        $region37: #{tpu_custom_call.1} parent=31 // pred_check
          %p469 = pneg %p183
        $region38: #{tpu_custom_call.1} parent=31 // pred_check_branch
          %471 = sbr.rel (%p469) target = $region40
        $region39: #{tpu_custom_call.1} parent=31 // pred_region
          %s472 = sand.u32 %s29, 1
          %s473 = scalar_lea.sflag [#allocation10], %s472
          %s474 = sand.u32 %s173, 1
          %s475 = smul.addr %s474, 256
          %s476 = scalar_lea.vmem [#allocation9], %s475
          %s478 = ssub.s32 4096, 4096
          %479 = vsyncadd %s473, %s478
          %s480 = smul.addr %s36, 32
          %s481 = smul.addr %s480, 128
          %s482 = scalar_lea.hbm %s5, %s481
          %s483 = sshll.u32 %s476, 4
          %s484 = int_to_ptr.vmem [resolvable:$true] %s483
          %489 = dma.hbm_to_vmem [thread:$0]  %s482, 4096, %s484, %s473, 256, 256, 16
        $region40: #{tpu_custom_call.1} parent=31 // pred_fallthru
          _
        // Predicated region
        $region41: #{tpu_custom_call.1} parent=31 // pred_check
          %p490 = pneg %p209
        $region42: #{tpu_custom_call.1} parent=31 // pred_check_branch
          %492 = sbr.rel (%p490) target = $region44
        $region43: #{tpu_custom_call.1} parent=31 // pred_region
          %p493 = scmp.lt.s32.totalorder %s36, 2
          %s494 = scalar_select %p493, %s36, 2
          %s495 = smul.addr %s494, 2
          %s496 = scalar_lea.vmem %s6, %s495
        $region44: #{tpu_custom_call.1} parent=31 // pred_fallthru
          _
        // Predicated region
        $region45: #{tpu_custom_call.1} parent=31 // pred_check
          %p497 = pneg %p235
        $region46: #{tpu_custom_call.1} parent=31 // pred_check_branch
          %499 = sbr.rel (%p497) target = $region48
        $region47: #{tpu_custom_call.1} parent=31 // pred_region
          %p500 = scmp.lt.s32.totalorder %s36, 2
          %s501 = scalar_select %p500, %s36, 2
          %s502 = smul.addr %s501, 2
          %s503 = scalar_lea.vmem %s7, %s502
        $region48: #{tpu_custom_call.1} parent=31 // pred_fallthru
          _
        // Predicated region
        $region49: #{tpu_custom_call.1} parent=31 // pred_check
          %p504 = pneg %p261
        $region50: #{tpu_custom_call.1} parent=31 // pred_check_branch
          %506 = sbr.rel (%p504) target = $region52
        $region51: #{tpu_custom_call.1} parent=31 // pred_region
          %p507 = scmp.lt.s32.totalorder %s36, 2
          %s508 = scalar_select %p507, %s36, 2
          %s509 = smul.addr %s508, 2
          %s510 = scalar_lea.vmem %s8, %s509
        $region52: #{tpu_custom_call.1} parent=31 // pred_fallthru
          _
        // Predicated region
        $region53: #{tpu_custom_call.1} parent=31 // pred_check
          %p511 = pneg %p287
        $region54: #{tpu_custom_call.1} parent=31 // pred_check_branch
          %513 = sbr.rel (%p511) target = $region56
        $region55: #{tpu_custom_call.1} parent=31 // pred_region
          %s514 = sand.u32 %s29, 1
          %s515 = scalar_lea.sflag [#allocation10], %s514
          %s516 = sand.u32 %s277, 1
          %s517 = smul.addr %s516, 256
          %s518 = scalar_lea.vmem [#allocation11], %s517
          %s520 = ssub.s32 4096, 4096
          %521 = vsyncadd %s515, %s520
          %s522 = smul.addr %s36, 32
          %s523 = smul.addr %s522, 128
          %s524 = scalar_lea.hbm %s9, %s523
          %s525 = sshll.u32 %s518, 4
          %s526 = int_to_ptr.vmem [resolvable:$true] %s525
          %531 = dma.hbm_to_vmem [thread:$0]  %s524, 4096, %s526, %s515, 128, 128, 8
        $region56: #{tpu_custom_call.1} parent=31 // pred_fallthru
          _
        // Predicated region
        $region57: #{tpu_custom_call.1} parent=31 // pred_check
          %p532 = pneg %p313
        $region58: #{tpu_custom_call.1} parent=31 // pred_check_branch
          %534 = sbr.rel (%p532) target = $region60
        $region59: #{tpu_custom_call.1} parent=31 // pred_region
          %p535 = scmp.lt.s32.totalorder %s36, 2
          %s536 = scalar_select %p535, %s36, 2
          %s537 = scalar_lea.vmem %s10, %s536
        $region60: #{tpu_custom_call.1} parent=31 // pred_fallthru
          _
        // Predicated region
        $region61: #{tpu_custom_call.1} parent=31 // pred_check
          %p538 = pneg %p339
        $region62: #{tpu_custom_call.1} parent=31 // pred_check_branch
          %540 = sbr.rel (%p538) target = $region64
        $region63: #{tpu_custom_call.1} parent=31 // pred_region
          %p541 = scmp.lt.s32.totalorder %s36, 2
          %s542 = scalar_select %p541, %s36, 2
          %s543 = scalar_lea.vmem %s11, %s542
        $region64: #{tpu_custom_call.1} parent=31 // pred_fallthru
          _
        // Predicated region
        $region65: #{tpu_custom_call.1} parent=31 // pred_check
          %p544 = pneg %p365
        $region66: #{tpu_custom_call.1} parent=31 // pred_check_branch
          %546 = sbr.rel (%p544) target = $region68
        $region67: #{tpu_custom_call.1} parent=31 // pred_region
          %p547 = scmp.lt.s32.totalorder %s36, 2
          %s548 = scalar_select %p547, %s36, 2
          %s549 = scalar_lea.vmem %s12, %s548
        $region68: #{tpu_custom_call.1} parent=31 // pred_fallthru
          _
      $region32: #{tpu_custom_call.1} parent=5 // pred_fallthru
        _
      %p550 = scmp.le.s32.totalorder 1, %s29
      %p551 = scmp.lt.s32.totalorder %s29, 4
      %p552 = pnand %p550, %p551
      %p553 = pneg %p552
      // Predicated region
      $region69: #{tpu_custom_call.1} parent=5 // pred_check
        _
      $region70: #{tpu_custom_call.1} parent=5 // pred_check_branch
        %555 = sbr.rel (%p552) target = $region72
      $region71: #{tpu_custom_call.1} parent=5 // pred_region
        %s556 = ssub.s32 %s29, 1
        // Predicated region
        $region73: #{tpu_custom_call.1} parent=71 // pred_check
          %p557 = pneg %p62
        $region74: #{tpu_custom_call.1} parent=71 // pred_check_branch
          %559 = sbr.rel (%p557) target = $region76
        $region75: #{tpu_custom_call.1} parent=71 // pred_region
          %560 = dma.done [#allocation7], 16
        $region76: #{tpu_custom_call.1} parent=71 // pred_fallthru
          _
        %s561 = sand.u32 %s150, 1
        %s562 = scalar_lea.sflag [#allocation5], %s561
        %s563 = sand.u32 %s150, 1
        %s564 = smul.addr %s563, 16
        %s565 = scalar_lea.vmem [#allocation8], %s564
        // Predicated region
        $region77: #{tpu_custom_call.1} parent=71 // pred_check
          %p566 = pneg %p163
        $region78: #{tpu_custom_call.1} parent=71 // pred_check_branch
          %568 = sbr.rel (%p566) target = $region80
        $region79: #{tpu_custom_call.1} parent=71 // pred_region
          %569 = dma.done %s562, 256
        $region80: #{tpu_custom_call.1} parent=71 // pred_fallthru
          _
        %s570 = sand.u32 %s34, 1
        %s571 = scalar_lea.sflag [#allocation10], %s570
        %s572 = sand.u32 %s176, 1
        %s573 = smul.addr %s572, 256
        %s574 = scalar_lea.vmem [#allocation9], %s573
        // Predicated region
        $region81: #{tpu_custom_call.1} parent=71 // pred_check
          %p575 = pneg %p189
        $region82: #{tpu_custom_call.1} parent=71 // pred_check_branch
          %577 = sbr.rel (%p575) target = $region84
        $region83: #{tpu_custom_call.1} parent=71 // pred_region
          %578 = dma.done %s571, 4096
        $region84: #{tpu_custom_call.1} parent=71 // pred_fallthru
          _
        %s579 = sand.u32 %s34, 1
        %s580 = scalar_lea.sflag [#allocation10], %s579
        %s581 = sand.u32 %s280, 1
        %s582 = smul.addr %s581, 256
        %s583 = scalar_lea.vmem [#allocation11], %s582
        // Predicated region
        $region85: #{tpu_custom_call.1} parent=71 // pred_check
          %p584 = pneg %p293
        $region86: #{tpu_custom_call.1} parent=71 // pred_check_branch
          %586 = sbr.rel (%p584) target = $region88
        $region87: #{tpu_custom_call.1} parent=71 // pred_region
          %587 = dma.done %s580, 4096
        $region88: #{tpu_custom_call.1} parent=71 // pred_fallthru
          _
        %588 = sfence
        %p589 = pneg %p62
        %p590 = pneg %p59
        %p591 = pneg %p83
        %p592 = pneg %p80
        %s593 = smul.u32 2, %s39
        %p594 = scmp.lt.s32.totalorder %s593, 1
        %s595 = scalar_select %p594, %s593, 1
        %s596 = smul.addr %s595, 4
        %s597 = scalar_lea.vmem %s2, %s596
        %p598 = pneg %p109
        %p599 = pneg %p106
        %s600 = smul.u32 2, %s39
        %p601 = scmp.lt.s32.totalorder %s600, 1
        %s602 = scalar_select %p601, %s600, 1
        %s603 = smul.addr %s602, 4
        %s604 = scalar_lea.vmem %s3, %s603
        %p605 = pneg %p135
        %p606 = pneg %p132
        %s607 = sand.u32 %s150, 1
        %s608 = scalar_lea.sflag [#allocation5], %s607
        %s609 = sand.u32 %s150, 1
        %s610 = smul.addr %s609, 16
        %s611 = scalar_lea.vmem [#allocation8], %s610
        %p612 = pneg %p163
        %p613 = pneg %p160
        %s614 = sand.u32 %s34, 1
        %s615 = scalar_lea.sflag [#allocation10], %s614
        %s616 = sand.u32 %s176, 1
        %s617 = smul.addr %s616, 256
        %s618 = scalar_lea.vmem [#allocation9], %s617
        %p619 = pneg %p189
        %p620 = pneg %p186
        %p621 = scmp.lt.s32.totalorder %s38, 2
        %s622 = scalar_select %p621, %s38, 2
        %s623 = smul.addr %s622, 2
        %s624 = scalar_lea.vmem %s6, %s623
        %p625 = pneg %p215
        %p626 = pneg %p212
        %p627 = scmp.lt.s32.totalorder %s38, 2
        %s628 = scalar_select %p627, %s38, 2
        %s629 = smul.addr %s628, 2
        %s630 = scalar_lea.vmem %s7, %s629
        %p631 = pneg %p241
        %p632 = pneg %p238
        %p633 = scmp.lt.s32.totalorder %s38, 2
        %s634 = scalar_select %p633, %s38, 2
        %s635 = smul.addr %s634, 2
        %s636 = scalar_lea.vmem %s8, %s635
        %p637 = pneg %p267
        %p638 = pneg %p264
        %s639 = sand.u32 %s34, 1
        %s640 = scalar_lea.sflag [#allocation10], %s639
        %s641 = sand.u32 %s280, 1
        %s642 = smul.addr %s641, 256
        %s643 = scalar_lea.vmem [#allocation11], %s642
        %p644 = pneg %p293
        %p645 = pneg %p290
        %p646 = scmp.lt.s32.totalorder %s38, 2
        %s647 = scalar_select %p646, %s38, 2
        %s648 = scalar_lea.vmem %s10, %s647
        %p649 = pneg %p319
        %p650 = pneg %p316
        %p651 = scmp.lt.s32.totalorder %s38, 2
        %s652 = scalar_select %p651, %s38, 2
        %s653 = scalar_lea.vmem %s11, %s652
        %p654 = pneg %p345
        %p655 = pneg %p342
        %p656 = scmp.lt.s32.totalorder %s38, 2
        %s657 = scalar_select %p656, %s38, 2
        %s658 = scalar_lea.vmem %s12, %s657
        %p659 = pneg %p371
        %p660 = pneg %p368
        %p661 = pneg %p397
        %p662 = pneg %p394
        %s663 = sand.u32 %s384, 1
        %s664 = scalar_lea.sflag [#allocation6], %s663
        %s665 = sand.u32 %s384, 1
        %s666 = smul.addr %s665, 8
        %s667 = scalar_lea.vmem [#allocation12], %s666
        %s668 = smul.u32 2, %s39
        %p669 = scmp.lt.s32.totalorder %s668, 1
        %s670 = scalar_select %p669, %s668, 1
        %s671 = smul.addr %s670, 4
        %s672 = scalar_lea.vmem %s2, %s671
        %s673 = smul.u32 2, %s39
        %s674 = smul.u32 2, %s39
        %p675 = scmp.lt.s32.totalorder %s674, 1
        %s676 = scalar_select %p675, %s674, 1
        %s677 = smul.addr %s676, 4
        %s678 = scalar_lea.vmem %s3, %s677
        %s679 = smul.u32 2, %s39
        %s680 = smul.u32 2, %s39
        %p681 = scmp.lt.s32.totalorder %s38, 2
        %s682 = scalar_select %p681, %s38, 2
        %s683 = smul.addr %s682, 2
        %s684 = scalar_lea.vmem %s6, %s683
        %p685 = scmp.lt.s32.totalorder %s38, 2
        %s686 = scalar_select %p685, %s38, 2
        %s687 = smul.addr %s686, 2
        %s688 = scalar_lea.vmem %s7, %s687
        %p689 = scmp.lt.s32.totalorder %s38, 2
        %s690 = scalar_select %p689, %s38, 2
        %s691 = smul.addr %s690, 2
        %s692 = scalar_lea.vmem %s8, %s691
        %p693 = scmp.lt.s32.totalorder %s38, 2
        %s694 = scalar_select %p693, %s38, 2
        %s695 = scalar_lea.vmem %s10, %s694
        %p696 = scmp.lt.s32.totalorder %s38, 2
        %s697 = scalar_select %p696, %s38, 2
        %s698 = scalar_lea.vmem %s11, %s697
        %p699 = scmp.lt.s32.totalorder %s38, 2
        %s700 = scalar_select %p699, %s38, 2
        %s701 = scalar_lea.vmem %s12, %s700
        %p702 = scmp.eq.s32.totalorder %s38, 0
        %p703 = scmp.eq.s32.totalorder %s39, 0
        %p704 = pnand %p702, %p703
        %p705 = pneg %p704
        // Predicated region
        $region89: #{tpu_custom_call.1} parent=71 // pred_check
          _
        $region90: #{tpu_custom_call.1} parent=71 // pred_check_branch
          %707 = sbr.rel (%p704) target = $region92
        $region91: #{tpu_custom_call.1} parent=71 // pred_region
          %v708 = vld [vmem:[%s1] sm:$0xff]
          %709 = vst [vmem:[#allocation2] sm:$0xff] %v708
        $region92: #{tpu_custom_call.1} parent=71 // pred_fallthru
          _
        // Predicated region
        $region93: #{tpu_custom_call.1} parent=71 // pred_check
          %p710 = pneg %p703
        $region94: #{tpu_custom_call.1} parent=71 // pred_check_branch
          %712 = sbr.rel (%p710) target = $region96
        $region95: #{tpu_custom_call.1} parent=71 // pred_region
          %713 = vst [vmem:[#allocation3] sm:$0xff] 0.0
        $region96: #{tpu_custom_call.1} parent=71 // pred_fallthru
          _
        %v714 = vld [vmem:[#allocation2] sm:$0xff]
        %v715 = vld [vmem:[%s672] sm:$0xf]
        %v716 = vld [vmem:[%s672 + $0x4] sm:$0xf]
        %v717 = vunpack.c.l.bf16 %v715
        %v718 = vunpack.c.l.bf16 %v716
        %v719 = vld [vmem:[%s678] sm:$0xf]
        %v720 = vld [vmem:[%s678 + $0x4] sm:$0xf]
        %v721 = vunpack.c.l.bf16 %v719
        %v722 = vunpack.c.l.bf16 %v720
        %v723 = vld [vmem:[%s565] sm:$0xff]
        %v724 = vld [vmem:[%s565 + $0x8] sm:$0xff]
        %vm725 = vcmask 64512
        %v727 = vsel %vm725, %v717, 0
        %v730 = vsel %vm725, %v718, 0
        %732 = vmatprep.subr.mxu0 0.0
        %733 = vmatpush1.msra.mxu0 0.0
        %734 = vmatprep.subr.mxu0 0.0
        %735 = vmatpush1.msra.mxu0 0.0
        %736 = vmatprep.subr.mxu0 0.0
        %737 = vmatpush1.msra.mxu0 0.0
        %738 = vmatprep.subr.mxu0 0.0
        %739 = vmatpush1.msra.mxu0 0.0
        %740 = vmatprep.subr.mxu0 0.0
        %741 = vmatpush1.msra.mxu0 0.0
        %742 = vmatprep.subr.mxu0 0.0
        %743 = vmatpush1.msra.mxu0 0.0
        %744 = vmatprep.subr.mxu0 0.0
        %745 = vmatpush1.msra.mxu0 0.0
        %746 = vmatprep.subr.mxu0 0.0
        %747 = vmatpush1.msra.mxu0 0.0
        %748 = vmatprep.subr.mxu0 0.0
        %749 = vmatpush1.msra.mxu0 0.0
        %750 = vmatprep.subr.mxu0 0.0
        %751 = vmatpush1.msra.mxu0 0.0
        %752 = vmatprep.subr.mxu0 0.0
        %753 = vmatpush1.msra.mxu0 0.0
        %754 = vmatprep.subr.mxu0 0.0
        %755 = vmatpush1.msra.mxu0 0.0
        %756 = vmatprep.subr.mxu0 0.0
        %757 = vmatpush1.msra.mxu0 0.0
        %758 = vmatprep.subr.mxu0 0.0
        %759 = vmatpush1.msra.mxu0 0.0
        %760 = vmatprep.subr.mxu0 0.0
        %761 = vmatpush1.msra.mxu0 0.0
        %762 = vmatprep.subr.mxu0 0.0
        %v763 = vand.u32 %v714, 4294901760
        %764 = vmatpush1.msra.mxu0 %v763
        %765 = vmatprep.subr.mxu0 0.0
        %766 = vmatpush2.msra.mxu0 0.0
        %767 = vmatprep.subr.mxu0 0.0
        %768 = vmatpush2.msra.mxu0 0.0
        %769 = vmatprep.subr.mxu0 0.0
        %770 = vmatpush2.msra.mxu0 0.0
        %771 = vmatprep.subr.mxu0 0.0
        %772 = vmatpush2.msra.mxu0 0.0
        %773 = vmatprep.subr.mxu0 0.0
        %774 = vmatpush2.msra.mxu0 0.0
        %775 = vmatprep.subr.mxu0 0.0
        %776 = vmatpush2.msra.mxu0 0.0
        %777 = vmatprep.subr.mxu0 0.0
        %778 = vmatpush2.msra.mxu0 0.0
        %779 = vmatprep.subr.mxu0 0.0
        %780 = vmatpush2.msra.mxu0 0.0
        %781 = vmatprep.subr.mxu0 0.0
        %782 = vmatpush2.msra.mxu0 0.0
        %783 = vmatprep.subr.mxu0 0.0
        %784 = vmatpush2.msra.mxu0 0.0
        %785 = vmatprep.subr.mxu0 0.0
        %786 = vmatpush2.msra.mxu0 0.0
        %787 = vmatprep.subr.mxu0 0.0
        %788 = vmatpush2.msra.mxu0 0.0
        %789 = vmatprep.subr.mxu0 0.0
        %790 = vmatpush2.msra.mxu0 0.0
        %791 = vmatprep.subr.mxu0 0.0
        %792 = vmatpush2.msra.mxu0 0.0
        %793 = vmatprep.subr.mxu0 0.0
        %794 = vmatpush2.msra.mxu0 0.0
        %795 = vmatprep.subr.mxu0 0.0
        %796 = vmatpush2.msra.mxu0 0.0
        %797 = vmatprep.mubr.f32.mxu0 0.0
        %v798 = vand.u32 %v727, 4294901760
        %v799 = vsub.f32 %v727, %v798
        %v800 = vand.u32 %v799, 4294901760
        %v801 = vsub.f32 %v799, %v800
        %v802 = vand.u32 %v801, 4294901760
        %803 = vmatmul.mubr.f32.gmra.mxu0 %v802
        %v804 = vpop.f32.mrf.mxu0
        %v805 = vadd.f32 %v723, %v804
        %v806 = vpop.f32.mrf.mxu0
        %807 = vmatprep.mubr.f32.mxu0 0.0
        %v808 = vand.u32 %v730, 4294901760
        %v809 = vsub.f32 %v730, %v808
        %v810 = vand.u32 %v809, 4294901760
        %v811 = vsub.f32 %v809, %v810
        %v812 = vand.u32 %v811, 4294901760
        %813 = vmatmul.mubr.f32.gmra.mxu0 %v812
        %v814 = vpop.f32.mrf.mxu0
        %v815 = vadd.f32 %v724, %v814
        %v816 = vpop.f32.mrf.mxu0
        %817 = vdwg.mxu0
        %818 = vmatprep.subr.mxu0 0.0
        %819 = vmatpush1.msra.mxu0 0.0
        %820 = vmatprep.subr.mxu0 0.0
        %821 = vmatpush1.msra.mxu0 0.0
        %822 = vmatprep.subr.mxu0 0.0
        %823 = vmatpush1.msra.mxu0 0.0
        %824 = vmatprep.subr.mxu0 0.0
        %825 = vmatpush1.msra.mxu0 0.0
        %826 = vmatprep.subr.mxu0 0.0
        %827 = vmatpush1.msra.mxu0 0.0
        %828 = vmatprep.subr.mxu0 0.0
        %829 = vmatpush1.msra.mxu0 0.0
        %830 = vmatprep.subr.mxu0 0.0
        %831 = vmatpush1.msra.mxu0 0.0
        %832 = vmatprep.subr.mxu0 0.0
        %833 = vmatpush1.msra.mxu0 0.0
        %834 = vmatprep.subr.mxu0 0.0
        %835 = vmatpush1.msra.mxu0 0.0
        %836 = vmatprep.subr.mxu0 0.0
        %837 = vmatpush1.msra.mxu0 0.0
        %838 = vmatprep.subr.mxu0 0.0
        %839 = vmatpush1.msra.mxu0 0.0
        %840 = vmatprep.subr.mxu0 0.0
        %841 = vmatpush1.msra.mxu0 0.0
        %842 = vmatprep.subr.mxu0 0.0
        %843 = vmatpush1.msra.mxu0 0.0
        %844 = vmatprep.subr.mxu0 0.0
        %845 = vmatpush1.msra.mxu0 0.0
        %846 = vmatprep.subr.mxu0 0.0
        %847 = vmatpush1.msra.mxu0 0.0
        %848 = vmatprep.subr.mxu0 0.0
        %v849 = vand.u32 %v714, 4294901760
        %v850 = vsub.f32 %v714, %v849
        %v851 = vand.u32 %v850, 4294901760
        %v852 = vsub.f32 %v850, %v851
        %v853 = vand.u32 %v852, 4294901760
        %854 = vmatpush1.msra.mxu0 %v853
        %855 = vmatprep.subr.mxu0 0.0
        %856 = vmatpush2.msra.mxu0 0.0
        %857 = vmatprep.subr.mxu0 0.0
        %858 = vmatpush2.msra.mxu0 0.0
        %859 = vmatprep.subr.mxu0 0.0
        %860 = vmatpush2.msra.mxu0 0.0
        %861 = vmatprep.subr.mxu0 0.0
        %862 = vmatpush2.msra.mxu0 0.0
        %863 = vmatprep.subr.mxu0 0.0
        %864 = vmatpush2.msra.mxu0 0.0
        %865 = vmatprep.subr.mxu0 0.0
        %866 = vmatpush2.msra.mxu0 0.0
        %867 = vmatprep.subr.mxu0 0.0
        %868 = vmatpush2.msra.mxu0 0.0
        %869 = vmatprep.subr.mxu0 0.0
        %870 = vmatpush2.msra.mxu0 0.0
        %871 = vmatprep.subr.mxu0 0.0
        %872 = vmatpush2.msra.mxu0 0.0
        %873 = vmatprep.subr.mxu0 0.0
        %874 = vmatpush2.msra.mxu0 0.0
        %875 = vmatprep.subr.mxu0 0.0
        %876 = vmatpush2.msra.mxu0 0.0
        %877 = vmatprep.subr.mxu0 0.0
        %878 = vmatpush2.msra.mxu0 0.0
        %879 = vmatprep.subr.mxu0 0.0
        %880 = vmatpush2.msra.mxu0 0.0
        %881 = vmatprep.subr.mxu0 0.0
        %882 = vmatpush2.msra.mxu0 0.0
        %883 = vmatprep.subr.mxu0 0.0
        %884 = vmatpush2.msra.mxu0 0.0
        %885 = vmatprep.subr.mxu0 0.0
        %886 = vmatpush2.msra.mxu0 0.0
        %887 = vmatprep.mubr.f32.mxu0 0.0
        %v888 = vand.u32 %v727, 4294901760
        %889 = vmatmul.mubr.f32.gmra.mxu0 %v888
        %v890 = vpop.f32.mrf.mxu0
        %v891 = vadd.f32 %v805, %v890
        %v892 = vpop.f32.mrf.mxu0
        %893 = vmatprep.mubr.f32.mxu0 0.0
        %v894 = vand.u32 %v730, 4294901760
        %895 = vmatmul.mubr.f32.gmra.mxu0 %v894
        %v896 = vpop.f32.mrf.mxu0
        %v897 = vadd.f32 %v815, %v896
        %v898 = vpop.f32.mrf.mxu0
        %899 = vdwg.mxu0
        %900 = vmatprep.subr.mxu0 0.0
        %901 = vmatpush1.msra.mxu0 0.0
        %902 = vmatprep.subr.mxu0 0.0
        %903 = vmatpush1.msra.mxu0 0.0
        %904 = vmatprep.subr.mxu0 0.0
        %905 = vmatpush1.msra.mxu0 0.0
        %906 = vmatprep.subr.mxu0 0.0
        %907 = vmatpush1.msra.mxu0 0.0
        %908 = vmatprep.subr.mxu0 0.0
        %909 = vmatpush1.msra.mxu0 0.0
        %910 = vmatprep.subr.mxu0 0.0
        %911 = vmatpush1.msra.mxu0 0.0
        %912 = vmatprep.subr.mxu0 0.0
        %913 = vmatpush1.msra.mxu0 0.0
        %914 = vmatprep.subr.mxu0 0.0
        %915 = vmatpush1.msra.mxu0 0.0
        %916 = vmatprep.subr.mxu0 0.0
        %917 = vmatpush1.msra.mxu0 0.0
        %918 = vmatprep.subr.mxu0 0.0
        %919 = vmatpush1.msra.mxu0 0.0
        %920 = vmatprep.subr.mxu0 0.0
        %921 = vmatpush1.msra.mxu0 0.0
        %922 = vmatprep.subr.mxu0 0.0
        %923 = vmatpush1.msra.mxu0 0.0
        %924 = vmatprep.subr.mxu0 0.0
        %925 = vmatpush1.msra.mxu0 0.0
        %926 = vmatprep.subr.mxu0 0.0
        %927 = vmatpush1.msra.mxu0 0.0
        %928 = vmatprep.subr.mxu0 0.0
        %929 = vmatpush1.msra.mxu0 0.0
        %930 = vmatprep.subr.mxu0 0.0
        %v931 = vand.u32 %v714, 4294901760
        %v932 = vsub.f32 %v714, %v931
        %933 = vmatpush1.msra.mxu0 %v932
        %934 = vmatprep.subr.mxu0 0.0
        %935 = vmatpush2.msra.mxu0 0.0
        %936 = vmatprep.subr.mxu0 0.0
        %937 = vmatpush2.msra.mxu0 0.0
        %938 = vmatprep.subr.mxu0 0.0
        %939 = vmatpush2.msra.mxu0 0.0
        %940 = vmatprep.subr.mxu0 0.0
        %941 = vmatpush2.msra.mxu0 0.0
        %942 = vmatprep.subr.mxu0 0.0
        %943 = vmatpush2.msra.mxu0 0.0
        %944 = vmatprep.subr.mxu0 0.0
        %945 = vmatpush2.msra.mxu0 0.0
        %946 = vmatprep.subr.mxu0 0.0
        %947 = vmatpush2.msra.mxu0 0.0
        %948 = vmatprep.subr.mxu0 0.0
        %949 = vmatpush2.msra.mxu0 0.0
        %950 = vmatprep.subr.mxu0 0.0
        %951 = vmatpush2.msra.mxu0 0.0
        %952 = vmatprep.subr.mxu0 0.0
        %953 = vmatpush2.msra.mxu0 0.0
        %954 = vmatprep.subr.mxu0 0.0
        %955 = vmatpush2.msra.mxu0 0.0
        %956 = vmatprep.subr.mxu0 0.0
        %957 = vmatpush2.msra.mxu0 0.0
        %958 = vmatprep.subr.mxu0 0.0
        %959 = vmatpush2.msra.mxu0 0.0
        %960 = vmatprep.subr.mxu0 0.0
        %961 = vmatpush2.msra.mxu0 0.0
        %962 = vmatprep.subr.mxu0 0.0
        %963 = vmatpush2.msra.mxu0 0.0
        %964 = vmatprep.subr.mxu0 0.0
        %965 = vmatpush2.msra.mxu0 0.0
        %966 = vmatprep.mubr.f32.mxu0 0.0
        %v967 = vand.u32 %v727, 4294901760
        %v968 = vsub.f32 %v727, %v967
        %969 = vmatmul.mubr.f32.gmra.mxu0 %v968
        %v970 = vpop.f32.mrf.mxu0
        %v971 = vadd.f32 %v891, %v970
        %v972 = vpop.f32.mrf.mxu0
        %973 = vmatprep.mubr.f32.mxu0 0.0
        %v974 = vand.u32 %v730, 4294901760
        %v975 = vsub.f32 %v730, %v974
        %976 = vmatmul.mubr.f32.gmra.mxu0 %v975
        %v977 = vpop.f32.mrf.mxu0
        %v978 = vadd.f32 %v897, %v977
        %v979 = vpop.f32.mrf.mxu0
        %980 = vdwg.mxu0
        %981 = vmatprep.subr.mxu0 0.0
        %982 = vmatpush1.msra.mxu0 0.0
        %983 = vmatprep.subr.mxu0 0.0
        %984 = vmatpush1.msra.mxu0 0.0
        %985 = vmatprep.subr.mxu0 0.0
        %986 = vmatpush1.msra.mxu0 0.0
        %987 = vmatprep.subr.mxu0 0.0
        %988 = vmatpush1.msra.mxu0 0.0
        %989 = vmatprep.subr.mxu0 0.0
        %990 = vmatpush1.msra.mxu0 0.0
        %991 = vmatprep.subr.mxu0 0.0
        %992 = vmatpush1.msra.mxu0 0.0
        %993 = vmatprep.subr.mxu0 0.0
        %994 = vmatpush1.msra.mxu0 0.0
        %995 = vmatprep.subr.mxu0 0.0
        %996 = vmatpush1.msra.mxu0 0.0
        %997 = vmatprep.subr.mxu0 0.0
        %998 = vmatpush1.msra.mxu0 0.0
        %999 = vmatprep.subr.mxu0 0.0
        %1000 = vmatpush1.msra.mxu0 0.0
        %1001 = vmatprep.subr.mxu0 0.0
        %1002 = vmatpush1.msra.mxu0 0.0
        %1003 = vmatprep.subr.mxu0 0.0
        %1004 = vmatpush1.msra.mxu0 0.0
        %1005 = vmatprep.subr.mxu0 0.0
        %1006 = vmatpush1.msra.mxu0 0.0
        %1007 = vmatprep.subr.mxu0 0.0
        %1008 = vmatpush1.msra.mxu0 0.0
        %1009 = vmatprep.subr.mxu0 0.0
        %1010 = vmatpush1.msra.mxu0 0.0
        %1011 = vmatprep.subr.mxu0 0.0
        %v1012 = vand.u32 %v714, 4294901760
        %1013 = vmatpush1.msra.mxu0 %v1012
        %1014 = vmatprep.subr.mxu0 0.0
        %1015 = vmatpush2.msra.mxu0 0.0
        %1016 = vmatprep.subr.mxu0 0.0
        %1017 = vmatpush2.msra.mxu0 0.0
        %1018 = vmatprep.subr.mxu0 0.0
        %1019 = vmatpush2.msra.mxu0 0.0
        %1020 = vmatprep.subr.mxu0 0.0
        %1021 = vmatpush2.msra.mxu0 0.0
        %1022 = vmatprep.subr.mxu0 0.0
        %1023 = vmatpush2.msra.mxu0 0.0
        %1024 = vmatprep.subr.mxu0 0.0
        %1025 = vmatpush2.msra.mxu0 0.0
        %1026 = vmatprep.subr.mxu0 0.0
        %1027 = vmatpush2.msra.mxu0 0.0
        %1028 = vmatprep.subr.mxu0 0.0
        %1029 = vmatpush2.msra.mxu0 0.0
        %1030 = vmatprep.subr.mxu0 0.0
        %1031 = vmatpush2.msra.mxu0 0.0
        %1032 = vmatprep.subr.mxu0 0.0
        %1033 = vmatpush2.msra.mxu0 0.0
        %1034 = vmatprep.subr.mxu0 0.0
        %1035 = vmatpush2.msra.mxu0 0.0
        %1036 = vmatprep.subr.mxu0 0.0
        %1037 = vmatpush2.msra.mxu0 0.0
        %1038 = vmatprep.subr.mxu0 0.0
        %1039 = vmatpush2.msra.mxu0 0.0
        %1040 = vmatprep.subr.mxu0 0.0
        %1041 = vmatpush2.msra.mxu0 0.0
        %1042 = vmatprep.subr.mxu0 0.0
        %1043 = vmatpush2.msra.mxu0 0.0
        %1044 = vmatprep.subr.mxu0 0.0
        %1045 = vmatpush2.msra.mxu0 0.0
        %1046 = vmatprep.mubr.f32.mxu0 0.0
        %v1047 = vand.u32 %v727, 4294901760
        %v1048 = vsub.f32 %v727, %v1047
        %v1049 = vand.u32 %v1048, 4294901760
        %1050 = vmatmul.mubr.f32.gmra.mxu0 %v1049
        %v1051 = vpop.f32.mrf.mxu0
        %v1052 = vadd.f32 %v971, %v1051
        %v1053 = vpop.f32.mrf.mxu0
        %1054 = vmatprep.mubr.f32.mxu0 0.0
        %v1055 = vand.u32 %v730, 4294901760
        %v1056 = vsub.f32 %v730, %v1055
        %v1057 = vand.u32 %v1056, 4294901760
        %1058 = vmatmul.mubr.f32.gmra.mxu0 %v1057
        %v1059 = vpop.f32.mrf.mxu0
        %v1060 = vadd.f32 %v978, %v1059
        %v1061 = vpop.f32.mrf.mxu0
        %1062 = vdwg.mxu0
        %1063 = vmatprep.subr.mxu0 0.0
        %1064 = vmatpush1.msra.mxu0 0.0
        %1065 = vmatprep.subr.mxu0 0.0
        %1066 = vmatpush1.msra.mxu0 0.0
        %1067 = vmatprep.subr.mxu0 0.0
        %1068 = vmatpush1.msra.mxu0 0.0
        %1069 = vmatprep.subr.mxu0 0.0
        %1070 = vmatpush1.msra.mxu0 0.0
        %1071 = vmatprep.subr.mxu0 0.0
        %1072 = vmatpush1.msra.mxu0 0.0
        %1073 = vmatprep.subr.mxu0 0.0
        %1074 = vmatpush1.msra.mxu0 0.0
        %1075 = vmatprep.subr.mxu0 0.0
        %1076 = vmatpush1.msra.mxu0 0.0
        %1077 = vmatprep.subr.mxu0 0.0
        %1078 = vmatpush1.msra.mxu0 0.0
        %1079 = vmatprep.subr.mxu0 0.0
        %1080 = vmatpush1.msra.mxu0 0.0
        %1081 = vmatprep.subr.mxu0 0.0
        %1082 = vmatpush1.msra.mxu0 0.0
        %1083 = vmatprep.subr.mxu0 0.0
        %1084 = vmatpush1.msra.mxu0 0.0
        %1085 = vmatprep.subr.mxu0 0.0
        %1086 = vmatpush1.msra.mxu0 0.0
        %1087 = vmatprep.subr.mxu0 0.0
        %1088 = vmatpush1.msra.mxu0 0.0
        %1089 = vmatprep.subr.mxu0 0.0
        %1090 = vmatpush1.msra.mxu0 0.0
        %1091 = vmatprep.subr.mxu0 0.0
        %1092 = vmatpush1.msra.mxu0 0.0
        %1093 = vmatprep.subr.mxu0 0.0
        %v1094 = vand.u32 %v714, 4294901760
        %v1095 = vsub.f32 %v714, %v1094
        %v1096 = vand.u32 %v1095, 4294901760
        %1097 = vmatpush1.msra.mxu0 %v1096
        %1098 = vmatprep.subr.mxu0 0.0
        %1099 = vmatpush2.msra.mxu0 0.0
        %1100 = vmatprep.subr.mxu0 0.0
        %1101 = vmatpush2.msra.mxu0 0.0
        %1102 = vmatprep.subr.mxu0 0.0
        %1103 = vmatpush2.msra.mxu0 0.0
        %1104 = vmatprep.subr.mxu0 0.0
        %1105 = vmatpush2.msra.mxu0 0.0
        %1106 = vmatprep.subr.mxu0 0.0
        %1107 = vmatpush2.msra.mxu0 0.0
        %1108 = vmatprep.subr.mxu0 0.0
        %1109 = vmatpush2.msra.mxu0 0.0
        %1110 = vmatprep.subr.mxu0 0.0
        %1111 = vmatpush2.msra.mxu0 0.0
        %1112 = vmatprep.subr.mxu0 0.0
        %1113 = vmatpush2.msra.mxu0 0.0
        %1114 = vmatprep.subr.mxu0 0.0
        %1115 = vmatpush2.msra.mxu0 0.0
        %1116 = vmatprep.subr.mxu0 0.0
        %1117 = vmatpush2.msra.mxu0 0.0
        %1118 = vmatprep.subr.mxu0 0.0
        %1119 = vmatpush2.msra.mxu0 0.0
        %1120 = vmatprep.subr.mxu0 0.0
        %1121 = vmatpush2.msra.mxu0 0.0
        %1122 = vmatprep.subr.mxu0 0.0
        %1123 = vmatpush2.msra.mxu0 0.0
        %1124 = vmatprep.subr.mxu0 0.0
        %1125 = vmatpush2.msra.mxu0 0.0
        %1126 = vmatprep.subr.mxu0 0.0
        %1127 = vmatpush2.msra.mxu0 0.0
        %1128 = vmatprep.subr.mxu0 0.0
        %1129 = vmatpush2.msra.mxu0 0.0
        %1130 = vmatprep.mubr.f32.mxu0 0.0
        %v1131 = vand.u32 %v727, 4294901760
        %1132 = vmatmul.mubr.f32.gmra.mxu0 %v1131
        %v1133 = vpop.f32.mrf.mxu0
        %v1134 = vadd.f32 %v1052, %v1133
        %v1135 = vpop.f32.mrf.mxu0
        %1136 = vmatprep.mubr.f32.mxu0 0.0
        %v1137 = vand.u32 %v730, 4294901760
        %1138 = vmatmul.mubr.f32.gmra.mxu0 %v1137
        %v1139 = vpop.f32.mrf.mxu0
        %v1140 = vadd.f32 %v1060, %v1139
        %v1141 = vpop.f32.mrf.mxu0
        %1142 = vdwg.mxu0
        %1143 = vmatprep.subr.mxu0 0.0
        %1144 = vmatpush1.msra.mxu0 0.0
        %1145 = vmatprep.subr.mxu0 0.0
        %1146 = vmatpush1.msra.mxu0 0.0
        %1147 = vmatprep.subr.mxu0 0.0
        %1148 = vmatpush1.msra.mxu0 0.0
        %1149 = vmatprep.subr.mxu0 0.0
        %1150 = vmatpush1.msra.mxu0 0.0
        %1151 = vmatprep.subr.mxu0 0.0
        %1152 = vmatpush1.msra.mxu0 0.0
        %1153 = vmatprep.subr.mxu0 0.0
        %1154 = vmatpush1.msra.mxu0 0.0
        %1155 = vmatprep.subr.mxu0 0.0
        %1156 = vmatpush1.msra.mxu0 0.0
        %1157 = vmatprep.subr.mxu0 0.0
        %1158 = vmatpush1.msra.mxu0 0.0
        %1159 = vmatprep.subr.mxu0 0.0
        %1160 = vmatpush1.msra.mxu0 0.0
        %1161 = vmatprep.subr.mxu0 0.0
        %1162 = vmatpush1.msra.mxu0 0.0
        %1163 = vmatprep.subr.mxu0 0.0
        %1164 = vmatpush1.msra.mxu0 0.0
        %1165 = vmatprep.subr.mxu0 0.0
        %1166 = vmatpush1.msra.mxu0 0.0
        %1167 = vmatprep.subr.mxu0 0.0
        %1168 = vmatpush1.msra.mxu0 0.0
        %1169 = vmatprep.subr.mxu0 0.0
        %1170 = vmatpush1.msra.mxu0 0.0
        %1171 = vmatprep.subr.mxu0 0.0
        %1172 = vmatpush1.msra.mxu0 0.0
        %1173 = vmatprep.subr.mxu0 0.0
        %v1174 = vand.u32 %v714, 4294901760
        %1175 = vmatpush1.msra.mxu0 %v1174
        %1176 = vmatprep.subr.mxu0 0.0
        %1177 = vmatpush2.msra.mxu0 0.0
        %1178 = vmatprep.subr.mxu0 0.0
        %1179 = vmatpush2.msra.mxu0 0.0
        %1180 = vmatprep.subr.mxu0 0.0
        %1181 = vmatpush2.msra.mxu0 0.0
        %1182 = vmatprep.subr.mxu0 0.0
        %1183 = vmatpush2.msra.mxu0 0.0
        %1184 = vmatprep.subr.mxu0 0.0
        %1185 = vmatpush2.msra.mxu0 0.0
        %1186 = vmatprep.subr.mxu0 0.0
        %1187 = vmatpush2.msra.mxu0 0.0
        %1188 = vmatprep.subr.mxu0 0.0
        %1189 = vmatpush2.msra.mxu0 0.0
        %1190 = vmatprep.subr.mxu0 0.0
        %1191 = vmatpush2.msra.mxu0 0.0
        %1192 = vmatprep.subr.mxu0 0.0
        %1193 = vmatpush2.msra.mxu0 0.0
        %1194 = vmatprep.subr.mxu0 0.0
        %1195 = vmatpush2.msra.mxu0 0.0
        %1196 = vmatprep.subr.mxu0 0.0
        %1197 = vmatpush2.msra.mxu0 0.0
        %1198 = vmatprep.subr.mxu0 0.0
        %1199 = vmatpush2.msra.mxu0 0.0
        %1200 = vmatprep.subr.mxu0 0.0
        %1201 = vmatpush2.msra.mxu0 0.0
        %1202 = vmatprep.subr.mxu0 0.0
        %1203 = vmatpush2.msra.mxu0 0.0
        %1204 = vmatprep.subr.mxu0 0.0
        %1205 = vmatpush2.msra.mxu0 0.0
        %1206 = vmatprep.subr.mxu0 0.0
        %1207 = vmatpush2.msra.mxu0 0.0
        %1208 = vmatprep.mubr.f32.mxu0 0.0
        %v1209 = vand.u32 %v727, 4294901760
        %1210 = vmatmul.mubr.f32.gmra.mxu0 %v1209
        %v1211 = vpop.f32.mrf.mxu0
        %v1212 = vadd.f32 %v1134, %v1211
        %v1213 = vpop.f32.mrf.mxu0
        %1214 = vmatprep.mubr.f32.mxu0 0.0
        %v1215 = vand.u32 %v730, 4294901760
        %1216 = vmatmul.mubr.f32.gmra.mxu0 %v1215
        %v1217 = vpop.f32.mrf.mxu0
        %v1218 = vadd.f32 %v1140, %v1217
        %v1219 = vpop.f32.mrf.mxu0
        %1220 = vdwg.mxu0
        %v1221 = vmax.f32 %v1212, 0.0
        %v1222 = vmax.f32 %v1218, 0.0
        %v1223 = vld [vmem:[#allocation3] sm:$0xff]
        %1224 = vxpose.xlu0.b32.start [1/16] %v721, 128
        %1225 = vxpose.xlu0.b32.cont [2/16] %v722, 128
        %1226 = vxpose.xlu0.b32.cont [3/16] 0.0, 128
        %1227 = vxpose.xlu0.b32.cont [4/16] 0.0, 128
        %1228 = vxpose.xlu0.b32.cont [5/16] 0.0, 128
        %1229 = vxpose.xlu0.b32.cont [6/16] 0.0, 128
        %1230 = vxpose.xlu0.b32.cont [7/16] 0.0, 128
        %1231 = vxpose.xlu0.b32.cont [8/16] 0.0, 128
        %1232 = vxpose.xlu0.b32.cont [9/16] 0.0, 128
        %1233 = vxpose.xlu0.b32.cont [10/16] 0.0, 128
        %1234 = vxpose.xlu0.b32.cont [11/16] 0.0, 128
        %1235 = vxpose.xlu0.b32.cont [12/16] 0.0, 128
        %1236 = vxpose.xlu0.b32.cont [13/16] 0.0, 128
        %1237 = vxpose.xlu0.b32.cont [14/16] 0.0, 128
        %1238 = vxpose.xlu0.b32.cont [15/16] 0.0, 128
        %1239 = vxpose.xlu0.b32.end [16/16] 0.0, 128
        %v1240 = vpop.trf.xlu0
        %v1241 = vpop.trf.xlu0
        %v1242 = vpop.trf.xlu0
        %v1243 = vpop.trf.xlu0
        %v1244 = vpop.trf.xlu0
        %v1245 = vpop.trf.xlu0
        %v1246 = vpop.trf.xlu0
        %v1247 = vpop.trf.xlu0
        %v1248 = vpop.trf.xlu0
        %v1249 = vpop.trf.xlu0
        %v1250 = vpop.trf.xlu0
        %v1251 = vpop.trf.xlu0
        %v1252 = vpop.trf.xlu0
        %v1253 = vpop.trf.xlu0
        %v1254 = vpop.trf.xlu0
        %v1255 = vpop.trf.xlu0
        %vm1256 = vcmask 130048
        %v1258 = vsel %vm1256, %v1240, 0
        %1260 = vmatprep.subr.mxu0 0.0
        %1261 = vmatpush1.msra.mxu0 0.0
        %1262 = vmatprep.subr.mxu0 0.0
        %1263 = vmatpush1.msra.mxu0 0.0
        %1264 = vmatprep.subr.mxu0 0.0
        %1265 = vmatpush1.msra.mxu0 0.0
        %1266 = vmatprep.subr.mxu0 0.0
        %1267 = vmatpush1.msra.mxu0 0.0
        %1268 = vmatprep.subr.mxu0 0.0
        %1269 = vmatpush1.msra.mxu0 0.0
        %1270 = vmatprep.subr.mxu0 0.0
        %1271 = vmatpush1.msra.mxu0 0.0
        %1272 = vmatprep.subr.mxu0 0.0
        %1273 = vmatpush1.msra.mxu0 0.0
        %1274 = vmatprep.subr.mxu0 0.0
        %1275 = vmatpush1.msra.mxu0 0.0
        %1276 = vmatprep.subr.mxu0 0.0
        %1277 = vmatpush1.msra.mxu0 0.0
        %1278 = vmatprep.subr.mxu0 0.0
        %1279 = vmatpush1.msra.mxu0 0.0
        %1280 = vmatprep.subr.mxu0 0.0
        %1281 = vmatpush1.msra.mxu0 0.0
        %1282 = vmatprep.subr.mxu0 0.0
        %1283 = vmatpush1.msra.mxu0 0.0
        %1284 = vmatprep.subr.mxu0 0.0
        %1285 = vmatpush1.msra.mxu0 0.0
        %1286 = vmatprep.subr.mxu0 0.0
        %1287 = vmatpush1.msra.mxu0 0.0
        %1288 = vmatprep.subr.mxu0 0.0
        %v1289 = vand.u32 %v1222, 4294901760
        %1290 = vmatpush1.msra.mxu0 %v1289
        %1291 = vmatprep.subr.mxu0 0.0
        %v1292 = vand.u32 %v1221, 4294901760
        %1293 = vmatpush1.msra.mxu0 %v1292
        %1294 = vmatprep.subr.mxu0 0.0
        %1295 = vmatpush2.msra.mxu0 0.0
        %1296 = vmatprep.subr.mxu0 0.0
        %1297 = vmatpush2.msra.mxu0 0.0
        %1298 = vmatprep.subr.mxu0 0.0
        %1299 = vmatpush2.msra.mxu0 0.0
        %1300 = vmatprep.subr.mxu0 0.0
        %1301 = vmatpush2.msra.mxu0 0.0
        %1302 = vmatprep.subr.mxu0 0.0
        %1303 = vmatpush2.msra.mxu0 0.0
        %1304 = vmatprep.subr.mxu0 0.0
        %1305 = vmatpush2.msra.mxu0 0.0
        %1306 = vmatprep.subr.mxu0 0.0
        %1307 = vmatpush2.msra.mxu0 0.0
        %1308 = vmatprep.subr.mxu0 0.0
        %1309 = vmatpush2.msra.mxu0 0.0
        %1310 = vmatprep.subr.mxu0 0.0
        %1311 = vmatpush2.msra.mxu0 0.0
        %1312 = vmatprep.subr.mxu0 0.0
        %1313 = vmatpush2.msra.mxu0 0.0
        %1314 = vmatprep.subr.mxu0 0.0
        %1315 = vmatpush2.msra.mxu0 0.0
        %1316 = vmatprep.subr.mxu0 0.0
        %1317 = vmatpush2.msra.mxu0 0.0
        %1318 = vmatprep.subr.mxu0 0.0
        %1319 = vmatpush2.msra.mxu0 0.0
        %1320 = vmatprep.subr.mxu0 0.0
        %1321 = vmatpush2.msra.mxu0 0.0
        %1322 = vmatprep.subr.mxu0 0.0
        %1323 = vmatpush2.msra.mxu0 0.0
        %1324 = vmatprep.subr.mxu0 0.0
        %1325 = vmatpush2.msra.mxu0 0.0
        %1326 = vmatprep.mubr.f32.mxu0 0.0
        %v1327 = vand.u32 %v1258, 4294901760
        %v1328 = vsub.f32 %v1258, %v1327
        %v1329 = vand.u32 %v1328, 4294901760
        %v1330 = vsub.f32 %v1328, %v1329
        %v1331 = vand.u32 %v1330, 4294901760
        %1332 = vmatmul.mubr.f32.gmra.mxu0 %v1331
        %v1333 = vpop.f32.mrf.mxu0
        %v1334 = vadd.f32 0.0, %v1333
        %v1335 = vpop.f32.mrf.mxu0
        %1336 = vdwg.mxu0
        %1337 = vmatprep.subr.mxu0 0.0
        %1338 = vmatpush1.msra.mxu0 0.0
        %1339 = vmatprep.subr.mxu0 0.0
        %1340 = vmatpush1.msra.mxu0 0.0
        %1341 = vmatprep.subr.mxu0 0.0
        %1342 = vmatpush1.msra.mxu0 0.0
        %1343 = vmatprep.subr.mxu0 0.0
        %1344 = vmatpush1.msra.mxu0 0.0
        %1345 = vmatprep.subr.mxu0 0.0
        %1346 = vmatpush1.msra.mxu0 0.0
        %1347 = vmatprep.subr.mxu0 0.0
        %1348 = vmatpush1.msra.mxu0 0.0
        %1349 = vmatprep.subr.mxu0 0.0
        %1350 = vmatpush1.msra.mxu0 0.0
        %1351 = vmatprep.subr.mxu0 0.0
        %1352 = vmatpush1.msra.mxu0 0.0
        %1353 = vmatprep.subr.mxu0 0.0
        %1354 = vmatpush1.msra.mxu0 0.0
        %1355 = vmatprep.subr.mxu0 0.0
        %1356 = vmatpush1.msra.mxu0 0.0
        %1357 = vmatprep.subr.mxu0 0.0
        %1358 = vmatpush1.msra.mxu0 0.0
        %1359 = vmatprep.subr.mxu0 0.0
        %1360 = vmatpush1.msra.mxu0 0.0
        %1361 = vmatprep.subr.mxu0 0.0
        %1362 = vmatpush1.msra.mxu0 0.0
        %1363 = vmatprep.subr.mxu0 0.0
        %1364 = vmatpush1.msra.mxu0 0.0
        %1365 = vmatprep.subr.mxu0 0.0
        %v1366 = vand.u32 %v1222, 4294901760
        %v1367 = vsub.f32 %v1222, %v1366
        %v1368 = vand.u32 %v1367, 4294901760
        %v1369 = vsub.f32 %v1367, %v1368
        %v1370 = vand.u32 %v1369, 4294901760
        %1371 = vmatpush1.msra.mxu0 %v1370
        %1372 = vmatprep.subr.mxu0 0.0
        %v1373 = vand.u32 %v1221, 4294901760
        %v1374 = vsub.f32 %v1221, %v1373
        %v1375 = vand.u32 %v1374, 4294901760
        %v1376 = vsub.f32 %v1374, %v1375
        %v1377 = vand.u32 %v1376, 4294901760
        %1378 = vmatpush1.msra.mxu0 %v1377
        %1379 = vmatprep.subr.mxu0 0.0
        %1380 = vmatpush2.msra.mxu0 0.0
        %1381 = vmatprep.subr.mxu0 0.0
        %1382 = vmatpush2.msra.mxu0 0.0
        %1383 = vmatprep.subr.mxu0 0.0
        %1384 = vmatpush2.msra.mxu0 0.0
        %1385 = vmatprep.subr.mxu0 0.0
        %1386 = vmatpush2.msra.mxu0 0.0
        %1387 = vmatprep.subr.mxu0 0.0
        %1388 = vmatpush2.msra.mxu0 0.0
        %1389 = vmatprep.subr.mxu0 0.0
        %1390 = vmatpush2.msra.mxu0 0.0
        %1391 = vmatprep.subr.mxu0 0.0
        %1392 = vmatpush2.msra.mxu0 0.0
        %1393 = vmatprep.subr.mxu0 0.0
        %1394 = vmatpush2.msra.mxu0 0.0
        %1395 = vmatprep.subr.mxu0 0.0
        %1396 = vmatpush2.msra.mxu0 0.0
        %1397 = vmatprep.subr.mxu0 0.0
        %1398 = vmatpush2.msra.mxu0 0.0
        %1399 = vmatprep.subr.mxu0 0.0
        %1400 = vmatpush2.msra.mxu0 0.0
        %1401 = vmatprep.subr.mxu0 0.0
        %1402 = vmatpush2.msra.mxu0 0.0
        %1403 = vmatprep.subr.mxu0 0.0
        %1404 = vmatpush2.msra.mxu0 0.0
        %1405 = vmatprep.subr.mxu0 0.0
        %1406 = vmatpush2.msra.mxu0 0.0
        %1407 = vmatprep.subr.mxu0 0.0
        %1408 = vmatpush2.msra.mxu0 0.0
        %1409 = vmatprep.subr.mxu0 0.0
        %1410 = vmatpush2.msra.mxu0 0.0
        %1411 = vmatprep.mubr.f32.mxu0 0.0
        %v1412 = vand.u32 %v1258, 4294901760
        %1413 = vmatmul.mubr.f32.gmra.mxu0 %v1412
        %v1414 = vpop.f32.mrf.mxu0
        %v1415 = vadd.f32 %v1334, %v1414
        %v1416 = vpop.f32.mrf.mxu0
        %1417 = vdwg.mxu0
        %1418 = vmatprep.subr.mxu0 0.0
        %1419 = vmatpush1.msra.mxu0 0.0
        %1420 = vmatprep.subr.mxu0 0.0
        %1421 = vmatpush1.msra.mxu0 0.0
        %1422 = vmatprep.subr.mxu0 0.0
        %1423 = vmatpush1.msra.mxu0 0.0
        %1424 = vmatprep.subr.mxu0 0.0
        %1425 = vmatpush1.msra.mxu0 0.0
        %1426 = vmatprep.subr.mxu0 0.0
        %1427 = vmatpush1.msra.mxu0 0.0
        %1428 = vmatprep.subr.mxu0 0.0
        %1429 = vmatpush1.msra.mxu0 0.0
        %1430 = vmatprep.subr.mxu0 0.0
        %1431 = vmatpush1.msra.mxu0 0.0
        %1432 = vmatprep.subr.mxu0 0.0
        %1433 = vmatpush1.msra.mxu0 0.0
        %1434 = vmatprep.subr.mxu0 0.0
        %1435 = vmatpush1.msra.mxu0 0.0
        %1436 = vmatprep.subr.mxu0 0.0
        %1437 = vmatpush1.msra.mxu0 0.0
        %1438 = vmatprep.subr.mxu0 0.0
        %1439 = vmatpush1.msra.mxu0 0.0
        %1440 = vmatprep.subr.mxu0 0.0
        %1441 = vmatpush1.msra.mxu0 0.0
        %1442 = vmatprep.subr.mxu0 0.0
        %1443 = vmatpush1.msra.mxu0 0.0
        %1444 = vmatprep.subr.mxu0 0.0
        %1445 = vmatpush1.msra.mxu0 0.0
        %1446 = vmatprep.subr.mxu0 0.0
        %v1447 = vand.u32 %v1222, 4294901760
        %v1448 = vsub.f32 %v1222, %v1447
        %1449 = vmatpush1.msra.mxu0 %v1448
        %1450 = vmatprep.subr.mxu0 0.0
        %v1451 = vand.u32 %v1221, 4294901760
        %v1452 = vsub.f32 %v1221, %v1451
        %1453 = vmatpush1.msra.mxu0 %v1452
        %1454 = vmatprep.subr.mxu0 0.0
        %1455 = vmatpush2.msra.mxu0 0.0
        %1456 = vmatprep.subr.mxu0 0.0
        %1457 = vmatpush2.msra.mxu0 0.0
        %1458 = vmatprep.subr.mxu0 0.0
        %1459 = vmatpush2.msra.mxu0 0.0
        %1460 = vmatprep.subr.mxu0 0.0
        %1461 = vmatpush2.msra.mxu0 0.0
        %1462 = vmatprep.subr.mxu0 0.0
        %1463 = vmatpush2.msra.mxu0 0.0
        %1464 = vmatprep.subr.mxu0 0.0
        %1465 = vmatpush2.msra.mxu0 0.0
        %1466 = vmatprep.subr.mxu0 0.0
        %1467 = vmatpush2.msra.mxu0 0.0
        %1468 = vmatprep.subr.mxu0 0.0
        %1469 = vmatpush2.msra.mxu0 0.0
        %1470 = vmatprep.subr.mxu0 0.0
        %1471 = vmatpush2.msra.mxu0 0.0
        %1472 = vmatprep.subr.mxu0 0.0
        %1473 = vmatpush2.msra.mxu0 0.0
        %1474 = vmatprep.subr.mxu0 0.0
        %1475 = vmatpush2.msra.mxu0 0.0
        %1476 = vmatprep.subr.mxu0 0.0
        %1477 = vmatpush2.msra.mxu0 0.0
        %1478 = vmatprep.subr.mxu0 0.0
        %1479 = vmatpush2.msra.mxu0 0.0
        %1480 = vmatprep.subr.mxu0 0.0
        %1481 = vmatpush2.msra.mxu0 0.0
        %1482 = vmatprep.subr.mxu0 0.0
        %1483 = vmatpush2.msra.mxu0 0.0
        %1484 = vmatprep.subr.mxu0 0.0
        %1485 = vmatpush2.msra.mxu0 0.0
        %1486 = vmatprep.mubr.f32.mxu0 0.0
        %v1487 = vand.u32 %v1258, 4294901760
        %v1488 = vsub.f32 %v1258, %v1487
        %1489 = vmatmul.mubr.f32.gmra.mxu0 %v1488
        %v1490 = vpop.f32.mrf.mxu0
        %v1491 = vadd.f32 %v1415, %v1490
        %v1492 = vpop.f32.mrf.mxu0
        %1493 = vdwg.mxu0
        %1494 = vmatprep.subr.mxu0 0.0
        %1495 = vmatpush1.msra.mxu0 0.0
        %1496 = vmatprep.subr.mxu0 0.0
        %1497 = vmatpush1.msra.mxu0 0.0
        %1498 = vmatprep.subr.mxu0 0.0
        %1499 = vmatpush1.msra.mxu0 0.0
        %1500 = vmatprep.subr.mxu0 0.0
        %1501 = vmatpush1.msra.mxu0 0.0
        %1502 = vmatprep.subr.mxu0 0.0
        %1503 = vmatpush1.msra.mxu0 0.0
        %1504 = vmatprep.subr.mxu0 0.0
        %1505 = vmatpush1.msra.mxu0 0.0
        %1506 = vmatprep.subr.mxu0 0.0
        %1507 = vmatpush1.msra.mxu0 0.0
        %1508 = vmatprep.subr.mxu0 0.0
        %1509 = vmatpush1.msra.mxu0 0.0
        %1510 = vmatprep.subr.mxu0 0.0
        %1511 = vmatpush1.msra.mxu0 0.0
        %1512 = vmatprep.subr.mxu0 0.0
        %1513 = vmatpush1.msra.mxu0 0.0
        %1514 = vmatprep.subr.mxu0 0.0
        %1515 = vmatpush1.msra.mxu0 0.0
        %1516 = vmatprep.subr.mxu0 0.0
        %1517 = vmatpush1.msra.mxu0 0.0
        %1518 = vmatprep.subr.mxu0 0.0
        %1519 = vmatpush1.msra.mxu0 0.0
        %1520 = vmatprep.subr.mxu0 0.0
        %1521 = vmatpush1.msra.mxu0 0.0
        %1522 = vmatprep.subr.mxu0 0.0
        %v1523 = vand.u32 %v1222, 4294901760
        %1524 = vmatpush1.msra.mxu0 %v1523
        %1525 = vmatprep.subr.mxu0 0.0
        %v1526 = vand.u32 %v1221, 4294901760
        %1527 = vmatpush1.msra.mxu0 %v1526
        %1528 = vmatprep.subr.mxu0 0.0
        %1529 = vmatpush2.msra.mxu0 0.0
        %1530 = vmatprep.subr.mxu0 0.0
        %1531 = vmatpush2.msra.mxu0 0.0
        %1532 = vmatprep.subr.mxu0 0.0
        %1533 = vmatpush2.msra.mxu0 0.0
        %1534 = vmatprep.subr.mxu0 0.0
        %1535 = vmatpush2.msra.mxu0 0.0
        %1536 = vmatprep.subr.mxu0 0.0
        %1537 = vmatpush2.msra.mxu0 0.0
        %1538 = vmatprep.subr.mxu0 0.0
        %1539 = vmatpush2.msra.mxu0 0.0
        %1540 = vmatprep.subr.mxu0 0.0
        %1541 = vmatpush2.msra.mxu0 0.0
        %1542 = vmatprep.subr.mxu0 0.0
        %1543 = vmatpush2.msra.mxu0 0.0
        %1544 = vmatprep.subr.mxu0 0.0
        %1545 = vmatpush2.msra.mxu0 0.0
        %1546 = vmatprep.subr.mxu0 0.0
        %1547 = vmatpush2.msra.mxu0 0.0
        %1548 = vmatprep.subr.mxu0 0.0
        %1549 = vmatpush2.msra.mxu0 0.0
        %1550 = vmatprep.subr.mxu0 0.0
        %1551 = vmatpush2.msra.mxu0 0.0
        %1552 = vmatprep.subr.mxu0 0.0
        %1553 = vmatpush2.msra.mxu0 0.0
        %1554 = vmatprep.subr.mxu0 0.0
        %1555 = vmatpush2.msra.mxu0 0.0
        %1556 = vmatprep.subr.mxu0 0.0
        %1557 = vmatpush2.msra.mxu0 0.0
        %1558 = vmatprep.subr.mxu0 0.0
        %1559 = vmatpush2.msra.mxu0 0.0
        %1560 = vmatprep.mubr.f32.mxu0 0.0
        %v1561 = vand.u32 %v1258, 4294901760
        %v1562 = vsub.f32 %v1258, %v1561
        %v1563 = vand.u32 %v1562, 4294901760
        %1564 = vmatmul.mubr.f32.gmra.mxu0 %v1563
        %v1565 = vpop.f32.mrf.mxu0
        %v1566 = vadd.f32 %v1491, %v1565
        %v1567 = vpop.f32.mrf.mxu0
        %1568 = vdwg.mxu0
        %1569 = vmatprep.subr.mxu0 0.0
        %1570 = vmatpush1.msra.mxu0 0.0
        %1571 = vmatprep.subr.mxu0 0.0
        %1572 = vmatpush1.msra.mxu0 0.0
        %1573 = vmatprep.subr.mxu0 0.0
        %1574 = vmatpush1.msra.mxu0 0.0
        %1575 = vmatprep.subr.mxu0 0.0
        %1576 = vmatpush1.msra.mxu0 0.0
        %1577 = vmatprep.subr.mxu0 0.0
        %1578 = vmatpush1.msra.mxu0 0.0
        %1579 = vmatprep.subr.mxu0 0.0
        %1580 = vmatpush1.msra.mxu0 0.0
        %1581 = vmatprep.subr.mxu0 0.0
        %1582 = vmatpush1.msra.mxu0 0.0
        %1583 = vmatprep.subr.mxu0 0.0
        %1584 = vmatpush1.msra.mxu0 0.0
        %1585 = vmatprep.subr.mxu0 0.0
        %1586 = vmatpush1.msra.mxu0 0.0
        %1587 = vmatprep.subr.mxu0 0.0
        %1588 = vmatpush1.msra.mxu0 0.0
        %1589 = vmatprep.subr.mxu0 0.0
        %1590 = vmatpush1.msra.mxu0 0.0
        %1591 = vmatprep.subr.mxu0 0.0
        %1592 = vmatpush1.msra.mxu0 0.0
        %1593 = vmatprep.subr.mxu0 0.0
        %1594 = vmatpush1.msra.mxu0 0.0
        %1595 = vmatprep.subr.mxu0 0.0
        %1596 = vmatpush1.msra.mxu0 0.0
        %1597 = vmatprep.subr.mxu0 0.0
        %v1598 = vand.u32 %v1222, 4294901760
        %v1599 = vsub.f32 %v1222, %v1598
        %v1600 = vand.u32 %v1599, 4294901760
        %1601 = vmatpush1.msra.mxu0 %v1600
        %1602 = vmatprep.subr.mxu0 0.0
        %v1603 = vand.u32 %v1221, 4294901760
        %v1604 = vsub.f32 %v1221, %v1603
        %v1605 = vand.u32 %v1604, 4294901760
        %1606 = vmatpush1.msra.mxu0 %v1605
        %1607 = vmatprep.subr.mxu0 0.0
        %1608 = vmatpush2.msra.mxu0 0.0
        %1609 = vmatprep.subr.mxu0 0.0
        %1610 = vmatpush2.msra.mxu0 0.0
        %1611 = vmatprep.subr.mxu0 0.0
        %1612 = vmatpush2.msra.mxu0 0.0
        %1613 = vmatprep.subr.mxu0 0.0
        %1614 = vmatpush2.msra.mxu0 0.0
        %1615 = vmatprep.subr.mxu0 0.0
        %1616 = vmatpush2.msra.mxu0 0.0
        %1617 = vmatprep.subr.mxu0 0.0
        %1618 = vmatpush2.msra.mxu0 0.0
        %1619 = vmatprep.subr.mxu0 0.0
        %1620 = vmatpush2.msra.mxu0 0.0
        %1621 = vmatprep.subr.mxu0 0.0
        %1622 = vmatpush2.msra.mxu0 0.0
        %1623 = vmatprep.subr.mxu0 0.0
        %1624 = vmatpush2.msra.mxu0 0.0
        %1625 = vmatprep.subr.mxu0 0.0
        %1626 = vmatpush2.msra.mxu0 0.0
        %1627 = vmatprep.subr.mxu0 0.0
        %1628 = vmatpush2.msra.mxu0 0.0
        %1629 = vmatprep.subr.mxu0 0.0
        %1630 = vmatpush2.msra.mxu0 0.0
        %1631 = vmatprep.subr.mxu0 0.0
        %1632 = vmatpush2.msra.mxu0 0.0
        %1633 = vmatprep.subr.mxu0 0.0
        %1634 = vmatpush2.msra.mxu0 0.0
        %1635 = vmatprep.subr.mxu0 0.0
        %1636 = vmatpush2.msra.mxu0 0.0
        %1637 = vmatprep.subr.mxu0 0.0
        %1638 = vmatpush2.msra.mxu0 0.0
        %1639 = vmatprep.mubr.f32.mxu0 0.0
        %v1640 = vand.u32 %v1258, 4294901760
        %1641 = vmatmul.mubr.f32.gmra.mxu0 %v1640
        %v1642 = vpop.f32.mrf.mxu0
        %v1643 = vadd.f32 %v1566, %v1642
        %v1644 = vpop.f32.mrf.mxu0
        %1645 = vdwg.mxu0
        %1646 = vmatprep.subr.mxu0 0.0
        %1647 = vmatpush1.msra.mxu0 0.0
        %1648 = vmatprep.subr.mxu0 0.0
        %1649 = vmatpush1.msra.mxu0 0.0
        %1650 = vmatprep.subr.mxu0 0.0
        %1651 = vmatpush1.msra.mxu0 0.0
        %1652 = vmatprep.subr.mxu0 0.0
        %1653 = vmatpush1.msra.mxu0 0.0
        %1654 = vmatprep.subr.mxu0 0.0
        %1655 = vmatpush1.msra.mxu0 0.0
        %1656 = vmatprep.subr.mxu0 0.0
        %1657 = vmatpush1.msra.mxu0 0.0
        %1658 = vmatprep.subr.mxu0 0.0
        %1659 = vmatpush1.msra.mxu0 0.0
        %1660 = vmatprep.subr.mxu0 0.0
        %1661 = vmatpush1.msra.mxu0 0.0
        %1662 = vmatprep.subr.mxu0 0.0
        %1663 = vmatpush1.msra.mxu0 0.0
        %1664 = vmatprep.subr.mxu0 0.0
        %1665 = vmatpush1.msra.mxu0 0.0
        %1666 = vmatprep.subr.mxu0 0.0
        %1667 = vmatpush1.msra.mxu0 0.0
        %1668 = vmatprep.subr.mxu0 0.0
        %1669 = vmatpush1.msra.mxu0 0.0
        %1670 = vmatprep.subr.mxu0 0.0
        %1671 = vmatpush1.msra.mxu0 0.0
        %1672 = vmatprep.subr.mxu0 0.0
        %1673 = vmatpush1.msra.mxu0 0.0
        %1674 = vmatprep.subr.mxu0 0.0
        %v1675 = vand.u32 %v1222, 4294901760
        %1676 = vmatpush1.msra.mxu0 %v1675
        %1677 = vmatprep.subr.mxu0 0.0
        %v1678 = vand.u32 %v1221, 4294901760
        %1679 = vmatpush1.msra.mxu0 %v1678
        %1680 = vmatprep.subr.mxu0 0.0
        %1681 = vmatpush2.msra.mxu0 0.0
        %1682 = vmatprep.subr.mxu0 0.0
        %1683 = vmatpush2.msra.mxu0 0.0
        %1684 = vmatprep.subr.mxu0 0.0
        %1685 = vmatpush2.msra.mxu0 0.0
        %1686 = vmatprep.subr.mxu0 0.0
        %1687 = vmatpush2.msra.mxu0 0.0
        %1688 = vmatprep.subr.mxu0 0.0
        %1689 = vmatpush2.msra.mxu0 0.0
        %1690 = vmatprep.subr.mxu0 0.0
        %1691 = vmatpush2.msra.mxu0 0.0
        %1692 = vmatprep.subr.mxu0 0.0
        %1693 = vmatpush2.msra.mxu0 0.0
        %1694 = vmatprep.subr.mxu0 0.0
        %1695 = vmatpush2.msra.mxu0 0.0
        %1696 = vmatprep.subr.mxu0 0.0
        %1697 = vmatpush2.msra.mxu0 0.0
        %1698 = vmatprep.subr.mxu0 0.0
        %1699 = vmatpush2.msra.mxu0 0.0
        %1700 = vmatprep.subr.mxu0 0.0
        %1701 = vmatpush2.msra.mxu0 0.0
        %1702 = vmatprep.subr.mxu0 0.0
        %1703 = vmatpush2.msra.mxu0 0.0
        %1704 = vmatprep.subr.mxu0 0.0
        %1705 = vmatpush2.msra.mxu0 0.0
        %1706 = vmatprep.subr.mxu0 0.0
        %1707 = vmatpush2.msra.mxu0 0.0
        %1708 = vmatprep.subr.mxu0 0.0
        %1709 = vmatpush2.msra.mxu0 0.0
        %1710 = vmatprep.subr.mxu0 0.0
        %1711 = vmatpush2.msra.mxu0 0.0
        %1712 = vmatprep.mubr.f32.mxu0 0.0
        %v1713 = vand.u32 %v1258, 4294901760
        %1714 = vmatmul.mubr.f32.gmra.mxu0 %v1713
        %v1715 = vpop.f32.mrf.mxu0
        %v1716 = vadd.f32 %v1643, %v1715
        %v1717 = vpop.f32.mrf.mxu0
        %1718 = vdwg.mxu0
        %v1719 = vadd.f32 %v1223, %v1716
        %1720 = vst [vmem:[#allocation3] sm:$0xff] %v1719
        // Predicated region
        $region97: #{tpu_custom_call.1} parent=71 // pred_check
          %p1721 = pneg %p703
        $region98: #{tpu_custom_call.1} parent=71 // pred_check_branch
          %1723 = sbr.rel (%p1721) target = $region100
        $region99: #{tpu_custom_call.1} parent=71 // pred_region
          %s1724 = sld [smem:[#allocation4 + %s38]]
          %s1725 = sadd.f32 %s1724, 1.0
          %v1726 = vstv %s1725
          %v1727 = vmul.f32 %v1726, %v714
          %v1728 = vld [vmem:[#allocation3] sm:$0xff]
          %v1729 = vadd.f32 %v1727, %v1728
          %v1730 = vld [vmem:[%s574] sm:$0xff]
          %v1731 = vld [vmem:[%s574 + $0x8] sm:$0xff]
          %v1732 = vld [vmem:[%s574 + $0x10] sm:$0xff]
          %v1733 = vld [vmem:[%s574 + $0x18] sm:$0xff]
          %v1734 = vld [vmem:[%s574 + $0x20] sm:$0xff]
          %v1735 = vld [vmem:[%s574 + $0x28] sm:$0xff]
          %v1736 = vld [vmem:[%s574 + $0x30] sm:$0xff]
          %v1737 = vld [vmem:[%s574 + $0x38] sm:$0xff]
          %v1738 = vld [vmem:[%s574 + $0x40] sm:$0xff]
          %v1739 = vld [vmem:[%s574 + $0x48] sm:$0xff]
          %v1740 = vld [vmem:[%s574 + $0x50] sm:$0xff]
          %v1741 = vld [vmem:[%s574 + $0x58] sm:$0xff]
          %v1742 = vld [vmem:[%s574 + $0x60] sm:$0xff]
          %v1743 = vld [vmem:[%s574 + $0x68] sm:$0xff]
          %v1744 = vld [vmem:[%s574 + $0x70] sm:$0xff]
          %v1745 = vld [vmem:[%s574 + $0x78] sm:$0xff]
          %v1746 = vld [vmem:[%s574 + $0x80] sm:$0xff]
          %v1747 = vld [vmem:[%s574 + $0x88] sm:$0xff]
          %v1748 = vld [vmem:[%s574 + $0x90] sm:$0xff]
          %v1749 = vld [vmem:[%s574 + $0x98] sm:$0xff]
          %v1750 = vld [vmem:[%s574 + $0xa0] sm:$0xff]
          %v1751 = vld [vmem:[%s574 + $0xa8] sm:$0xff]
          %v1752 = vld [vmem:[%s574 + $0xb0] sm:$0xff]
          %v1753 = vld [vmem:[%s574 + $0xb8] sm:$0xff]
          %v1754 = vld [vmem:[%s574 + $0xc0] sm:$0xff]
          %v1755 = vld [vmem:[%s574 + $0xc8] sm:$0xff]
          %v1756 = vld [vmem:[%s574 + $0xd0] sm:$0xff]
          %v1757 = vld [vmem:[%s574 + $0xd8] sm:$0xff]
          %v1758 = vld [vmem:[%s574 + $0xe0] sm:$0xff]
          %v1759 = vld [vmem:[%s574 + $0xe8] sm:$0xff]
          %v1760 = vld [vmem:[%s574 + $0xf0] sm:$0xff]
          %v1761 = vld [vmem:[%s574 + $0xf8] sm:$0xff]
          %v1762 = vld [vmem:[%s684] sm:$0x3]
          %v1764 = vlaneseq
          %v1765 = vshrl.u32 %v1764, 7
          %v1766 = vsub.s32 0, %v1765
          %v1767 = vrot.slane %v1762, %v1766
          %v1768 = vlaneseq
          %v1769 = vshrl.u32 %v1768, 7
          %v1770 = vsub.s32 1, %v1769
          %v1771 = vrot.slane %v1762, %v1770
          %v1774 = vand.u32 %v1761, 4294901760
          %1775 = vmatprep.subr.mxu0 %v1774
          %v1776 = vand.u32 %v1760, 4294901760
          %1777 = vmatpush1.msra.mxu0 %v1776
          %v1778 = vand.u32 %v1759, 4294901760
          %1779 = vmatprep.subr.mxu0 %v1778
          %v1780 = vand.u32 %v1758, 4294901760
          %1781 = vmatpush1.msra.mxu0 %v1780
          %v1782 = vand.u32 %v1757, 4294901760
          %1783 = vmatprep.subr.mxu0 %v1782
          %v1784 = vand.u32 %v1756, 4294901760
          %1785 = vmatpush1.msra.mxu0 %v1784
          %v1786 = vand.u32 %v1755, 4294901760
          %1787 = vmatprep.subr.mxu0 %v1786
          %v1788 = vand.u32 %v1754, 4294901760
          %1789 = vmatpush1.msra.mxu0 %v1788
          %v1790 = vand.u32 %v1753, 4294901760
          %1791 = vmatprep.subr.mxu0 %v1790
          %v1792 = vand.u32 %v1752, 4294901760
          %1793 = vmatpush1.msra.mxu0 %v1792
          %v1794 = vand.u32 %v1751, 4294901760
          %1795 = vmatprep.subr.mxu0 %v1794
          %v1796 = vand.u32 %v1750, 4294901760
          %1797 = vmatpush1.msra.mxu0 %v1796
          %v1798 = vand.u32 %v1749, 4294901760
          %1799 = vmatprep.subr.mxu0 %v1798
          %v1800 = vand.u32 %v1748, 4294901760
          %1801 = vmatpush1.msra.mxu0 %v1800
          %v1802 = vand.u32 %v1747, 4294901760
          %1803 = vmatprep.subr.mxu0 %v1802
          %v1804 = vand.u32 %v1746, 4294901760
          %1805 = vmatpush1.msra.mxu0 %v1804
          %v1806 = vand.u32 %v1745, 4294901760
          %1807 = vmatprep.subr.mxu0 %v1806
          %v1808 = vand.u32 %v1744, 4294901760
          %1809 = vmatpush1.msra.mxu0 %v1808
          %v1810 = vand.u32 %v1743, 4294901760
          %1811 = vmatprep.subr.mxu0 %v1810
          %v1812 = vand.u32 %v1742, 4294901760
          %1813 = vmatpush1.msra.mxu0 %v1812
          %v1814 = vand.u32 %v1741, 4294901760
          %1815 = vmatprep.subr.mxu0 %v1814
          %v1816 = vand.u32 %v1740, 4294901760
          %1817 = vmatpush1.msra.mxu0 %v1816
          %v1818 = vand.u32 %v1739, 4294901760
          %1819 = vmatprep.subr.mxu0 %v1818
          %v1820 = vand.u32 %v1738, 4294901760
          %1821 = vmatpush1.msra.mxu0 %v1820
          %v1822 = vand.u32 %v1737, 4294901760
          %1823 = vmatprep.subr.mxu0 %v1822
          %v1824 = vand.u32 %v1736, 4294901760
          %1825 = vmatpush1.msra.mxu0 %v1824
          %v1826 = vand.u32 %v1735, 4294901760
          %1827 = vmatprep.subr.mxu0 %v1826
          %v1828 = vand.u32 %v1734, 4294901760
          %1829 = vmatpush1.msra.mxu0 %v1828
          %v1830 = vand.u32 %v1733, 4294901760
          %1831 = vmatprep.subr.mxu0 %v1830
          %v1832 = vand.u32 %v1732, 4294901760
          %1833 = vmatpush1.msra.mxu0 %v1832
          %v1834 = vand.u32 %v1731, 4294901760
          %1835 = vmatprep.subr.mxu0 %v1834
          %v1836 = vand.u32 %v1730, 4294901760
          %1837 = vmatpush1.msra.mxu0 %v1836
          %1838 = vmatprep.subr.mxu0 0.0
          %1839 = vmatpush2.msra.mxu0 0.0
          %1840 = vmatprep.subr.mxu0 0.0
          %1841 = vmatpush2.msra.mxu0 0.0
          %1842 = vmatprep.subr.mxu0 0.0
          %1843 = vmatpush2.msra.mxu0 0.0
          %1844 = vmatprep.subr.mxu0 0.0
          %1845 = vmatpush2.msra.mxu0 0.0
          %1846 = vmatprep.subr.mxu0 0.0
          %1847 = vmatpush2.msra.mxu0 0.0
          %1848 = vmatprep.subr.mxu0 0.0
          %1849 = vmatpush2.msra.mxu0 0.0
          %1850 = vmatprep.subr.mxu0 0.0
          %1851 = vmatpush2.msra.mxu0 0.0
          %1852 = vmatprep.subr.mxu0 0.0
          %1853 = vmatpush2.msra.mxu0 0.0
          %1854 = vmatprep.subr.mxu0 0.0
          %1855 = vmatpush2.msra.mxu0 0.0
          %1856 = vmatprep.subr.mxu0 0.0
          %1857 = vmatpush2.msra.mxu0 0.0
          %1858 = vmatprep.subr.mxu0 0.0
          %1859 = vmatpush2.msra.mxu0 0.0
          %1860 = vmatprep.subr.mxu0 0.0
          %1861 = vmatpush2.msra.mxu0 0.0
          %1862 = vmatprep.subr.mxu0 0.0
          %1863 = vmatpush2.msra.mxu0 0.0
          %1864 = vmatprep.subr.mxu0 0.0
          %1865 = vmatpush2.msra.mxu0 0.0
          %1866 = vmatprep.subr.mxu0 0.0
          %1867 = vmatpush2.msra.mxu0 0.0
          %1868 = vmatprep.subr.mxu0 0.0
          %1869 = vmatpush2.msra.mxu0 0.0
          %1870 = vmatprep.mubr.f32.mxu0 0.0
          %v1871 = vand.u32 %v1729, 4294901760
          %v1872 = vsub.f32 %v1729, %v1871
          %v1873 = vand.u32 %v1872, 4294901760
          %v1874 = vsub.f32 %v1872, %v1873
          %v1875 = vand.u32 %v1874, 4294901760
          %1876 = vmatmul.mubr.f32.gmra.mxu0 %v1875
          %v1877 = vpop.f32.mrf.mxu0
          %v1878 = vadd.f32 %v1767, %v1877
          %v1879 = vpop.f32.mrf.mxu0
          %v1880 = vadd.f32 %v1771, %v1879
          %1881 = vdwg.mxu0
          %v1882 = vand.u32 %v1761, 4294901760
          %v1883 = vsub.f32 %v1761, %v1882
          %v1884 = vand.u32 %v1883, 4294901760
          %v1885 = vsub.f32 %v1883, %v1884
          %v1886 = vand.u32 %v1885, 4294901760
          %1887 = vmatprep.subr.mxu0 %v1886
          %v1888 = vand.u32 %v1760, 4294901760
          %v1889 = vsub.f32 %v1760, %v1888
          %v1890 = vand.u32 %v1889, 4294901760
          %v1891 = vsub.f32 %v1889, %v1890
          %v1892 = vand.u32 %v1891, 4294901760
          %1893 = vmatpush1.msra.mxu0 %v1892
          %v1894 = vand.u32 %v1759, 4294901760
          %v1895 = vsub.f32 %v1759, %v1894
          %v1896 = vand.u32 %v1895, 4294901760
          %v1897 = vsub.f32 %v1895, %v1896
          %v1898 = vand.u32 %v1897, 4294901760
          %1899 = vmatprep.subr.mxu0 %v1898
          %v1900 = vand.u32 %v1758, 4294901760
          %v1901 = vsub.f32 %v1758, %v1900
          %v1902 = vand.u32 %v1901, 4294901760
          %v1903 = vsub.f32 %v1901, %v1902
          %v1904 = vand.u32 %v1903, 4294901760
          %1905 = vmatpush1.msra.mxu0 %v1904
          %v1906 = vand.u32 %v1757, 4294901760
          %v1907 = vsub.f32 %v1757, %v1906
          %v1908 = vand.u32 %v1907, 4294901760
          %v1909 = vsub.f32 %v1907, %v1908
          %v1910 = vand.u32 %v1909, 4294901760
          %1911 = vmatprep.subr.mxu0 %v1910
          %v1912 = vand.u32 %v1756, 4294901760
          %v1913 = vsub.f32 %v1756, %v1912
          %v1914 = vand.u32 %v1913, 4294901760
          %v1915 = vsub.f32 %v1913, %v1914
          %v1916 = vand.u32 %v1915, 4294901760
          %1917 = vmatpush1.msra.mxu0 %v1916
          %v1918 = vand.u32 %v1755, 4294901760
          %v1919 = vsub.f32 %v1755, %v1918
          %v1920 = vand.u32 %v1919, 4294901760
          %v1921 = vsub.f32 %v1919, %v1920
          %v1922 = vand.u32 %v1921, 4294901760
          %1923 = vmatprep.subr.mxu0 %v1922
          %v1924 = vand.u32 %v1754, 4294901760
          %v1925 = vsub.f32 %v1754, %v1924
          %v1926 = vand.u32 %v1925, 4294901760
          %v1927 = vsub.f32 %v1925, %v1926
          %v1928 = vand.u32 %v1927, 4294901760
          %1929 = vmatpush1.msra.mxu0 %v1928
          %v1930 = vand.u32 %v1753, 4294901760
          %v1931 = vsub.f32 %v1753, %v1930
          %v1932 = vand.u32 %v1931, 4294901760
          %v1933 = vsub.f32 %v1931, %v1932
          %v1934 = vand.u32 %v1933, 4294901760
          %1935 = vmatprep.subr.mxu0 %v1934
          %v1936 = vand.u32 %v1752, 4294901760
          %v1937 = vsub.f32 %v1752, %v1936
          %v1938 = vand.u32 %v1937, 4294901760
          %v1939 = vsub.f32 %v1937, %v1938
          %v1940 = vand.u32 %v1939, 4294901760
          %1941 = vmatpush1.msra.mxu0 %v1940
          %v1942 = vand.u32 %v1751, 4294901760
          %v1943 = vsub.f32 %v1751, %v1942
          %v1944 = vand.u32 %v1943, 4294901760
          %v1945 = vsub.f32 %v1943, %v1944
          %v1946 = vand.u32 %v1945, 4294901760
          %1947 = vmatprep.subr.mxu0 %v1946
          %v1948 = vand.u32 %v1750, 4294901760
          %v1949 = vsub.f32 %v1750, %v1948
          %v1950 = vand.u32 %v1949, 4294901760
          %v1951 = vsub.f32 %v1949, %v1950
          %v1952 = vand.u32 %v1951, 4294901760
          %1953 = vmatpush1.msra.mxu0 %v1952
          %v1954 = vand.u32 %v1749, 4294901760
          %v1955 = vsub.f32 %v1749, %v1954
          %v1956 = vand.u32 %v1955, 4294901760
          %v1957 = vsub.f32 %v1955, %v1956
          %v1958 = vand.u32 %v1957, 4294901760
          %1959 = vmatprep.subr.mxu0 %v1958
          %v1960 = vand.u32 %v1748, 4294901760
          %v1961 = vsub.f32 %v1748, %v1960
          %v1962 = vand.u32 %v1961, 4294901760
          %v1963 = vsub.f32 %v1961, %v1962
          %v1964 = vand.u32 %v1963, 4294901760
          %1965 = vmatpush1.msra.mxu0 %v1964
          %v1966 = vand.u32 %v1747, 4294901760
          %v1967 = vsub.f32 %v1747, %v1966
          %v1968 = vand.u32 %v1967, 4294901760
          %v1969 = vsub.f32 %v1967, %v1968
          %v1970 = vand.u32 %v1969, 4294901760
          %1971 = vmatprep.subr.mxu0 %v1970
          %v1972 = vand.u32 %v1746, 4294901760
          %v1973 = vsub.f32 %v1746, %v1972
          %v1974 = vand.u32 %v1973, 4294901760
          %v1975 = vsub.f32 %v1973, %v1974
          %v1976 = vand.u32 %v1975, 4294901760
          %1977 = vmatpush1.msra.mxu0 %v1976
          %v1978 = vand.u32 %v1745, 4294901760
          %v1979 = vsub.f32 %v1745, %v1978
          %v1980 = vand.u32 %v1979, 4294901760
          %v1981 = vsub.f32 %v1979, %v1980
          %v1982 = vand.u32 %v1981, 4294901760
          %1983 = vmatprep.subr.mxu0 %v1982
          %v1984 = vand.u32 %v1744, 4294901760
          %v1985 = vsub.f32 %v1744, %v1984
          %v1986 = vand.u32 %v1985, 4294901760
          %v1987 = vsub.f32 %v1985, %v1986
          %v1988 = vand.u32 %v1987, 4294901760
          %1989 = vmatpush1.msra.mxu0 %v1988
          %v1990 = vand.u32 %v1743, 4294901760
          %v1991 = vsub.f32 %v1743, %v1990
          %v1992 = vand.u32 %v1991, 4294901760
          %v1993 = vsub.f32 %v1991, %v1992
          %v1994 = vand.u32 %v1993, 4294901760
          %1995 = vmatprep.subr.mxu0 %v1994
          %v1996 = vand.u32 %v1742, 4294901760
          %v1997 = vsub.f32 %v1742, %v1996
          %v1998 = vand.u32 %v1997, 4294901760
          %v1999 = vsub.f32 %v1997, %v1998
          %v2000 = vand.u32 %v1999, 4294901760
          %2001 = vmatpush1.msra.mxu0 %v2000
          %v2002 = vand.u32 %v1741, 4294901760
          %v2003 = vsub.f32 %v1741, %v2002
          %v2004 = vand.u32 %v2003, 4294901760
          %v2005 = vsub.f32 %v2003, %v2004
          %v2006 = vand.u32 %v2005, 4294901760
          %2007 = vmatprep.subr.mxu0 %v2006
          %v2008 = vand.u32 %v1740, 4294901760
          %v2009 = vsub.f32 %v1740, %v2008
          %v2010 = vand.u32 %v2009, 4294901760
          %v2011 = vsub.f32 %v2009, %v2010
          %v2012 = vand.u32 %v2011, 4294901760
          %2013 = vmatpush1.msra.mxu0 %v2012
          %v2014 = vand.u32 %v1739, 4294901760
          %v2015 = vsub.f32 %v1739, %v2014
          %v2016 = vand.u32 %v2015, 4294901760
          %v2017 = vsub.f32 %v2015, %v2016
          %v2018 = vand.u32 %v2017, 4294901760
          %2019 = vmatprep.subr.mxu0 %v2018
          %v2020 = vand.u32 %v1738, 4294901760
          %v2021 = vsub.f32 %v1738, %v2020
          %v2022 = vand.u32 %v2021, 4294901760
          %v2023 = vsub.f32 %v2021, %v2022
          %v2024 = vand.u32 %v2023, 4294901760
          %2025 = vmatpush1.msra.mxu0 %v2024
          %v2026 = vand.u32 %v1737, 4294901760
          %v2027 = vsub.f32 %v1737, %v2026
          %v2028 = vand.u32 %v2027, 4294901760
          %v2029 = vsub.f32 %v2027, %v2028
          %v2030 = vand.u32 %v2029, 4294901760
          %2031 = vmatprep.subr.mxu0 %v2030
          %v2032 = vand.u32 %v1736, 4294901760
          %v2033 = vsub.f32 %v1736, %v2032
          %v2034 = vand.u32 %v2033, 4294901760
          %v2035 = vsub.f32 %v2033, %v2034
          %v2036 = vand.u32 %v2035, 4294901760
          %2037 = vmatpush1.msra.mxu0 %v2036
          %v2038 = vand.u32 %v1735, 4294901760
          %v2039 = vsub.f32 %v1735, %v2038
          %v2040 = vand.u32 %v2039, 4294901760
          %v2041 = vsub.f32 %v2039, %v2040
          %v2042 = vand.u32 %v2041, 4294901760
          %2043 = vmatprep.subr.mxu0 %v2042
          %v2044 = vand.u32 %v1734, 4294901760
          %v2045 = vsub.f32 %v1734, %v2044
          %v2046 = vand.u32 %v2045, 4294901760
          %v2047 = vsub.f32 %v2045, %v2046
          %v2048 = vand.u32 %v2047, 4294901760
          %2049 = vmatpush1.msra.mxu0 %v2048
          %v2050 = vand.u32 %v1733, 4294901760
          %v2051 = vsub.f32 %v1733, %v2050
          %v2052 = vand.u32 %v2051, 4294901760
          %v2053 = vsub.f32 %v2051, %v2052
          %v2054 = vand.u32 %v2053, 4294901760
          %2055 = vmatprep.subr.mxu0 %v2054
          %v2056 = vand.u32 %v1732, 4294901760
          %v2057 = vsub.f32 %v1732, %v2056
          %v2058 = vand.u32 %v2057, 4294901760
          %v2059 = vsub.f32 %v2057, %v2058
          %v2060 = vand.u32 %v2059, 4294901760
          %2061 = vmatpush1.msra.mxu0 %v2060
          %v2062 = vand.u32 %v1731, 4294901760
          %v2063 = vsub.f32 %v1731, %v2062
          %v2064 = vand.u32 %v2063, 4294901760
          %v2065 = vsub.f32 %v2063, %v2064
          %v2066 = vand.u32 %v2065, 4294901760
          %2067 = vmatprep.subr.mxu0 %v2066
          %v2068 = vand.u32 %v1730, 4294901760
          %v2069 = vsub.f32 %v1730, %v2068
          %v2070 = vand.u32 %v2069, 4294901760
          %v2071 = vsub.f32 %v2069, %v2070
          %v2072 = vand.u32 %v2071, 4294901760
          %2073 = vmatpush1.msra.mxu0 %v2072
          %2074 = vmatprep.subr.mxu0 0.0
          %2075 = vmatpush2.msra.mxu0 0.0
          %2076 = vmatprep.subr.mxu0 0.0
          %2077 = vmatpush2.msra.mxu0 0.0
          %2078 = vmatprep.subr.mxu0 0.0
          %2079 = vmatpush2.msra.mxu0 0.0
          %2080 = vmatprep.subr.mxu0 0.0
          %2081 = vmatpush2.msra.mxu0 0.0
          %2082 = vmatprep.subr.mxu0 0.0
          %2083 = vmatpush2.msra.mxu0 0.0
          %2084 = vmatprep.subr.mxu0 0.0
          %2085 = vmatpush2.msra.mxu0 0.0
          %2086 = vmatprep.subr.mxu0 0.0
          %2087 = vmatpush2.msra.mxu0 0.0
          %2088 = vmatprep.subr.mxu0 0.0
          %2089 = vmatpush2.msra.mxu0 0.0
          %2090 = vmatprep.subr.mxu0 0.0
          %2091 = vmatpush2.msra.mxu0 0.0
          %2092 = vmatprep.subr.mxu0 0.0
          %2093 = vmatpush2.msra.mxu0 0.0
          %2094 = vmatprep.subr.mxu0 0.0
          %2095 = vmatpush2.msra.mxu0 0.0
          %2096 = vmatprep.subr.mxu0 0.0
          %2097 = vmatpush2.msra.mxu0 0.0
          %2098 = vmatprep.subr.mxu0 0.0
          %2099 = vmatpush2.msra.mxu0 0.0
          %2100 = vmatprep.subr.mxu0 0.0
          %2101 = vmatpush2.msra.mxu0 0.0
          %2102 = vmatprep.subr.mxu0 0.0
          %2103 = vmatpush2.msra.mxu0 0.0
          %2104 = vmatprep.subr.mxu0 0.0
          %2105 = vmatpush2.msra.mxu0 0.0
          %2106 = vmatprep.mubr.f32.mxu0 0.0
          %v2107 = vand.u32 %v1729, 4294901760
          %2108 = vmatmul.mubr.f32.gmra.mxu0 %v2107
          %v2109 = vpop.f32.mrf.mxu0
          %v2110 = vadd.f32 %v1878, %v2109
          %v2111 = vpop.f32.mrf.mxu0
          %v2112 = vadd.f32 %v1880, %v2111
          %2113 = vdwg.mxu0
          %v2114 = vand.u32 %v1761, 4294901760
          %v2115 = vsub.f32 %v1761, %v2114
          %2116 = vmatprep.subr.mxu0 %v2115
          %v2117 = vand.u32 %v1760, 4294901760
          %v2118 = vsub.f32 %v1760, %v2117
          %2119 = vmatpush1.msra.mxu0 %v2118
          %v2120 = vand.u32 %v1759, 4294901760
          %v2121 = vsub.f32 %v1759, %v2120
          %2122 = vmatprep.subr.mxu0 %v2121
          %v2123 = vand.u32 %v1758, 4294901760
          %v2124 = vsub.f32 %v1758, %v2123
          %2125 = vmatpush1.msra.mxu0 %v2124
          %v2126 = vand.u32 %v1757, 4294901760
          %v2127 = vsub.f32 %v1757, %v2126
          %2128 = vmatprep.subr.mxu0 %v2127
          %v2129 = vand.u32 %v1756, 4294901760
          %v2130 = vsub.f32 %v1756, %v2129
          %2131 = vmatpush1.msra.mxu0 %v2130
          %v2132 = vand.u32 %v1755, 4294901760
          %v2133 = vsub.f32 %v1755, %v2132
          %2134 = vmatprep.subr.mxu0 %v2133
          %v2135 = vand.u32 %v1754, 4294901760
          %v2136 = vsub.f32 %v1754, %v2135
          %2137 = vmatpush1.msra.mxu0 %v2136
          %v2138 = vand.u32 %v1753, 4294901760
          %v2139 = vsub.f32 %v1753, %v2138
          %2140 = vmatprep.subr.mxu0 %v2139
          %v2141 = vand.u32 %v1752, 4294901760
          %v2142 = vsub.f32 %v1752, %v2141
          %2143 = vmatpush1.msra.mxu0 %v2142
          %v2144 = vand.u32 %v1751, 4294901760
          %v2145 = vsub.f32 %v1751, %v2144
          %2146 = vmatprep.subr.mxu0 %v2145
          %v2147 = vand.u32 %v1750, 4294901760
          %v2148 = vsub.f32 %v1750, %v2147
          %2149 = vmatpush1.msra.mxu0 %v2148
          %v2150 = vand.u32 %v1749, 4294901760
          %v2151 = vsub.f32 %v1749, %v2150
          %2152 = vmatprep.subr.mxu0 %v2151
          %v2153 = vand.u32 %v1748, 4294901760
          %v2154 = vsub.f32 %v1748, %v2153
          %2155 = vmatpush1.msra.mxu0 %v2154
          %v2156 = vand.u32 %v1747, 4294901760
          %v2157 = vsub.f32 %v1747, %v2156
          %2158 = vmatprep.subr.mxu0 %v2157
          %v2159 = vand.u32 %v1746, 4294901760
          %v2160 = vsub.f32 %v1746, %v2159
          %2161 = vmatpush1.msra.mxu0 %v2160
          %v2162 = vand.u32 %v1745, 4294901760
          %v2163 = vsub.f32 %v1745, %v2162
          %2164 = vmatprep.subr.mxu0 %v2163
          %v2165 = vand.u32 %v1744, 4294901760
          %v2166 = vsub.f32 %v1744, %v2165
          %2167 = vmatpush1.msra.mxu0 %v2166
          %v2168 = vand.u32 %v1743, 4294901760
          %v2169 = vsub.f32 %v1743, %v2168
          %2170 = vmatprep.subr.mxu0 %v2169
          %v2171 = vand.u32 %v1742, 4294901760
          %v2172 = vsub.f32 %v1742, %v2171
          %2173 = vmatpush1.msra.mxu0 %v2172
          %v2174 = vand.u32 %v1741, 4294901760
          %v2175 = vsub.f32 %v1741, %v2174
          %2176 = vmatprep.subr.mxu0 %v2175
          %v2177 = vand.u32 %v1740, 4294901760
          %v2178 = vsub.f32 %v1740, %v2177
          %2179 = vmatpush1.msra.mxu0 %v2178
          %v2180 = vand.u32 %v1739, 4294901760
          %v2181 = vsub.f32 %v1739, %v2180
          %2182 = vmatprep.subr.mxu0 %v2181
          %v2183 = vand.u32 %v1738, 4294901760
          %v2184 = vsub.f32 %v1738, %v2183
          %2185 = vmatpush1.msra.mxu0 %v2184
          %v2186 = vand.u32 %v1737, 4294901760
          %v2187 = vsub.f32 %v1737, %v2186
          %2188 = vmatprep.subr.mxu0 %v2187
          %v2189 = vand.u32 %v1736, 4294901760
          %v2190 = vsub.f32 %v1736, %v2189
          %2191 = vmatpush1.msra.mxu0 %v2190
          %v2192 = vand.u32 %v1735, 4294901760
          %v2193 = vsub.f32 %v1735, %v2192
          %2194 = vmatprep.subr.mxu0 %v2193
          %v2195 = vand.u32 %v1734, 4294901760
          %v2196 = vsub.f32 %v1734, %v2195
          %2197 = vmatpush1.msra.mxu0 %v2196
          %v2198 = vand.u32 %v1733, 4294901760
          %v2199 = vsub.f32 %v1733, %v2198
          %2200 = vmatprep.subr.mxu0 %v2199
          %v2201 = vand.u32 %v1732, 4294901760
          %v2202 = vsub.f32 %v1732, %v2201
          %2203 = vmatpush1.msra.mxu0 %v2202
          %v2204 = vand.u32 %v1731, 4294901760
          %v2205 = vsub.f32 %v1731, %v2204
          %2206 = vmatprep.subr.mxu0 %v2205
          %v2207 = vand.u32 %v1730, 4294901760
          %v2208 = vsub.f32 %v1730, %v2207
          %2209 = vmatpush1.msra.mxu0 %v2208
          %2210 = vmatprep.subr.mxu0 0.0
          %2211 = vmatpush2.msra.mxu0 0.0
          %2212 = vmatprep.subr.mxu0 0.0
          %2213 = vmatpush2.msra.mxu0 0.0
          %2214 = vmatprep.subr.mxu0 0.0
          %2215 = vmatpush2.msra.mxu0 0.0
          %2216 = vmatprep.subr.mxu0 0.0
          %2217 = vmatpush2.msra.mxu0 0.0
          %2218 = vmatprep.subr.mxu0 0.0
          %2219 = vmatpush2.msra.mxu0 0.0
          %2220 = vmatprep.subr.mxu0 0.0
          %2221 = vmatpush2.msra.mxu0 0.0
          %2222 = vmatprep.subr.mxu0 0.0
          %2223 = vmatpush2.msra.mxu0 0.0
          %2224 = vmatprep.subr.mxu0 0.0
          %2225 = vmatpush2.msra.mxu0 0.0
          %2226 = vmatprep.subr.mxu0 0.0
          %2227 = vmatpush2.msra.mxu0 0.0
          %2228 = vmatprep.subr.mxu0 0.0
          %2229 = vmatpush2.msra.mxu0 0.0
          %2230 = vmatprep.subr.mxu0 0.0
          %2231 = vmatpush2.msra.mxu0 0.0
          %2232 = vmatprep.subr.mxu0 0.0
          %2233 = vmatpush2.msra.mxu0 0.0
          %2234 = vmatprep.subr.mxu0 0.0
          %2235 = vmatpush2.msra.mxu0 0.0
          %2236 = vmatprep.subr.mxu0 0.0
          %2237 = vmatpush2.msra.mxu0 0.0
          %2238 = vmatprep.subr.mxu0 0.0
          %2239 = vmatpush2.msra.mxu0 0.0
          %2240 = vmatprep.subr.mxu0 0.0
          %2241 = vmatpush2.msra.mxu0 0.0
          %2242 = vmatprep.mubr.f32.mxu0 0.0
          %v2243 = vand.u32 %v1729, 4294901760
          %v2244 = vsub.f32 %v1729, %v2243
          %2245 = vmatmul.mubr.f32.gmra.mxu0 %v2244
          %v2246 = vpop.f32.mrf.mxu0
          %v2247 = vadd.f32 %v2110, %v2246
          %v2248 = vpop.f32.mrf.mxu0
          %v2249 = vadd.f32 %v2112, %v2248
          %2250 = vdwg.mxu0
          %v2251 = vand.u32 %v1761, 4294901760
          %2252 = vmatprep.subr.mxu0 %v2251
          %v2253 = vand.u32 %v1760, 4294901760
          %2254 = vmatpush1.msra.mxu0 %v2253
          %v2255 = vand.u32 %v1759, 4294901760
          %2256 = vmatprep.subr.mxu0 %v2255
          %v2257 = vand.u32 %v1758, 4294901760
          %2258 = vmatpush1.msra.mxu0 %v2257
          %v2259 = vand.u32 %v1757, 4294901760
          %2260 = vmatprep.subr.mxu0 %v2259
          %v2261 = vand.u32 %v1756, 4294901760
          %2262 = vmatpush1.msra.mxu0 %v2261
          %v2263 = vand.u32 %v1755, 4294901760
          %2264 = vmatprep.subr.mxu0 %v2263
          %v2265 = vand.u32 %v1754, 4294901760
          %2266 = vmatpush1.msra.mxu0 %v2265
          %v2267 = vand.u32 %v1753, 4294901760
          %2268 = vmatprep.subr.mxu0 %v2267
          %v2269 = vand.u32 %v1752, 4294901760
          %2270 = vmatpush1.msra.mxu0 %v2269
          %v2271 = vand.u32 %v1751, 4294901760
          %2272 = vmatprep.subr.mxu0 %v2271
          %v2273 = vand.u32 %v1750, 4294901760
          %2274 = vmatpush1.msra.mxu0 %v2273
          %v2275 = vand.u32 %v1749, 4294901760
          %2276 = vmatprep.subr.mxu0 %v2275
          %v2277 = vand.u32 %v1748, 4294901760
          %2278 = vmatpush1.msra.mxu0 %v2277
          %v2279 = vand.u32 %v1747, 4294901760
          %2280 = vmatprep.subr.mxu0 %v2279
          %v2281 = vand.u32 %v1746, 4294901760
          %2282 = vmatpush1.msra.mxu0 %v2281
          %v2283 = vand.u32 %v1745, 4294901760
          %2284 = vmatprep.subr.mxu0 %v2283
          %v2285 = vand.u32 %v1744, 4294901760
          %2286 = vmatpush1.msra.mxu0 %v2285
          %v2287 = vand.u32 %v1743, 4294901760
          %2288 = vmatprep.subr.mxu0 %v2287
          %v2289 = vand.u32 %v1742, 4294901760
          %2290 = vmatpush1.msra.mxu0 %v2289
          %v2291 = vand.u32 %v1741, 4294901760
          %2292 = vmatprep.subr.mxu0 %v2291
          %v2293 = vand.u32 %v1740, 4294901760
          %2294 = vmatpush1.msra.mxu0 %v2293
          %v2295 = vand.u32 %v1739, 4294901760
          %2296 = vmatprep.subr.mxu0 %v2295
          %v2297 = vand.u32 %v1738, 4294901760
          %2298 = vmatpush1.msra.mxu0 %v2297
          %v2299 = vand.u32 %v1737, 4294901760
          %2300 = vmatprep.subr.mxu0 %v2299
          %v2301 = vand.u32 %v1736, 4294901760
          %2302 = vmatpush1.msra.mxu0 %v2301
          %v2303 = vand.u32 %v1735, 4294901760
          %2304 = vmatprep.subr.mxu0 %v2303
          %v2305 = vand.u32 %v1734, 4294901760
          %2306 = vmatpush1.msra.mxu0 %v2305
          %v2307 = vand.u32 %v1733, 4294901760
          %2308 = vmatprep.subr.mxu0 %v2307
          %v2309 = vand.u32 %v1732, 4294901760
          %2310 = vmatpush1.msra.mxu0 %v2309
          %v2311 = vand.u32 %v1731, 4294901760
          %2312 = vmatprep.subr.mxu0 %v2311
          %v2313 = vand.u32 %v1730, 4294901760
          %2314 = vmatpush1.msra.mxu0 %v2313
          %2315 = vmatprep.subr.mxu0 0.0
          %2316 = vmatpush2.msra.mxu0 0.0
          %2317 = vmatprep.subr.mxu0 0.0
          %2318 = vmatpush2.msra.mxu0 0.0
          %2319 = vmatprep.subr.mxu0 0.0
          %2320 = vmatpush2.msra.mxu0 0.0
          %2321 = vmatprep.subr.mxu0 0.0
          %2322 = vmatpush2.msra.mxu0 0.0
          %2323 = vmatprep.subr.mxu0 0.0
          %2324 = vmatpush2.msra.mxu0 0.0
          %2325 = vmatprep.subr.mxu0 0.0
          %2326 = vmatpush2.msra.mxu0 0.0
          %2327 = vmatprep.subr.mxu0 0.0
          %2328 = vmatpush2.msra.mxu0 0.0
          %2329 = vmatprep.subr.mxu0 0.0
          %2330 = vmatpush2.msra.mxu0 0.0
          %2331 = vmatprep.subr.mxu0 0.0
          %2332 = vmatpush2.msra.mxu0 0.0
          %2333 = vmatprep.subr.mxu0 0.0
          %2334 = vmatpush2.msra.mxu0 0.0
          %2335 = vmatprep.subr.mxu0 0.0
          %2336 = vmatpush2.msra.mxu0 0.0
          %2337 = vmatprep.subr.mxu0 0.0
          %2338 = vmatpush2.msra.mxu0 0.0
          %2339 = vmatprep.subr.mxu0 0.0
          %2340 = vmatpush2.msra.mxu0 0.0
          %2341 = vmatprep.subr.mxu0 0.0
          %2342 = vmatpush2.msra.mxu0 0.0
          %2343 = vmatprep.subr.mxu0 0.0
          %2344 = vmatpush2.msra.mxu0 0.0
          %2345 = vmatprep.subr.mxu0 0.0
          %2346 = vmatpush2.msra.mxu0 0.0
          %2347 = vmatprep.mubr.f32.mxu0 0.0
          %v2348 = vand.u32 %v1729, 4294901760
          %v2349 = vsub.f32 %v1729, %v2348
          %v2350 = vand.u32 %v2349, 4294901760
          %2351 = vmatmul.mubr.f32.gmra.mxu0 %v2350
          %v2352 = vpop.f32.mrf.mxu0
          %v2353 = vadd.f32 %v2247, %v2352
          %v2354 = vpop.f32.mrf.mxu0
          %v2355 = vadd.f32 %v2249, %v2354
          %2356 = vdwg.mxu0
          %v2357 = vand.u32 %v1761, 4294901760
          %v2358 = vsub.f32 %v1761, %v2357
          %v2359 = vand.u32 %v2358, 4294901760
          %2360 = vmatprep.subr.mxu0 %v2359
          %v2361 = vand.u32 %v1760, 4294901760
          %v2362 = vsub.f32 %v1760, %v2361
          %v2363 = vand.u32 %v2362, 4294901760
          %2364 = vmatpush1.msra.mxu0 %v2363
          %v2365 = vand.u32 %v1759, 4294901760
          %v2366 = vsub.f32 %v1759, %v2365
          %v2367 = vand.u32 %v2366, 4294901760
          %2368 = vmatprep.subr.mxu0 %v2367
          %v2369 = vand.u32 %v1758, 4294901760
          %v2370 = vsub.f32 %v1758, %v2369
          %v2371 = vand.u32 %v2370, 4294901760
          %2372 = vmatpush1.msra.mxu0 %v2371
          %v2373 = vand.u32 %v1757, 4294901760
          %v2374 = vsub.f32 %v1757, %v2373
          %v2375 = vand.u32 %v2374, 4294901760
          %2376 = vmatprep.subr.mxu0 %v2375
          %v2377 = vand.u32 %v1756, 4294901760
          %v2378 = vsub.f32 %v1756, %v2377
          %v2379 = vand.u32 %v2378, 4294901760
          %2380 = vmatpush1.msra.mxu0 %v2379
          %v2381 = vand.u32 %v1755, 4294901760
          %v2382 = vsub.f32 %v1755, %v2381
          %v2383 = vand.u32 %v2382, 4294901760
          %2384 = vmatprep.subr.mxu0 %v2383
          %v2385 = vand.u32 %v1754, 4294901760
          %v2386 = vsub.f32 %v1754, %v2385
          %v2387 = vand.u32 %v2386, 4294901760
          %2388 = vmatpush1.msra.mxu0 %v2387
          %v2389 = vand.u32 %v1753, 4294901760
          %v2390 = vsub.f32 %v1753, %v2389
          %v2391 = vand.u32 %v2390, 4294901760
          %2392 = vmatprep.subr.mxu0 %v2391
          %v2393 = vand.u32 %v1752, 4294901760
          %v2394 = vsub.f32 %v1752, %v2393
          %v2395 = vand.u32 %v2394, 4294901760
          %2396 = vmatpush1.msra.mxu0 %v2395
          %v2397 = vand.u32 %v1751, 4294901760
          %v2398 = vsub.f32 %v1751, %v2397
          %v2399 = vand.u32 %v2398, 4294901760
          %2400 = vmatprep.subr.mxu0 %v2399
          %v2401 = vand.u32 %v1750, 4294901760
          %v2402 = vsub.f32 %v1750, %v2401
          %v2403 = vand.u32 %v2402, 4294901760
          %2404 = vmatpush1.msra.mxu0 %v2403
          %v2405 = vand.u32 %v1749, 4294901760
          %v2406 = vsub.f32 %v1749, %v2405
          %v2407 = vand.u32 %v2406, 4294901760
          %2408 = vmatprep.subr.mxu0 %v2407
          %v2409 = vand.u32 %v1748, 4294901760
          %v2410 = vsub.f32 %v1748, %v2409
          %v2411 = vand.u32 %v2410, 4294901760
          %2412 = vmatpush1.msra.mxu0 %v2411
          %v2413 = vand.u32 %v1747, 4294901760
          %v2414 = vsub.f32 %v1747, %v2413
          %v2415 = vand.u32 %v2414, 4294901760
          %2416 = vmatprep.subr.mxu0 %v2415
          %v2417 = vand.u32 %v1746, 4294901760
          %v2418 = vsub.f32 %v1746, %v2417
          %v2419 = vand.u32 %v2418, 4294901760
          %2420 = vmatpush1.msra.mxu0 %v2419
          %v2421 = vand.u32 %v1745, 4294901760
          %v2422 = vsub.f32 %v1745, %v2421
          %v2423 = vand.u32 %v2422, 4294901760
          %2424 = vmatprep.subr.mxu0 %v2423
          %v2425 = vand.u32 %v1744, 4294901760
          %v2426 = vsub.f32 %v1744, %v2425
          %v2427 = vand.u32 %v2426, 4294901760
          %2428 = vmatpush1.msra.mxu0 %v2427
          %v2429 = vand.u32 %v1743, 4294901760
          %v2430 = vsub.f32 %v1743, %v2429
          %v2431 = vand.u32 %v2430, 4294901760
          %2432 = vmatprep.subr.mxu0 %v2431
          %v2433 = vand.u32 %v1742, 4294901760
          %v2434 = vsub.f32 %v1742, %v2433
          %v2435 = vand.u32 %v2434, 4294901760
          %2436 = vmatpush1.msra.mxu0 %v2435
          %v2437 = vand.u32 %v1741, 4294901760
          %v2438 = vsub.f32 %v1741, %v2437
          %v2439 = vand.u32 %v2438, 4294901760
          %2440 = vmatprep.subr.mxu0 %v2439
          %v2441 = vand.u32 %v1740, 4294901760
          %v2442 = vsub.f32 %v1740, %v2441
          %v2443 = vand.u32 %v2442, 4294901760
          %2444 = vmatpush1.msra.mxu0 %v2443
          %v2445 = vand.u32 %v1739, 4294901760
          %v2446 = vsub.f32 %v1739, %v2445
          %v2447 = vand.u32 %v2446, 4294901760
          %2448 = vmatprep.subr.mxu0 %v2447
          %v2449 = vand.u32 %v1738, 4294901760
          %v2450 = vsub.f32 %v1738, %v2449
          %v2451 = vand.u32 %v2450, 4294901760
          %2452 = vmatpush1.msra.mxu0 %v2451
          %v2453 = vand.u32 %v1737, 4294901760
          %v2454 = vsub.f32 %v1737, %v2453
          %v2455 = vand.u32 %v2454, 4294901760
          %2456 = vmatprep.subr.mxu0 %v2455
          %v2457 = vand.u32 %v1736, 4294901760
          %v2458 = vsub.f32 %v1736, %v2457
          %v2459 = vand.u32 %v2458, 4294901760
          %2460 = vmatpush1.msra.mxu0 %v2459
          %v2461 = vand.u32 %v1735, 4294901760
          %v2462 = vsub.f32 %v1735, %v2461
          %v2463 = vand.u32 %v2462, 4294901760
          %2464 = vmatprep.subr.mxu0 %v2463
          %v2465 = vand.u32 %v1734, 4294901760
          %v2466 = vsub.f32 %v1734, %v2465
          %v2467 = vand.u32 %v2466, 4294901760
          %2468 = vmatpush1.msra.mxu0 %v2467
          %v2469 = vand.u32 %v1733, 4294901760
          %v2470 = vsub.f32 %v1733, %v2469
          %v2471 = vand.u32 %v2470, 4294901760
          %2472 = vmatprep.subr.mxu0 %v2471
          %v2473 = vand.u32 %v1732, 4294901760
          %v2474 = vsub.f32 %v1732, %v2473
          %v2475 = vand.u32 %v2474, 4294901760
          %2476 = vmatpush1.msra.mxu0 %v2475
          %v2477 = vand.u32 %v1731, 4294901760
          %v2478 = vsub.f32 %v1731, %v2477
          %v2479 = vand.u32 %v2478, 4294901760
          %2480 = vmatprep.subr.mxu0 %v2479
          %v2481 = vand.u32 %v1730, 4294901760
          %v2482 = vsub.f32 %v1730, %v2481
          %v2483 = vand.u32 %v2482, 4294901760
          %2484 = vmatpush1.msra.mxu0 %v2483
          %2485 = vmatprep.subr.mxu0 0.0
          %2486 = vmatpush2.msra.mxu0 0.0
          %2487 = vmatprep.subr.mxu0 0.0
          %2488 = vmatpush2.msra.mxu0 0.0
          %2489 = vmatprep.subr.mxu0 0.0
          %2490 = vmatpush2.msra.mxu0 0.0
          %2491 = vmatprep.subr.mxu0 0.0
          %2492 = vmatpush2.msra.mxu0 0.0
          %2493 = vmatprep.subr.mxu0 0.0
          %2494 = vmatpush2.msra.mxu0 0.0
          %2495 = vmatprep.subr.mxu0 0.0
          %2496 = vmatpush2.msra.mxu0 0.0
          %2497 = vmatprep.subr.mxu0 0.0
          %2498 = vmatpush2.msra.mxu0 0.0
          %2499 = vmatprep.subr.mxu0 0.0
          %2500 = vmatpush2.msra.mxu0 0.0
          %2501 = vmatprep.subr.mxu0 0.0
          %2502 = vmatpush2.msra.mxu0 0.0
          %2503 = vmatprep.subr.mxu0 0.0
          %2504 = vmatpush2.msra.mxu0 0.0
          %2505 = vmatprep.subr.mxu0 0.0
          %2506 = vmatpush2.msra.mxu0 0.0
          %2507 = vmatprep.subr.mxu0 0.0
          %2508 = vmatpush2.msra.mxu0 0.0
          %2509 = vmatprep.subr.mxu0 0.0
          %2510 = vmatpush2.msra.mxu0 0.0
          %2511 = vmatprep.subr.mxu0 0.0
          %2512 = vmatpush2.msra.mxu0 0.0
          %2513 = vmatprep.subr.mxu0 0.0
          %2514 = vmatpush2.msra.mxu0 0.0
          %2515 = vmatprep.subr.mxu0 0.0
          %2516 = vmatpush2.msra.mxu0 0.0
          %2517 = vmatprep.mubr.f32.mxu0 0.0
          %v2518 = vand.u32 %v1729, 4294901760
          %2519 = vmatmul.mubr.f32.gmra.mxu0 %v2518
          %v2520 = vpop.f32.mrf.mxu0
          %v2521 = vadd.f32 %v2353, %v2520
          %v2522 = vpop.f32.mrf.mxu0
          %v2523 = vadd.f32 %v2355, %v2522
          %2524 = vdwg.mxu0
          %v2525 = vand.u32 %v1761, 4294901760
          %2526 = vmatprep.subr.mxu0 %v2525
          %v2527 = vand.u32 %v1760, 4294901760
          %2528 = vmatpush1.msra.mxu0 %v2527
          %v2529 = vand.u32 %v1759, 4294901760
          %2530 = vmatprep.subr.mxu0 %v2529
          %v2531 = vand.u32 %v1758, 4294901760
          %2532 = vmatpush1.msra.mxu0 %v2531
          %v2533 = vand.u32 %v1757, 4294901760
          %2534 = vmatprep.subr.mxu0 %v2533
          %v2535 = vand.u32 %v1756, 4294901760
          %2536 = vmatpush1.msra.mxu0 %v2535
          %v2537 = vand.u32 %v1755, 4294901760
          %2538 = vmatprep.subr.mxu0 %v2537
          %v2539 = vand.u32 %v1754, 4294901760
          %2540 = vmatpush1.msra.mxu0 %v2539
          %v2541 = vand.u32 %v1753, 4294901760
          %2542 = vmatprep.subr.mxu0 %v2541
          %v2543 = vand.u32 %v1752, 4294901760
          %2544 = vmatpush1.msra.mxu0 %v2543
          %v2545 = vand.u32 %v1751, 4294901760
          %2546 = vmatprep.subr.mxu0 %v2545
          %v2547 = vand.u32 %v1750, 4294901760
          %2548 = vmatpush1.msra.mxu0 %v2547
          %v2549 = vand.u32 %v1749, 4294901760
          %2550 = vmatprep.subr.mxu0 %v2549
          %v2551 = vand.u32 %v1748, 4294901760
          %2552 = vmatpush1.msra.mxu0 %v2551
          %v2553 = vand.u32 %v1747, 4294901760
          %2554 = vmatprep.subr.mxu0 %v2553
          %v2555 = vand.u32 %v1746, 4294901760
          %2556 = vmatpush1.msra.mxu0 %v2555
          %v2557 = vand.u32 %v1745, 4294901760
          %2558 = vmatprep.subr.mxu0 %v2557
          %v2559 = vand.u32 %v1744, 4294901760
          %2560 = vmatpush1.msra.mxu0 %v2559
          %v2561 = vand.u32 %v1743, 4294901760
          %2562 = vmatprep.subr.mxu0 %v2561
          %v2563 = vand.u32 %v1742, 4294901760
          %2564 = vmatpush1.msra.mxu0 %v2563
          %v2565 = vand.u32 %v1741, 4294901760
          %2566 = vmatprep.subr.mxu0 %v2565
          %v2567 = vand.u32 %v1740, 4294901760
          %2568 = vmatpush1.msra.mxu0 %v2567
          %v2569 = vand.u32 %v1739, 4294901760
          %2570 = vmatprep.subr.mxu0 %v2569
          %v2571 = vand.u32 %v1738, 4294901760
          %2572 = vmatpush1.msra.mxu0 %v2571
          %v2573 = vand.u32 %v1737, 4294901760
          %2574 = vmatprep.subr.mxu0 %v2573
          %v2575 = vand.u32 %v1736, 4294901760
          %2576 = vmatpush1.msra.mxu0 %v2575
          %v2577 = vand.u32 %v1735, 4294901760
          %2578 = vmatprep.subr.mxu0 %v2577
          %v2579 = vand.u32 %v1734, 4294901760
          %2580 = vmatpush1.msra.mxu0 %v2579
          %v2581 = vand.u32 %v1733, 4294901760
          %2582 = vmatprep.subr.mxu0 %v2581
          %v2583 = vand.u32 %v1732, 4294901760
          %2584 = vmatpush1.msra.mxu0 %v2583
          %v2585 = vand.u32 %v1731, 4294901760
          %2586 = vmatprep.subr.mxu0 %v2585
          %v2587 = vand.u32 %v1730, 4294901760
          %2588 = vmatpush1.msra.mxu0 %v2587
          %2589 = vmatprep.subr.mxu0 0.0
          %2590 = vmatpush2.msra.mxu0 0.0
          %2591 = vmatprep.subr.mxu0 0.0
          %2592 = vmatpush2.msra.mxu0 0.0
          %2593 = vmatprep.subr.mxu0 0.0
          %2594 = vmatpush2.msra.mxu0 0.0
          %2595 = vmatprep.subr.mxu0 0.0
          %2596 = vmatpush2.msra.mxu0 0.0
          %2597 = vmatprep.subr.mxu0 0.0
          %2598 = vmatpush2.msra.mxu0 0.0
          %2599 = vmatprep.subr.mxu0 0.0
          %2600 = vmatpush2.msra.mxu0 0.0
          %2601 = vmatprep.subr.mxu0 0.0
          %2602 = vmatpush2.msra.mxu0 0.0
          %2603 = vmatprep.subr.mxu0 0.0
          %2604 = vmatpush2.msra.mxu0 0.0
          %2605 = vmatprep.subr.mxu0 0.0
          %2606 = vmatpush2.msra.mxu0 0.0
          %2607 = vmatprep.subr.mxu0 0.0
          %2608 = vmatpush2.msra.mxu0 0.0
          %2609 = vmatprep.subr.mxu0 0.0
          %2610 = vmatpush2.msra.mxu0 0.0
          %2611 = vmatprep.subr.mxu0 0.0
          %2612 = vmatpush2.msra.mxu0 0.0
          %2613 = vmatprep.subr.mxu0 0.0
          %2614 = vmatpush2.msra.mxu0 0.0
          %2615 = vmatprep.subr.mxu0 0.0
          %2616 = vmatpush2.msra.mxu0 0.0
          %2617 = vmatprep.subr.mxu0 0.0
          %2618 = vmatpush2.msra.mxu0 0.0
          %2619 = vmatprep.subr.mxu0 0.0
          %2620 = vmatpush2.msra.mxu0 0.0
          %2621 = vmatprep.mubr.f32.mxu0 0.0
          %v2622 = vand.u32 %v1729, 4294901760
          %2623 = vmatmul.mubr.f32.gmra.mxu0 %v2622
          %v2624 = vpop.f32.mrf.mxu0
          %v2625 = vadd.f32 %v2521, %v2624
          %v2626 = vpop.f32.mrf.mxu0
          %v2627 = vadd.f32 %v2523, %v2626
          %2628 = vdwg.mxu0
          %v2629 = vlaneseq
          %v2630 = vshrl.u32 %v2629, 7
          %v2631 = vsub.s32 0, %v2630
          %v2632 = vrot.slane %v2625, %v2631
          %v2633 = vlaneseq
          %v2634 = vshrl.u32 %v2633, 7
          %v2635 = vsub.s32 0, %v2634
          %v2636 = vrot.slane %v2627, %v2635
          %v2637 = vsub.f32 %v2625, %v2632
          %v2638 = vsub.f32 %v2627, %v2636
          %v2639 = vrot.slane %v2637, 4
          %v2640 = vadd.f32 %v2637, %v2639
          %v2641 = vrot.slane %v2640, 2
          %v2642 = vadd.f32 %v2640, %v2641
          %v2643 = vrot.slane %v2642, 1
          %v2644 = vadd.f32 %v2642, %v2643
          %v2645 = vrot.slane %v2638, 4
          %v2646 = vadd.f32 %v2638, %v2645
          %v2647 = vrot.slane %v2646, 2
          %v2648 = vadd.f32 %v2646, %v2647
          %v2649 = vrot.slane %v2648, 1
          %v2650 = vadd.f32 %v2648, %v2649
          %v2651 = vmul.f32 %v2637, %v2637
          %v2652 = vmul.f32 %v2638, %v2638
          %v2653 = vrot.slane %v2651, 4
          %v2654 = vadd.f32 %v2651, %v2653
          %v2655 = vrot.slane %v2654, 2
          %v2656 = vadd.f32 %v2654, %v2655
          %v2657 = vrot.slane %v2656, 1
          %v2658 = vadd.f32 %v2656, %v2657
          %v2659 = vrot.slane %v2652, 4
          %v2660 = vadd.f32 %v2652, %v2659
          %v2661 = vrot.slane %v2660, 2
          %v2662 = vadd.f32 %v2660, %v2661
          %v2663 = vrot.slane %v2662, 1
          %v2664 = vadd.f32 %v2662, %v2663
          %v2665 = vmul.f32 %v2644, 0.125
          %v2666 = vmul.f32 %v2650, 0.125
          %v2667 = vmul.f32 %v2658, 0.125
          %v2668 = vmul.f32 %v2664, 0.125
          %v2669 = vmul.f32 %v2665, %v2665
          %v2670 = vmul.f32 %v2666, %v2666
          %v2671 = vsub.f32 %v2667, %v2669
          %v2672 = vsub.f32 %v2668, %v2670
          %v2673 = vsub.f32 %v2637, %v2665
          %v2674 = vsub.f32 %v2638, %v2666
          %v2675 = vadd.f32 %v2671, 1e-05
          %v2676 = vadd.f32 %v2672, 1e-05
          %v2677 = vrsqrt.pop %v2675
          %v2678 = vrsqrt.pop %v2676
          %v2679 = vmul.f32 %v2673, %v2677
          %v2680 = vmul.f32 %v2674, %v2678
          %v2681 = vld [vmem:[%s688] sm:$0x3]
          %v2683 = vlaneseq
          %v2684 = vshrl.u32 %v2683, 7
          %v2685 = vsub.s32 0, %v2684
          %v2686 = vrot.slane %v2681, %v2685
          %v2687 = vlaneseq
          %v2688 = vshrl.u32 %v2687, 7
          %v2689 = vsub.s32 1, %v2688
          %v2690 = vrot.slane %v2681, %v2689
          %v2693 = vmul.f32 %v2679, %v2686
          %v2694 = vmul.f32 %v2680, %v2690
          %v2695 = vld [vmem:[%s692] sm:$0x3]
          %v2697 = vlaneseq
          %v2698 = vshrl.u32 %v2697, 7
          %v2699 = vsub.s32 0, %v2698
          %v2700 = vrot.slane %v2695, %v2699
          %v2701 = vlaneseq
          %v2702 = vshrl.u32 %v2701, 7
          %v2703 = vsub.s32 1, %v2702
          %v2704 = vrot.slane %v2695, %v2703
          %v2707 = vadd.f32 %v2693, %v2700
          %v2708 = vadd.f32 %v2694, %v2704
          %v2709 = vmax.f32 %v2707, 0.0
          %v2710 = vmax.f32 %v2708, 0.0
          %v2711 = vld [vmem:[%s583] sm:$0xff]
          %v2712 = vld [vmem:[%s583 + $0x8] sm:$0xff]
          %v2713 = vld [vmem:[%s583 + $0x10] sm:$0xff]
          %v2714 = vld [vmem:[%s583 + $0x18] sm:$0xff]
          %v2715 = vld [vmem:[%s583 + $0x20] sm:$0xff]
          %v2716 = vld [vmem:[%s583 + $0x28] sm:$0xff]
          %v2717 = vld [vmem:[%s583 + $0x30] sm:$0xff]
          %v2718 = vld [vmem:[%s583 + $0x38] sm:$0xff]
          %v2719 = vld [vmem:[%s583 + $0x40] sm:$0xff]
          %v2720 = vld [vmem:[%s583 + $0x48] sm:$0xff]
          %v2721 = vld [vmem:[%s583 + $0x50] sm:$0xff]
          %v2722 = vld [vmem:[%s583 + $0x58] sm:$0xff]
          %v2723 = vld [vmem:[%s583 + $0x60] sm:$0xff]
          %v2724 = vld [vmem:[%s583 + $0x68] sm:$0xff]
          %v2725 = vld [vmem:[%s583 + $0x70] sm:$0xff]
          %v2726 = vld [vmem:[%s583 + $0x78] sm:$0xff]
          %v2727 = vld [vmem:[%s583 + $0x80] sm:$0xff]
          %v2728 = vld [vmem:[%s583 + $0x88] sm:$0xff]
          %v2729 = vld [vmem:[%s583 + $0x90] sm:$0xff]
          %v2730 = vld [vmem:[%s583 + $0x98] sm:$0xff]
          %v2731 = vld [vmem:[%s583 + $0xa0] sm:$0xff]
          %v2732 = vld [vmem:[%s583 + $0xa8] sm:$0xff]
          %v2733 = vld [vmem:[%s583 + $0xb0] sm:$0xff]
          %v2734 = vld [vmem:[%s583 + $0xb8] sm:$0xff]
          %v2735 = vld [vmem:[%s583 + $0xc0] sm:$0xff]
          %v2736 = vld [vmem:[%s583 + $0xc8] sm:$0xff]
          %v2737 = vld [vmem:[%s583 + $0xd0] sm:$0xff]
          %v2738 = vld [vmem:[%s583 + $0xd8] sm:$0xff]
          %v2739 = vld [vmem:[%s583 + $0xe0] sm:$0xff]
          %v2740 = vld [vmem:[%s583 + $0xe8] sm:$0xff]
          %v2741 = vld [vmem:[%s583 + $0xf0] sm:$0xff]
          %v2742 = vld [vmem:[%s583 + $0xf8] sm:$0xff]
          %v2743 = vld [vmem:[%s695] sm:$0x1]
          %v2745 = vlaneseq
          %v2746 = vshrl.u32 %v2745, 7
          %v2747 = vsub.s32 0, %v2746
          %v2748 = vrot.slane %v2743, %v2747
          %2750 = vmatprep.subr.mxu0 0.0
          %v2751 = vand.u32 %v2726, 4294901760
          %2752 = vmatpush1.msra.mxu0 %v2751
          %2753 = vmatprep.subr.mxu0 0.0
          %v2754 = vand.u32 %v2725, 4294901760
          %2755 = vmatpush1.msra.mxu0 %v2754
          %2756 = vmatprep.subr.mxu0 0.0
          %v2757 = vand.u32 %v2724, 4294901760
          %2758 = vmatpush1.msra.mxu0 %v2757
          %2759 = vmatprep.subr.mxu0 0.0
          %v2760 = vand.u32 %v2723, 4294901760
          %2761 = vmatpush1.msra.mxu0 %v2760
          %2762 = vmatprep.subr.mxu0 0.0
          %v2763 = vand.u32 %v2722, 4294901760
          %2764 = vmatpush1.msra.mxu0 %v2763
          %2765 = vmatprep.subr.mxu0 0.0
          %v2766 = vand.u32 %v2721, 4294901760
          %2767 = vmatpush1.msra.mxu0 %v2766
          %2768 = vmatprep.subr.mxu0 0.0
          %v2769 = vand.u32 %v2720, 4294901760
          %2770 = vmatpush1.msra.mxu0 %v2769
          %2771 = vmatprep.subr.mxu0 0.0
          %v2772 = vand.u32 %v2719, 4294901760
          %2773 = vmatpush1.msra.mxu0 %v2772
          %2774 = vmatprep.subr.mxu0 0.0
          %v2775 = vand.u32 %v2718, 4294901760
          %2776 = vmatpush1.msra.mxu0 %v2775
          %2777 = vmatprep.subr.mxu0 0.0
          %v2778 = vand.u32 %v2717, 4294901760
          %2779 = vmatpush1.msra.mxu0 %v2778
          %2780 = vmatprep.subr.mxu0 0.0
          %v2781 = vand.u32 %v2716, 4294901760
          %2782 = vmatpush1.msra.mxu0 %v2781
          %2783 = vmatprep.subr.mxu0 0.0
          %v2784 = vand.u32 %v2715, 4294901760
          %2785 = vmatpush1.msra.mxu0 %v2784
          %2786 = vmatprep.subr.mxu0 0.0
          %v2787 = vand.u32 %v2714, 4294901760
          %2788 = vmatpush1.msra.mxu0 %v2787
          %2789 = vmatprep.subr.mxu0 0.0
          %v2790 = vand.u32 %v2713, 4294901760
          %2791 = vmatpush1.msra.mxu0 %v2790
          %2792 = vmatprep.subr.mxu0 0.0
          %v2793 = vand.u32 %v2712, 4294901760
          %2794 = vmatpush1.msra.mxu0 %v2793
          %2795 = vmatprep.subr.mxu0 0.0
          %v2796 = vand.u32 %v2711, 4294901760
          %2797 = vmatpush1.msra.mxu0 %v2796
          %2798 = vmatprep.subr.mxu0 0.0
          %v2799 = vand.u32 %v2742, 4294901760
          %2800 = vmatpush2.msra.mxu0 %v2799
          %2801 = vmatprep.subr.mxu0 0.0
          %v2802 = vand.u32 %v2741, 4294901760
          %2803 = vmatpush2.msra.mxu0 %v2802
          %2804 = vmatprep.subr.mxu0 0.0
          %v2805 = vand.u32 %v2740, 4294901760
          %2806 = vmatpush2.msra.mxu0 %v2805
          %2807 = vmatprep.subr.mxu0 0.0
          %v2808 = vand.u32 %v2739, 4294901760
          %2809 = vmatpush2.msra.mxu0 %v2808
          %2810 = vmatprep.subr.mxu0 0.0
          %v2811 = vand.u32 %v2738, 4294901760
          %2812 = vmatpush2.msra.mxu0 %v2811
          %2813 = vmatprep.subr.mxu0 0.0
          %v2814 = vand.u32 %v2737, 4294901760
          %2815 = vmatpush2.msra.mxu0 %v2814
          %2816 = vmatprep.subr.mxu0 0.0
          %v2817 = vand.u32 %v2736, 4294901760
          %2818 = vmatpush2.msra.mxu0 %v2817
          %2819 = vmatprep.subr.mxu0 0.0
          %v2820 = vand.u32 %v2735, 4294901760
          %2821 = vmatpush2.msra.mxu0 %v2820
          %2822 = vmatprep.subr.mxu0 0.0
          %v2823 = vand.u32 %v2734, 4294901760
          %2824 = vmatpush2.msra.mxu0 %v2823
          %2825 = vmatprep.subr.mxu0 0.0
          %v2826 = vand.u32 %v2733, 4294901760
          %2827 = vmatpush2.msra.mxu0 %v2826
          %2828 = vmatprep.subr.mxu0 0.0
          %v2829 = vand.u32 %v2732, 4294901760
          %2830 = vmatpush2.msra.mxu0 %v2829
          %2831 = vmatprep.subr.mxu0 0.0
          %v2832 = vand.u32 %v2731, 4294901760
          %2833 = vmatpush2.msra.mxu0 %v2832
          %2834 = vmatprep.subr.mxu0 0.0
          %v2835 = vand.u32 %v2730, 4294901760
          %2836 = vmatpush2.msra.mxu0 %v2835
          %2837 = vmatprep.subr.mxu0 0.0
          %v2838 = vand.u32 %v2729, 4294901760
          %2839 = vmatpush2.msra.mxu0 %v2838
          %2840 = vmatprep.subr.mxu0 0.0
          %v2841 = vand.u32 %v2728, 4294901760
          %2842 = vmatpush2.msra.mxu0 %v2841
          %2843 = vmatprep.subr.mxu0 0.0
          %v2844 = vand.u32 %v2727, 4294901760
          %2845 = vmatpush2.msra.mxu0 %v2844
          %v2846 = vand.u32 %v2710, 4294901760
          %v2847 = vsub.f32 %v2710, %v2846
          %v2848 = vand.u32 %v2847, 4294901760
          %v2849 = vsub.f32 %v2847, %v2848
          %v2850 = vand.u32 %v2849, 4294901760
          %2851 = vmatprep.mubr.f32.mxu0 %v2850
          %v2852 = vand.u32 %v2709, 4294901760
          %v2853 = vsub.f32 %v2709, %v2852
          %v2854 = vand.u32 %v2853, 4294901760
          %v2855 = vsub.f32 %v2853, %v2854
          %v2856 = vand.u32 %v2855, 4294901760
          %2857 = vmatmul.mubr.f32.gmra.mxu0 %v2856
          %v2858 = vpop.f32.mrf.mxu0
          %v2859 = vadd.f32 %v2748, %v2858
          %v2860 = vpop.f32.mrf.mxu0
          %2861 = vdwg.mxu0
          %2862 = vmatprep.subr.mxu0 0.0
          %v2863 = vand.u32 %v2726, 4294901760
          %v2864 = vsub.f32 %v2726, %v2863
          %v2865 = vand.u32 %v2864, 4294901760
          %v2866 = vsub.f32 %v2864, %v2865
          %v2867 = vand.u32 %v2866, 4294901760
          %2868 = vmatpush1.msra.mxu0 %v2867
          %2869 = vmatprep.subr.mxu0 0.0
          %v2870 = vand.u32 %v2725, 4294901760
          %v2871 = vsub.f32 %v2725, %v2870
          %v2872 = vand.u32 %v2871, 4294901760
          %v2873 = vsub.f32 %v2871, %v2872
          %v2874 = vand.u32 %v2873, 4294901760
          %2875 = vmatpush1.msra.mxu0 %v2874
          %2876 = vmatprep.subr.mxu0 0.0
          %v2877 = vand.u32 %v2724, 4294901760
          %v2878 = vsub.f32 %v2724, %v2877
          %v2879 = vand.u32 %v2878, 4294901760
          %v2880 = vsub.f32 %v2878, %v2879
          %v2881 = vand.u32 %v2880, 4294901760
          %2882 = vmatpush1.msra.mxu0 %v2881
          %2883 = vmatprep.subr.mxu0 0.0
          %v2884 = vand.u32 %v2723, 4294901760
          %v2885 = vsub.f32 %v2723, %v2884
          %v2886 = vand.u32 %v2885, 4294901760
          %v2887 = vsub.f32 %v2885, %v2886
          %v2888 = vand.u32 %v2887, 4294901760
          %2889 = vmatpush1.msra.mxu0 %v2888
          %2890 = vmatprep.subr.mxu0 0.0
          %v2891 = vand.u32 %v2722, 4294901760
          %v2892 = vsub.f32 %v2722, %v2891
          %v2893 = vand.u32 %v2892, 4294901760
          %v2894 = vsub.f32 %v2892, %v2893
          %v2895 = vand.u32 %v2894, 4294901760
          %2896 = vmatpush1.msra.mxu0 %v2895
          %2897 = vmatprep.subr.mxu0 0.0
          %v2898 = vand.u32 %v2721, 4294901760
          %v2899 = vsub.f32 %v2721, %v2898
          %v2900 = vand.u32 %v2899, 4294901760
          %v2901 = vsub.f32 %v2899, %v2900
          %v2902 = vand.u32 %v2901, 4294901760
          %2903 = vmatpush1.msra.mxu0 %v2902
          %2904 = vmatprep.subr.mxu0 0.0
          %v2905 = vand.u32 %v2720, 4294901760
          %v2906 = vsub.f32 %v2720, %v2905
          %v2907 = vand.u32 %v2906, 4294901760
          %v2908 = vsub.f32 %v2906, %v2907
          %v2909 = vand.u32 %v2908, 4294901760
          %2910 = vmatpush1.msra.mxu0 %v2909
          %2911 = vmatprep.subr.mxu0 0.0
          %v2912 = vand.u32 %v2719, 4294901760
          %v2913 = vsub.f32 %v2719, %v2912
          %v2914 = vand.u32 %v2913, 4294901760
          %v2915 = vsub.f32 %v2913, %v2914
          %v2916 = vand.u32 %v2915, 4294901760
          %2917 = vmatpush1.msra.mxu0 %v2916
          %2918 = vmatprep.subr.mxu0 0.0
          %v2919 = vand.u32 %v2718, 4294901760
          %v2920 = vsub.f32 %v2718, %v2919
          %v2921 = vand.u32 %v2920, 4294901760
          %v2922 = vsub.f32 %v2920, %v2921
          %v2923 = vand.u32 %v2922, 4294901760
          %2924 = vmatpush1.msra.mxu0 %v2923
          %2925 = vmatprep.subr.mxu0 0.0
          %v2926 = vand.u32 %v2717, 4294901760
          %v2927 = vsub.f32 %v2717, %v2926
          %v2928 = vand.u32 %v2927, 4294901760
          %v2929 = vsub.f32 %v2927, %v2928
          %v2930 = vand.u32 %v2929, 4294901760
          %2931 = vmatpush1.msra.mxu0 %v2930
          %2932 = vmatprep.subr.mxu0 0.0
          %v2933 = vand.u32 %v2716, 4294901760
          %v2934 = vsub.f32 %v2716, %v2933
          %v2935 = vand.u32 %v2934, 4294901760
          %v2936 = vsub.f32 %v2934, %v2935
          %v2937 = vand.u32 %v2936, 4294901760
          %2938 = vmatpush1.msra.mxu0 %v2937
          %2939 = vmatprep.subr.mxu0 0.0
          %v2940 = vand.u32 %v2715, 4294901760
          %v2941 = vsub.f32 %v2715, %v2940
          %v2942 = vand.u32 %v2941, 4294901760
          %v2943 = vsub.f32 %v2941, %v2942
          %v2944 = vand.u32 %v2943, 4294901760
          %2945 = vmatpush1.msra.mxu0 %v2944
          %2946 = vmatprep.subr.mxu0 0.0
          %v2947 = vand.u32 %v2714, 4294901760
          %v2948 = vsub.f32 %v2714, %v2947
          %v2949 = vand.u32 %v2948, 4294901760
          %v2950 = vsub.f32 %v2948, %v2949
          %v2951 = vand.u32 %v2950, 4294901760
          %2952 = vmatpush1.msra.mxu0 %v2951
          %2953 = vmatprep.subr.mxu0 0.0
          %v2954 = vand.u32 %v2713, 4294901760
          %v2955 = vsub.f32 %v2713, %v2954
          %v2956 = vand.u32 %v2955, 4294901760
          %v2957 = vsub.f32 %v2955, %v2956
          %v2958 = vand.u32 %v2957, 4294901760
          %2959 = vmatpush1.msra.mxu0 %v2958
          %2960 = vmatprep.subr.mxu0 0.0
          %v2961 = vand.u32 %v2712, 4294901760
          %v2962 = vsub.f32 %v2712, %v2961
          %v2963 = vand.u32 %v2962, 4294901760
          %v2964 = vsub.f32 %v2962, %v2963
          %v2965 = vand.u32 %v2964, 4294901760
          %2966 = vmatpush1.msra.mxu0 %v2965
          %2967 = vmatprep.subr.mxu0 0.0
          %v2968 = vand.u32 %v2711, 4294901760
          %v2969 = vsub.f32 %v2711, %v2968
          %v2970 = vand.u32 %v2969, 4294901760
          %v2971 = vsub.f32 %v2969, %v2970
          %v2972 = vand.u32 %v2971, 4294901760
          %2973 = vmatpush1.msra.mxu0 %v2972
          %2974 = vmatprep.subr.mxu0 0.0
          %v2975 = vand.u32 %v2742, 4294901760
          %v2976 = vsub.f32 %v2742, %v2975
          %v2977 = vand.u32 %v2976, 4294901760
          %v2978 = vsub.f32 %v2976, %v2977
          %v2979 = vand.u32 %v2978, 4294901760
          %2980 = vmatpush2.msra.mxu0 %v2979
          %2981 = vmatprep.subr.mxu0 0.0
          %v2982 = vand.u32 %v2741, 4294901760
          %v2983 = vsub.f32 %v2741, %v2982
          %v2984 = vand.u32 %v2983, 4294901760
          %v2985 = vsub.f32 %v2983, %v2984
          %v2986 = vand.u32 %v2985, 4294901760
          %2987 = vmatpush2.msra.mxu0 %v2986
          %2988 = vmatprep.subr.mxu0 0.0
          %v2989 = vand.u32 %v2740, 4294901760
          %v2990 = vsub.f32 %v2740, %v2989
          %v2991 = vand.u32 %v2990, 4294901760
          %v2992 = vsub.f32 %v2990, %v2991
          %v2993 = vand.u32 %v2992, 4294901760
          %2994 = vmatpush2.msra.mxu0 %v2993
          %2995 = vmatprep.subr.mxu0 0.0
          %v2996 = vand.u32 %v2739, 4294901760
          %v2997 = vsub.f32 %v2739, %v2996
          %v2998 = vand.u32 %v2997, 4294901760
          %v2999 = vsub.f32 %v2997, %v2998
          %v3000 = vand.u32 %v2999, 4294901760
          %3001 = vmatpush2.msra.mxu0 %v3000
          %3002 = vmatprep.subr.mxu0 0.0
          %v3003 = vand.u32 %v2738, 4294901760
          %v3004 = vsub.f32 %v2738, %v3003
          %v3005 = vand.u32 %v3004, 4294901760
          %v3006 = vsub.f32 %v3004, %v3005
          %v3007 = vand.u32 %v3006, 4294901760
          %3008 = vmatpush2.msra.mxu0 %v3007
          %3009 = vmatprep.subr.mxu0 0.0
          %v3010 = vand.u32 %v2737, 4294901760
          %v3011 = vsub.f32 %v2737, %v3010
          %v3012 = vand.u32 %v3011, 4294901760
          %v3013 = vsub.f32 %v3011, %v3012
          %v3014 = vand.u32 %v3013, 4294901760
          %3015 = vmatpush2.msra.mxu0 %v3014
          %3016 = vmatprep.subr.mxu0 0.0
          %v3017 = vand.u32 %v2736, 4294901760
          %v3018 = vsub.f32 %v2736, %v3017
          %v3019 = vand.u32 %v3018, 4294901760
          %v3020 = vsub.f32 %v3018, %v3019
          %v3021 = vand.u32 %v3020, 4294901760
          %3022 = vmatpush2.msra.mxu0 %v3021
          %3023 = vmatprep.subr.mxu0 0.0
          %v3024 = vand.u32 %v2735, 4294901760
          %v3025 = vsub.f32 %v2735, %v3024
          %v3026 = vand.u32 %v3025, 4294901760
          %v3027 = vsub.f32 %v3025, %v3026
          %v3028 = vand.u32 %v3027, 4294901760
          %3029 = vmatpush2.msra.mxu0 %v3028
          %3030 = vmatprep.subr.mxu0 0.0
          %v3031 = vand.u32 %v2734, 4294901760
          %v3032 = vsub.f32 %v2734, %v3031
          %v3033 = vand.u32 %v3032, 4294901760
          %v3034 = vsub.f32 %v3032, %v3033
          %v3035 = vand.u32 %v3034, 4294901760
          %3036 = vmatpush2.msra.mxu0 %v3035
          %3037 = vmatprep.subr.mxu0 0.0
          %v3038 = vand.u32 %v2733, 4294901760
          %v3039 = vsub.f32 %v2733, %v3038
          %v3040 = vand.u32 %v3039, 4294901760
          %v3041 = vsub.f32 %v3039, %v3040
          %v3042 = vand.u32 %v3041, 4294901760
          %3043 = vmatpush2.msra.mxu0 %v3042
          %3044 = vmatprep.subr.mxu0 0.0
          %v3045 = vand.u32 %v2732, 4294901760
          %v3046 = vsub.f32 %v2732, %v3045
          %v3047 = vand.u32 %v3046, 4294901760
          %v3048 = vsub.f32 %v3046, %v3047
          %v3049 = vand.u32 %v3048, 4294901760
          %3050 = vmatpush2.msra.mxu0 %v3049
          %3051 = vmatprep.subr.mxu0 0.0
          %v3052 = vand.u32 %v2731, 4294901760
          %v3053 = vsub.f32 %v2731, %v3052
          %v3054 = vand.u32 %v3053, 4294901760
          %v3055 = vsub.f32 %v3053, %v3054
          %v3056 = vand.u32 %v3055, 4294901760
          %3057 = vmatpush2.msra.mxu0 %v3056
          %3058 = vmatprep.subr.mxu0 0.0
          %v3059 = vand.u32 %v2730, 4294901760
          %v3060 = vsub.f32 %v2730, %v3059
          %v3061 = vand.u32 %v3060, 4294901760
          %v3062 = vsub.f32 %v3060, %v3061
          %v3063 = vand.u32 %v3062, 4294901760
          %3064 = vmatpush2.msra.mxu0 %v3063
          %3065 = vmatprep.subr.mxu0 0.0
          %v3066 = vand.u32 %v2729, 4294901760
          %v3067 = vsub.f32 %v2729, %v3066
          %v3068 = vand.u32 %v3067, 4294901760
          %v3069 = vsub.f32 %v3067, %v3068
          %v3070 = vand.u32 %v3069, 4294901760
          %3071 = vmatpush2.msra.mxu0 %v3070
          %3072 = vmatprep.subr.mxu0 0.0
          %v3073 = vand.u32 %v2728, 4294901760
          %v3074 = vsub.f32 %v2728, %v3073
          %v3075 = vand.u32 %v3074, 4294901760
          %v3076 = vsub.f32 %v3074, %v3075
          %v3077 = vand.u32 %v3076, 4294901760
          %3078 = vmatpush2.msra.mxu0 %v3077
          %3079 = vmatprep.subr.mxu0 0.0
          %v3080 = vand.u32 %v2727, 4294901760
          %v3081 = vsub.f32 %v2727, %v3080
          %v3082 = vand.u32 %v3081, 4294901760
          %v3083 = vsub.f32 %v3081, %v3082
          %v3084 = vand.u32 %v3083, 4294901760
          %3085 = vmatpush2.msra.mxu0 %v3084
          %v3086 = vand.u32 %v2710, 4294901760
          %3087 = vmatprep.mubr.f32.mxu0 %v3086
          %v3088 = vand.u32 %v2709, 4294901760
          %3089 = vmatmul.mubr.f32.gmra.mxu0 %v3088
          %v3090 = vpop.f32.mrf.mxu0
          %v3091 = vadd.f32 %v2859, %v3090
          %v3092 = vpop.f32.mrf.mxu0
          %3093 = vdwg.mxu0
          %3094 = vmatprep.subr.mxu0 0.0
          %v3095 = vand.u32 %v2726, 4294901760
          %v3096 = vsub.f32 %v2726, %v3095
          %3097 = vmatpush1.msra.mxu0 %v3096
          %3098 = vmatprep.subr.mxu0 0.0
          %v3099 = vand.u32 %v2725, 4294901760
          %v3100 = vsub.f32 %v2725, %v3099
          %3101 = vmatpush1.msra.mxu0 %v3100
          %3102 = vmatprep.subr.mxu0 0.0
          %v3103 = vand.u32 %v2724, 4294901760
          %v3104 = vsub.f32 %v2724, %v3103
          %3105 = vmatpush1.msra.mxu0 %v3104
          %3106 = vmatprep.subr.mxu0 0.0
          %v3107 = vand.u32 %v2723, 4294901760
          %v3108 = vsub.f32 %v2723, %v3107
          %3109 = vmatpush1.msra.mxu0 %v3108
          %3110 = vmatprep.subr.mxu0 0.0
          %v3111 = vand.u32 %v2722, 4294901760
          %v3112 = vsub.f32 %v2722, %v3111
          %3113 = vmatpush1.msra.mxu0 %v3112
          %3114 = vmatprep.subr.mxu0 0.0
          %v3115 = vand.u32 %v2721, 4294901760
          %v3116 = vsub.f32 %v2721, %v3115
          %3117 = vmatpush1.msra.mxu0 %v3116
          %3118 = vmatprep.subr.mxu0 0.0
          %v3119 = vand.u32 %v2720, 4294901760
          %v3120 = vsub.f32 %v2720, %v3119
          %3121 = vmatpush1.msra.mxu0 %v3120
          %3122 = vmatprep.subr.mxu0 0.0
          %v3123 = vand.u32 %v2719, 4294901760
          %v3124 = vsub.f32 %v2719, %v3123
          %3125 = vmatpush1.msra.mxu0 %v3124
          %3126 = vmatprep.subr.mxu0 0.0
          %v3127 = vand.u32 %v2718, 4294901760
          %v3128 = vsub.f32 %v2718, %v3127
          %3129 = vmatpush1.msra.mxu0 %v3128
          %3130 = vmatprep.subr.mxu0 0.0
          %v3131 = vand.u32 %v2717, 4294901760
          %v3132 = vsub.f32 %v2717, %v3131
          %3133 = vmatpush1.msra.mxu0 %v3132
          %3134 = vmatprep.subr.mxu0 0.0
          %v3135 = vand.u32 %v2716, 4294901760
          %v3136 = vsub.f32 %v2716, %v3135
          %3137 = vmatpush1.msra.mxu0 %v3136
          %3138 = vmatprep.subr.mxu0 0.0
          %v3139 = vand.u32 %v2715, 4294901760
          %v3140 = vsub.f32 %v2715, %v3139
          %3141 = vmatpush1.msra.mxu0 %v3140
          %3142 = vmatprep.subr.mxu0 0.0
          %v3143 = vand.u32 %v2714, 4294901760
          %v3144 = vsub.f32 %v2714, %v3143
          %3145 = vmatpush1.msra.mxu0 %v3144
          %3146 = vmatprep.subr.mxu0 0.0
          %v3147 = vand.u32 %v2713, 4294901760
          %v3148 = vsub.f32 %v2713, %v3147
          %3149 = vmatpush1.msra.mxu0 %v3148
          %3150 = vmatprep.subr.mxu0 0.0
          %v3151 = vand.u32 %v2712, 4294901760
          %v3152 = vsub.f32 %v2712, %v3151
          %3153 = vmatpush1.msra.mxu0 %v3152
          %3154 = vmatprep.subr.mxu0 0.0
          %v3155 = vand.u32 %v2711, 4294901760
          %v3156 = vsub.f32 %v2711, %v3155
          %3157 = vmatpush1.msra.mxu0 %v3156
          %3158 = vmatprep.subr.mxu0 0.0
          %v3159 = vand.u32 %v2742, 4294901760
          %v3160 = vsub.f32 %v2742, %v3159
          %3161 = vmatpush2.msra.mxu0 %v3160
          %3162 = vmatprep.subr.mxu0 0.0
          %v3163 = vand.u32 %v2741, 4294901760
          %v3164 = vsub.f32 %v2741, %v3163
          %3165 = vmatpush2.msra.mxu0 %v3164
          %3166 = vmatprep.subr.mxu0 0.0
          %v3167 = vand.u32 %v2740, 4294901760
          %v3168 = vsub.f32 %v2740, %v3167
          %3169 = vmatpush2.msra.mxu0 %v3168
          %3170 = vmatprep.subr.mxu0 0.0
          %v3171 = vand.u32 %v2739, 4294901760
          %v3172 = vsub.f32 %v2739, %v3171
          %3173 = vmatpush2.msra.mxu0 %v3172
          %3174 = vmatprep.subr.mxu0 0.0
          %v3175 = vand.u32 %v2738, 4294901760
          %v3176 = vsub.f32 %v2738, %v3175
          %3177 = vmatpush2.msra.mxu0 %v3176
          %3178 = vmatprep.subr.mxu0 0.0
          %v3179 = vand.u32 %v2737, 4294901760
          %v3180 = vsub.f32 %v2737, %v3179
          %3181 = vmatpush2.msra.mxu0 %v3180
          %3182 = vmatprep.subr.mxu0 0.0
          %v3183 = vand.u32 %v2736, 4294901760
          %v3184 = vsub.f32 %v2736, %v3183
          %3185 = vmatpush2.msra.mxu0 %v3184
          %3186 = vmatprep.subr.mxu0 0.0
          %v3187 = vand.u32 %v2735, 4294901760
          %v3188 = vsub.f32 %v2735, %v3187
          %3189 = vmatpush2.msra.mxu0 %v3188
          %3190 = vmatprep.subr.mxu0 0.0
          %v3191 = vand.u32 %v2734, 4294901760
          %v3192 = vsub.f32 %v2734, %v3191
          %3193 = vmatpush2.msra.mxu0 %v3192
          %3194 = vmatprep.subr.mxu0 0.0
          %v3195 = vand.u32 %v2733, 4294901760
          %v3196 = vsub.f32 %v2733, %v3195
          %3197 = vmatpush2.msra.mxu0 %v3196
          %3198 = vmatprep.subr.mxu0 0.0
          %v3199 = vand.u32 %v2732, 4294901760
          %v3200 = vsub.f32 %v2732, %v3199
          %3201 = vmatpush2.msra.mxu0 %v3200
          %3202 = vmatprep.subr.mxu0 0.0
          %v3203 = vand.u32 %v2731, 4294901760
          %v3204 = vsub.f32 %v2731, %v3203
          %3205 = vmatpush2.msra.mxu0 %v3204
          %3206 = vmatprep.subr.mxu0 0.0
          %v3207 = vand.u32 %v2730, 4294901760
          %v3208 = vsub.f32 %v2730, %v3207
          %3209 = vmatpush2.msra.mxu0 %v3208
          %3210 = vmatprep.subr.mxu0 0.0
          %v3211 = vand.u32 %v2729, 4294901760
          %v3212 = vsub.f32 %v2729, %v3211
          %3213 = vmatpush2.msra.mxu0 %v3212
          %3214 = vmatprep.subr.mxu0 0.0
          %v3215 = vand.u32 %v2728, 4294901760
          %v3216 = vsub.f32 %v2728, %v3215
          %3217 = vmatpush2.msra.mxu0 %v3216
          %3218 = vmatprep.subr.mxu0 0.0
          %v3219 = vand.u32 %v2727, 4294901760
          %v3220 = vsub.f32 %v2727, %v3219
          %3221 = vmatpush2.msra.mxu0 %v3220
          %v3222 = vand.u32 %v2710, 4294901760
          %v3223 = vsub.f32 %v2710, %v3222
          %3224 = vmatprep.mubr.f32.mxu0 %v3223
          %v3225 = vand.u32 %v2709, 4294901760
          %v3226 = vsub.f32 %v2709, %v3225
          %3227 = vmatmul.mubr.f32.gmra.mxu0 %v3226
          %v3228 = vpop.f32.mrf.mxu0
          %v3229 = vadd.f32 %v3091, %v3228
          %v3230 = vpop.f32.mrf.mxu0
          %3231 = vdwg.mxu0
          %3232 = vmatprep.subr.mxu0 0.0
          %v3233 = vand.u32 %v2726, 4294901760
          %3234 = vmatpush1.msra.mxu0 %v3233
          %3235 = vmatprep.subr.mxu0 0.0
          %v3236 = vand.u32 %v2725, 4294901760
          %3237 = vmatpush1.msra.mxu0 %v3236
          %3238 = vmatprep.subr.mxu0 0.0
          %v3239 = vand.u32 %v2724, 4294901760
          %3240 = vmatpush1.msra.mxu0 %v3239
          %3241 = vmatprep.subr.mxu0 0.0
          %v3242 = vand.u32 %v2723, 4294901760
          %3243 = vmatpush1.msra.mxu0 %v3242
          %3244 = vmatprep.subr.mxu0 0.0
          %v3245 = vand.u32 %v2722, 4294901760
          %3246 = vmatpush1.msra.mxu0 %v3245
          %3247 = vmatprep.subr.mxu0 0.0
          %v3248 = vand.u32 %v2721, 4294901760
          %3249 = vmatpush1.msra.mxu0 %v3248
          %3250 = vmatprep.subr.mxu0 0.0
          %v3251 = vand.u32 %v2720, 4294901760
          %3252 = vmatpush1.msra.mxu0 %v3251
          %3253 = vmatprep.subr.mxu0 0.0
          %v3254 = vand.u32 %v2719, 4294901760
          %3255 = vmatpush1.msra.mxu0 %v3254
          %3256 = vmatprep.subr.mxu0 0.0
          %v3257 = vand.u32 %v2718, 4294901760
          %3258 = vmatpush1.msra.mxu0 %v3257
          %3259 = vmatprep.subr.mxu0 0.0
          %v3260 = vand.u32 %v2717, 4294901760
          %3261 = vmatpush1.msra.mxu0 %v3260
          %3262 = vmatprep.subr.mxu0 0.0
          %v3263 = vand.u32 %v2716, 4294901760
          %3264 = vmatpush1.msra.mxu0 %v3263
          %3265 = vmatprep.subr.mxu0 0.0
          %v3266 = vand.u32 %v2715, 4294901760
          %3267 = vmatpush1.msra.mxu0 %v3266
          %3268 = vmatprep.subr.mxu0 0.0
          %v3269 = vand.u32 %v2714, 4294901760
          %3270 = vmatpush1.msra.mxu0 %v3269
          %3271 = vmatprep.subr.mxu0 0.0
          %v3272 = vand.u32 %v2713, 4294901760
          %3273 = vmatpush1.msra.mxu0 %v3272
          %3274 = vmatprep.subr.mxu0 0.0
          %v3275 = vand.u32 %v2712, 4294901760
          %3276 = vmatpush1.msra.mxu0 %v3275
          %3277 = vmatprep.subr.mxu0 0.0
          %v3278 = vand.u32 %v2711, 4294901760
          %3279 = vmatpush1.msra.mxu0 %v3278
          %3280 = vmatprep.subr.mxu0 0.0
          %v3281 = vand.u32 %v2742, 4294901760
          %3282 = vmatpush2.msra.mxu0 %v3281
          %3283 = vmatprep.subr.mxu0 0.0
          %v3284 = vand.u32 %v2741, 4294901760
          %3285 = vmatpush2.msra.mxu0 %v3284
          %3286 = vmatprep.subr.mxu0 0.0
          %v3287 = vand.u32 %v2740, 4294901760
          %3288 = vmatpush2.msra.mxu0 %v3287
          %3289 = vmatprep.subr.mxu0 0.0
          %v3290 = vand.u32 %v2739, 4294901760
          %3291 = vmatpush2.msra.mxu0 %v3290
          %3292 = vmatprep.subr.mxu0 0.0
          %v3293 = vand.u32 %v2738, 4294901760
          %3294 = vmatpush2.msra.mxu0 %v3293
          %3295 = vmatprep.subr.mxu0 0.0
          %v3296 = vand.u32 %v2737, 4294901760
          %3297 = vmatpush2.msra.mxu0 %v3296
          %3298 = vmatprep.subr.mxu0 0.0
          %v3299 = vand.u32 %v2736, 4294901760
          %3300 = vmatpush2.msra.mxu0 %v3299
          %3301 = vmatprep.subr.mxu0 0.0
          %v3302 = vand.u32 %v2735, 4294901760
          %3303 = vmatpush2.msra.mxu0 %v3302
          %3304 = vmatprep.subr.mxu0 0.0
          %v3305 = vand.u32 %v2734, 4294901760
          %3306 = vmatpush2.msra.mxu0 %v3305
          %3307 = vmatprep.subr.mxu0 0.0
          %v3308 = vand.u32 %v2733, 4294901760
          %3309 = vmatpush2.msra.mxu0 %v3308
          %3310 = vmatprep.subr.mxu0 0.0
          %v3311 = vand.u32 %v2732, 4294901760
          %3312 = vmatpush2.msra.mxu0 %v3311
          %3313 = vmatprep.subr.mxu0 0.0
          %v3314 = vand.u32 %v2731, 4294901760
          %3315 = vmatpush2.msra.mxu0 %v3314
          %3316 = vmatprep.subr.mxu0 0.0
          %v3317 = vand.u32 %v2730, 4294901760
          %3318 = vmatpush2.msra.mxu0 %v3317
          %3319 = vmatprep.subr.mxu0 0.0
          %v3320 = vand.u32 %v2729, 4294901760
          %3321 = vmatpush2.msra.mxu0 %v3320
          %3322 = vmatprep.subr.mxu0 0.0
          %v3323 = vand.u32 %v2728, 4294901760
          %3324 = vmatpush2.msra.mxu0 %v3323
          %3325 = vmatprep.subr.mxu0 0.0
          %v3326 = vand.u32 %v2727, 4294901760
          %3327 = vmatpush2.msra.mxu0 %v3326
          %v3328 = vand.u32 %v2710, 4294901760
          %v3329 = vsub.f32 %v2710, %v3328
          %v3330 = vand.u32 %v3329, 4294901760
          %3331 = vmatprep.mubr.f32.mxu0 %v3330
          %v3332 = vand.u32 %v2709, 4294901760
          %v3333 = vsub.f32 %v2709, %v3332
          %v3334 = vand.u32 %v3333, 4294901760
          %3335 = vmatmul.mubr.f32.gmra.mxu0 %v3334
          %v3336 = vpop.f32.mrf.mxu0
          %v3337 = vadd.f32 %v3229, %v3336
          %v3338 = vpop.f32.mrf.mxu0
          %3339 = vdwg.mxu0
          %3340 = vmatprep.subr.mxu0 0.0
          %v3341 = vand.u32 %v2726, 4294901760
          %v3342 = vsub.f32 %v2726, %v3341
          %v3343 = vand.u32 %v3342, 4294901760
          %3344 = vmatpush1.msra.mxu0 %v3343
          %3345 = vmatprep.subr.mxu0 0.0
          %v3346 = vand.u32 %v2725, 4294901760
          %v3347 = vsub.f32 %v2725, %v3346
          %v3348 = vand.u32 %v3347, 4294901760
          %3349 = vmatpush1.msra.mxu0 %v3348
          %3350 = vmatprep.subr.mxu0 0.0
          %v3351 = vand.u32 %v2724, 4294901760
          %v3352 = vsub.f32 %v2724, %v3351
          %v3353 = vand.u32 %v3352, 4294901760
          %3354 = vmatpush1.msra.mxu0 %v3353
          %3355 = vmatprep.subr.mxu0 0.0
          %v3356 = vand.u32 %v2723, 4294901760
          %v3357 = vsub.f32 %v2723, %v3356
          %v3358 = vand.u32 %v3357, 4294901760
          %3359 = vmatpush1.msra.mxu0 %v3358
          %3360 = vmatprep.subr.mxu0 0.0
          %v3361 = vand.u32 %v2722, 4294901760
          %v3362 = vsub.f32 %v2722, %v3361
          %v3363 = vand.u32 %v3362, 4294901760
          %3364 = vmatpush1.msra.mxu0 %v3363
          %3365 = vmatprep.subr.mxu0 0.0
          %v3366 = vand.u32 %v2721, 4294901760
          %v3367 = vsub.f32 %v2721, %v3366
          %v3368 = vand.u32 %v3367, 4294901760
          %3369 = vmatpush1.msra.mxu0 %v3368
          %3370 = vmatprep.subr.mxu0 0.0
          %v3371 = vand.u32 %v2720, 4294901760
          %v3372 = vsub.f32 %v2720, %v3371
          %v3373 = vand.u32 %v3372, 4294901760
          %3374 = vmatpush1.msra.mxu0 %v3373
          %3375 = vmatprep.subr.mxu0 0.0
          %v3376 = vand.u32 %v2719, 4294901760
          %v3377 = vsub.f32 %v2719, %v3376
          %v3378 = vand.u32 %v3377, 4294901760
          %3379 = vmatpush1.msra.mxu0 %v3378
          %3380 = vmatprep.subr.mxu0 0.0
          %v3381 = vand.u32 %v2718, 4294901760
          %v3382 = vsub.f32 %v2718, %v3381
          %v3383 = vand.u32 %v3382, 4294901760
          %3384 = vmatpush1.msra.mxu0 %v3383
          %3385 = vmatprep.subr.mxu0 0.0
          %v3386 = vand.u32 %v2717, 4294901760
          %v3387 = vsub.f32 %v2717, %v3386
          %v3388 = vand.u32 %v3387, 4294901760
          %3389 = vmatpush1.msra.mxu0 %v3388
          %3390 = vmatprep.subr.mxu0 0.0
          %v3391 = vand.u32 %v2716, 4294901760
          %v3392 = vsub.f32 %v2716, %v3391
          %v3393 = vand.u32 %v3392, 4294901760
          %3394 = vmatpush1.msra.mxu0 %v3393
          %3395 = vmatprep.subr.mxu0 0.0
          %v3396 = vand.u32 %v2715, 4294901760
          %v3397 = vsub.f32 %v2715, %v3396
          %v3398 = vand.u32 %v3397, 4294901760
          %3399 = vmatpush1.msra.mxu0 %v3398
          %3400 = vmatprep.subr.mxu0 0.0
          %v3401 = vand.u32 %v2714, 4294901760
          %v3402 = vsub.f32 %v2714, %v3401
          %v3403 = vand.u32 %v3402, 4294901760
          %3404 = vmatpush1.msra.mxu0 %v3403
          %3405 = vmatprep.subr.mxu0 0.0
          %v3406 = vand.u32 %v2713, 4294901760
          %v3407 = vsub.f32 %v2713, %v3406
          %v3408 = vand.u32 %v3407, 4294901760
          %3409 = vmatpush1.msra.mxu0 %v3408
          %3410 = vmatprep.subr.mxu0 0.0
          %v3411 = vand.u32 %v2712, 4294901760
          %v3412 = vsub.f32 %v2712, %v3411
          %v3413 = vand.u32 %v3412, 4294901760
          %3414 = vmatpush1.msra.mxu0 %v3413
          %3415 = vmatprep.subr.mxu0 0.0
          %v3416 = vand.u32 %v2711, 4294901760
          %v3417 = vsub.f32 %v2711, %v3416
          %v3418 = vand.u32 %v3417, 4294901760
          %3419 = vmatpush1.msra.mxu0 %v3418
          %3420 = vmatprep.subr.mxu0 0.0
          %v3421 = vand.u32 %v2742, 4294901760
          %v3422 = vsub.f32 %v2742, %v3421
          %v3423 = vand.u32 %v3422, 4294901760
          %3424 = vmatpush2.msra.mxu0 %v3423
          %3425 = vmatprep.subr.mxu0 0.0
          %v3426 = vand.u32 %v2741, 4294901760
          %v3427 = vsub.f32 %v2741, %v3426
          %v3428 = vand.u32 %v3427, 4294901760
          %3429 = vmatpush2.msra.mxu0 %v3428
          %3430 = vmatprep.subr.mxu0 0.0
          %v3431 = vand.u32 %v2740, 4294901760
          %v3432 = vsub.f32 %v2740, %v3431
          %v3433 = vand.u32 %v3432, 4294901760
          %3434 = vmatpush2.msra.mxu0 %v3433
          %3435 = vmatprep.subr.mxu0 0.0
          %v3436 = vand.u32 %v2739, 4294901760
          %v3437 = vsub.f32 %v2739, %v3436
          %v3438 = vand.u32 %v3437, 4294901760
          %3439 = vmatpush2.msra.mxu0 %v3438
          %3440 = vmatprep.subr.mxu0 0.0
          %v3441 = vand.u32 %v2738, 4294901760
          %v3442 = vsub.f32 %v2738, %v3441
          %v3443 = vand.u32 %v3442, 4294901760
          %3444 = vmatpush2.msra.mxu0 %v3443
          %3445 = vmatprep.subr.mxu0 0.0
          %v3446 = vand.u32 %v2737, 4294901760
          %v3447 = vsub.f32 %v2737, %v3446
          %v3448 = vand.u32 %v3447, 4294901760
          %3449 = vmatpush2.msra.mxu0 %v3448
          %3450 = vmatprep.subr.mxu0 0.0
          %v3451 = vand.u32 %v2736, 4294901760
          %v3452 = vsub.f32 %v2736, %v3451
          %v3453 = vand.u32 %v3452, 4294901760
          %3454 = vmatpush2.msra.mxu0 %v3453
          %3455 = vmatprep.subr.mxu0 0.0
          %v3456 = vand.u32 %v2735, 4294901760
          %v3457 = vsub.f32 %v2735, %v3456
          %v3458 = vand.u32 %v3457, 4294901760
          %3459 = vmatpush2.msra.mxu0 %v3458
          %3460 = vmatprep.subr.mxu0 0.0
          %v3461 = vand.u32 %v2734, 4294901760
          %v3462 = vsub.f32 %v2734, %v3461
          %v3463 = vand.u32 %v3462, 4294901760
          %3464 = vmatpush2.msra.mxu0 %v3463
          %3465 = vmatprep.subr.mxu0 0.0
          %v3466 = vand.u32 %v2733, 4294901760
          %v3467 = vsub.f32 %v2733, %v3466
          %v3468 = vand.u32 %v3467, 4294901760
          %3469 = vmatpush2.msra.mxu0 %v3468
          %3470 = vmatprep.subr.mxu0 0.0
          %v3471 = vand.u32 %v2732, 4294901760
          %v3472 = vsub.f32 %v2732, %v3471
          %v3473 = vand.u32 %v3472, 4294901760
          %3474 = vmatpush2.msra.mxu0 %v3473
          %3475 = vmatprep.subr.mxu0 0.0
          %v3476 = vand.u32 %v2731, 4294901760
          %v3477 = vsub.f32 %v2731, %v3476
          %v3478 = vand.u32 %v3477, 4294901760
          %3479 = vmatpush2.msra.mxu0 %v3478
          %3480 = vmatprep.subr.mxu0 0.0
          %v3481 = vand.u32 %v2730, 4294901760
          %v3482 = vsub.f32 %v2730, %v3481
          %v3483 = vand.u32 %v3482, 4294901760
          %3484 = vmatpush2.msra.mxu0 %v3483
          %3485 = vmatprep.subr.mxu0 0.0
          %v3486 = vand.u32 %v2729, 4294901760
          %v3487 = vsub.f32 %v2729, %v3486
          %v3488 = vand.u32 %v3487, 4294901760
          %3489 = vmatpush2.msra.mxu0 %v3488
          %3490 = vmatprep.subr.mxu0 0.0
          %v3491 = vand.u32 %v2728, 4294901760
          %v3492 = vsub.f32 %v2728, %v3491
          %v3493 = vand.u32 %v3492, 4294901760
          %3494 = vmatpush2.msra.mxu0 %v3493
          %3495 = vmatprep.subr.mxu0 0.0
          %v3496 = vand.u32 %v2727, 4294901760
          %v3497 = vsub.f32 %v2727, %v3496
          %v3498 = vand.u32 %v3497, 4294901760
          %3499 = vmatpush2.msra.mxu0 %v3498
          %v3500 = vand.u32 %v2710, 4294901760
          %3501 = vmatprep.mubr.f32.mxu0 %v3500
          %v3502 = vand.u32 %v2709, 4294901760
          %3503 = vmatmul.mubr.f32.gmra.mxu0 %v3502
          %v3504 = vpop.f32.mrf.mxu0
          %v3505 = vadd.f32 %v3337, %v3504
          %v3506 = vpop.f32.mrf.mxu0
          %3507 = vdwg.mxu0
          %3508 = vmatprep.subr.mxu0 0.0
          %v3509 = vand.u32 %v2726, 4294901760
          %3510 = vmatpush1.msra.mxu0 %v3509
          %3511 = vmatprep.subr.mxu0 0.0
          %v3512 = vand.u32 %v2725, 4294901760
          %3513 = vmatpush1.msra.mxu0 %v3512
          %3514 = vmatprep.subr.mxu0 0.0
          %v3515 = vand.u32 %v2724, 4294901760
          %3516 = vmatpush1.msra.mxu0 %v3515
          %3517 = vmatprep.subr.mxu0 0.0
          %v3518 = vand.u32 %v2723, 4294901760
          %3519 = vmatpush1.msra.mxu0 %v3518
          %3520 = vmatprep.subr.mxu0 0.0
          %v3521 = vand.u32 %v2722, 4294901760
          %3522 = vmatpush1.msra.mxu0 %v3521
          %3523 = vmatprep.subr.mxu0 0.0
          %v3524 = vand.u32 %v2721, 4294901760
          %3525 = vmatpush1.msra.mxu0 %v3524
          %3526 = vmatprep.subr.mxu0 0.0
          %v3527 = vand.u32 %v2720, 4294901760
          %3528 = vmatpush1.msra.mxu0 %v3527
          %3529 = vmatprep.subr.mxu0 0.0
          %v3530 = vand.u32 %v2719, 4294901760
          %3531 = vmatpush1.msra.mxu0 %v3530
          %3532 = vmatprep.subr.mxu0 0.0
          %v3533 = vand.u32 %v2718, 4294901760
          %3534 = vmatpush1.msra.mxu0 %v3533
          %3535 = vmatprep.subr.mxu0 0.0
          %v3536 = vand.u32 %v2717, 4294901760
          %3537 = vmatpush1.msra.mxu0 %v3536
          %3538 = vmatprep.subr.mxu0 0.0
          %v3539 = vand.u32 %v2716, 4294901760
          %3540 = vmatpush1.msra.mxu0 %v3539
          %3541 = vmatprep.subr.mxu0 0.0
          %v3542 = vand.u32 %v2715, 4294901760
          %3543 = vmatpush1.msra.mxu0 %v3542
          %3544 = vmatprep.subr.mxu0 0.0
          %v3545 = vand.u32 %v2714, 4294901760
          %3546 = vmatpush1.msra.mxu0 %v3545
          %3547 = vmatprep.subr.mxu0 0.0
          %v3548 = vand.u32 %v2713, 4294901760
          %3549 = vmatpush1.msra.mxu0 %v3548
          %3550 = vmatprep.subr.mxu0 0.0
          %v3551 = vand.u32 %v2712, 4294901760
          %3552 = vmatpush1.msra.mxu0 %v3551
          %3553 = vmatprep.subr.mxu0 0.0
          %v3554 = vand.u32 %v2711, 4294901760
          %3555 = vmatpush1.msra.mxu0 %v3554
          %3556 = vmatprep.subr.mxu0 0.0
          %v3557 = vand.u32 %v2742, 4294901760
          %3558 = vmatpush2.msra.mxu0 %v3557
          %3559 = vmatprep.subr.mxu0 0.0
          %v3560 = vand.u32 %v2741, 4294901760
          %3561 = vmatpush2.msra.mxu0 %v3560
          %3562 = vmatprep.subr.mxu0 0.0
          %v3563 = vand.u32 %v2740, 4294901760
          %3564 = vmatpush2.msra.mxu0 %v3563
          %3565 = vmatprep.subr.mxu0 0.0
          %v3566 = vand.u32 %v2739, 4294901760
          %3567 = vmatpush2.msra.mxu0 %v3566
          %3568 = vmatprep.subr.mxu0 0.0
          %v3569 = vand.u32 %v2738, 4294901760
          %3570 = vmatpush2.msra.mxu0 %v3569
          %3571 = vmatprep.subr.mxu0 0.0
          %v3572 = vand.u32 %v2737, 4294901760
          %3573 = vmatpush2.msra.mxu0 %v3572
          %3574 = vmatprep.subr.mxu0 0.0
          %v3575 = vand.u32 %v2736, 4294901760
          %3576 = vmatpush2.msra.mxu0 %v3575
          %3577 = vmatprep.subr.mxu0 0.0
          %v3578 = vand.u32 %v2735, 4294901760
          %3579 = vmatpush2.msra.mxu0 %v3578
          %3580 = vmatprep.subr.mxu0 0.0
          %v3581 = vand.u32 %v2734, 4294901760
          %3582 = vmatpush2.msra.mxu0 %v3581
          %3583 = vmatprep.subr.mxu0 0.0
          %v3584 = vand.u32 %v2733, 4294901760
          %3585 = vmatpush2.msra.mxu0 %v3584
          %3586 = vmatprep.subr.mxu0 0.0
          %v3587 = vand.u32 %v2732, 4294901760
          %3588 = vmatpush2.msra.mxu0 %v3587
          %3589 = vmatprep.subr.mxu0 0.0
          %v3590 = vand.u32 %v2731, 4294901760
          %3591 = vmatpush2.msra.mxu0 %v3590
          %3592 = vmatprep.subr.mxu0 0.0
          %v3593 = vand.u32 %v2730, 4294901760
          %3594 = vmatpush2.msra.mxu0 %v3593
          %3595 = vmatprep.subr.mxu0 0.0
          %v3596 = vand.u32 %v2729, 4294901760
          %3597 = vmatpush2.msra.mxu0 %v3596
          %3598 = vmatprep.subr.mxu0 0.0
          %v3599 = vand.u32 %v2728, 4294901760
          %3600 = vmatpush2.msra.mxu0 %v3599
          %3601 = vmatprep.subr.mxu0 0.0
          %v3602 = vand.u32 %v2727, 4294901760
          %3603 = vmatpush2.msra.mxu0 %v3602
          %v3604 = vand.u32 %v2710, 4294901760
          %3605 = vmatprep.mubr.f32.mxu0 %v3604
          %v3606 = vand.u32 %v2709, 4294901760
          %3607 = vmatmul.mubr.f32.gmra.mxu0 %v3606
          %v3608 = vpop.f32.mrf.mxu0
          %v3609 = vadd.f32 %v3505, %v3608
          %v3610 = vpop.f32.mrf.mxu0
          %3611 = vdwg.mxu0
          %v3612 = vlaneseq
          %v3613 = vshrl.u32 %v3612, 7
          %v3614 = vsub.s32 0, %v3613
          %v3615 = vrot.slane %v3609, %v3614
          %v3616 = vsub.f32 %v3609, %v3615
          %v3617 = vrot.slane %v3616, 4
          %v3618 = vadd.f32 %v3616, %v3617
          %v3619 = vrot.slane %v3618, 2
          %v3620 = vadd.f32 %v3618, %v3619
          %v3621 = vrot.slane %v3620, 1
          %v3622 = vadd.f32 %v3620, %v3621
          %v3623 = vmul.f32 %v3616, %v3616
          %v3624 = vrot.slane %v3623, 4
          %v3625 = vadd.f32 %v3623, %v3624
          %v3626 = vrot.slane %v3625, 2
          %v3627 = vadd.f32 %v3625, %v3626
          %v3628 = vrot.slane %v3627, 1
          %v3629 = vadd.f32 %v3627, %v3628
          %v3630 = vmul.f32 %v3622, 0.125
          %v3631 = vmul.f32 %v3629, 0.125
          %v3632 = vmul.f32 %v3630, %v3630
          %v3633 = vsub.f32 %v3631, %v3632
          %v3634 = vsub.f32 %v3616, %v3630
          %v3635 = vadd.f32 %v3633, 1e-05
          %v3636 = vrsqrt.pop %v3635
          %v3637 = vmul.f32 %v3634, %v3636
          %v3638 = vld [vmem:[%s698] sm:$0x1]
          %v3640 = vlaneseq
          %v3641 = vshrl.u32 %v3640, 7
          %v3642 = vsub.s32 0, %v3641
          %v3643 = vrot.slane %v3638, %v3642
          %v3645 = vmul.f32 %v3637, %v3643
          %v3646 = vld [vmem:[%s701] sm:$0x1]
          %v3648 = vlaneseq
          %v3649 = vshrl.u32 %v3648, 7
          %v3650 = vsub.s32 0, %v3649
          %v3651 = vrot.slane %v3646, %v3650
          %v3653 = vadd.f32 %v3645, %v3651
          %p3654 = scmp.lt.s32.totalorder %s38, 2
          // Predicated region
          $region101: #{tpu_custom_call.1} parent=99 // pred_check
            %p3655 = pneg %p3654
          $region102: #{tpu_custom_call.1} parent=99 // pred_check_branch
            %3657 = sbr.rel (%p3655) target = $region104
          $region103: #{tpu_custom_call.1} parent=99 // pred_region
            %v3658 = vmax.f32 %v3653, 0.0
            %3659 = vst [vmem:[#allocation2] sm:$0xff] %v3658
            %3660 = vst [vmem:[%s667] sm:$0xff] %v3658
          $region104: #{tpu_custom_call.1} parent=99 // pred_fallthru
            _
          %p3661 = scmp.eq.s32.totalorder %s38, 2
          // Predicated region
          $region105: #{tpu_custom_call.1} parent=99 // pred_check
            %p3662 = pneg %p3661
          $region106: #{tpu_custom_call.1} parent=99 // pred_check_branch
            %3664 = sbr.rel (%p3662) target = $region108
          $region107: #{tpu_custom_call.1} parent=99 // pred_region
            %3665 = vst [vmem:[#allocation2] sm:$0xff] %v3653
            %3666 = vst [vmem:[%s667] sm:$0xff] %v3653
          $region108: #{tpu_custom_call.1} parent=99 // pred_fallthru
            _
        $region100: #{tpu_custom_call.1} parent=71 // pred_fallthru
          _
        %s3667 = sand.u32 %s384, 1
        %s3668 = scalar_lea.sflag [#allocation6], %s3667
        %s3669 = sand.u32 %s384, 1
        %s3670 = smul.addr %s3669, 8
        %s3671 = scalar_lea.vmem [#allocation12], %s3670
        // Predicated region
        $region109: #{tpu_custom_call.1} parent=71 // pred_check
          %p3672 = pneg %p394
        $region110: #{tpu_custom_call.1} parent=71 // pred_check_branch
          %3674 = sbr.rel (%p3672) target = $region112
        $region111: #{tpu_custom_call.1} parent=71 // pred_region
          %s3676 = ssub.s32 128, 128
          %3677 = vsyncadd %s3668, %s3676
          %s3678 = smul.addr %s38, 128
          %s3679 = scalar_lea.hbm %s13, %s3678
          %s3681 = sshll.u32 %s3671, 4
          %s3682 = int_to_ptr.vmem [resolvable:$true] %s3681
          %3684 = dma.vmem_to_hbm [thread:$0]  %s3682, 128, %s3679, %s3668
        $region112: #{tpu_custom_call.1} parent=71 // pred_fallthru
          _
      $region72: #{tpu_custom_call.1} parent=5 // pred_fallthru
        _
      %p3685 = scmp.le.s32.totalorder 2, %s29
      // Predicated region
      $region113: #{tpu_custom_call.1} parent=5 // pred_check
        %p3686 = pneg %p3685
      $region114: #{tpu_custom_call.1} parent=5 // pred_check_branch
        %3688 = sbr.rel (%p3686) target = $region116
      $region115: #{tpu_custom_call.1} parent=5 // pred_region
        %s3689 = ssub.s32 %s29, 2
        // Predicated region
        $region117: #{tpu_custom_call.1} parent=115 // pred_check
          %p3690 = pneg %p400
        $region118: #{tpu_custom_call.1} parent=115 // pred_check_branch
          %3692 = sbr.rel (%p3690) target = $region120
        $region119: #{tpu_custom_call.1} parent=115 // pred_region
          %s3693 = sand.u32 %s385, 1
          %s3694 = scalar_lea.sflag [#allocation6], %s3693
          %s3695 = sand.u32 %s385, 1
          %s3696 = smul.addr %s3695, 8
          %s3697 = scalar_lea.vmem [#allocation12], %s3696
          %3698 = dma.done %s3694, 128
        $region120: #{tpu_custom_call.1} parent=115 // pred_fallthru
          _
      $region116: #{tpu_custom_call.1} parent=5 // pred_fallthru
        _
    $region6: #{tpu_custom_call.1} parent=1 // loop_footer
      %s33 = sadd.s32 1, %s29
    $region7: #{tpu_custom_call.1} parent=1 // loop_footer_branch
      %28 = sbr.rel target = $region3
    $region8: #{tpu_custom_call.1} parent=1 // loop_exit
      _
    %3699 = vsyncpa [#allocation5], 1
    %s3700 = scalar_lea.sflag [#allocation5], 1
    %3701 = vsyncpa %s3700, 1
    %3702 = vsyncpa [#allocation10], 1
    %s3703 = scalar_lea.sflag [#allocation10], 1
    %3704 = vsyncpa %s3703, 1
    %3705 = vsyncpa [#allocation6], 1
    %s3706 = scalar_lea.sflag [#allocation6], 1
    %3707 = vsyncpa %s3706, 1
    %3708 = vsyncpa [#allocation7], 1
    %s3709 = scalar_lea.sflag [#allocation7], 1
    %3710 = vsyncpa %s3709, 1

</llo_original>
